<compile_context>
chip_gen: v5e
topology: v5e:2x2
jax: 0.10.0
libtpu: 0.0.40
codegen_flags: <defaults>
</compile_context>

<pallas_src>
import math

import jax
import jax.numpy as jnp
from jax.experimental import pallas as pl
from jax.experimental.pallas import tpu as pltpu


def _leaky_relu(x, negative_slope=0.01):
    # Matches torch.nn.functional.leaky_relu default (negative_slope=0.01).
    return jnp.where(x >= 0, x, negative_slope * x)


def _round_up(n, m):
    return ((n + m - 1) // m) * m


def _net_kernel(x_ref,
                w1_ref, b1_ref,
                w2_ref, b2_ref,
                w3_ref, b3_ref,
                w4_ref, b4_ref,
                w5_ref, b5_ref,
                out_ref):
    # x_ref: [TB, F] fp32 batch tile (cast to bf16 here -> no wrapper-side copy).
    # Weights bf16 (resident), biases fp32.
    h = x_ref[...].astype(jnp.bfloat16)

    def dense(h_in, w_ref, b_ref):
        # bf16 x bf16 -> fp32 accumulation on the MXU; bias + activation in fp32,
        # immediately cast back to bf16 for the next MXU pass.
        acc = jnp.dot(h_in, w_ref[...], preferred_element_type=jnp.float32)
        return _leaky_relu(acc + b_ref[...]).astype(jnp.bfloat16)

    h = dense(h, w1_ref, b1_ref)   # [TB, 64]
    h = dense(h, w2_ref, b2_ref)   # [TB, 256]
    h = dense(h, w3_ref, b3_ref)   # [TB, 512]
    h = dense(h, w4_ref, b4_ref)   # [TB, 64]

    # fc5 has a single output feature: compute the [1, TB] row directly as
    # w5_row [1, 64] (contract dim 1) x h [TB, 64] (contract dim 1) -> [1, TB].
    # The contracting-dim spec lets Mosaic fold the "transpose" into the matmul
    # operand (no explicit XLU transpose of h), and the store stays lane-dense.
    out_row = jax.lax.dot_general(
        w5_ref[...], h,
        dimension_numbers=(((1,), (1,)), ((), ())),
        preferred_element_type=jnp.float32)
    out_ref[...] = (out_row + b5_ref[...]).astype(out_ref.dtype)


def net_forward(x, params, *, block_batch=2048):
    """x: [B, num_features] float32. params: list of (W [in, out], b [1, out]) fp32."""
    B, F = x.shape

    # Batch tile: multiple of 128 (lane-dense output row), capped at block_batch
    # (default 2048; sweep 1024-2048 per generation if tuning).
    TB = min(block_batch, _round_up(max(B, 1), 128))
    num_tiles = pl.cdiv(B, TB)
    B_pad = num_tiles * TB

    (w1, b1), (w2, b2), (w3, b3), (w4, b4), (w5, b5) = params
    weights = [w1, w2, w3, w4, w5.reshape(1, -1)]        # w5 as a [1, 64] row
    biases = [b1, b2, b3, b4, b5]
    weights = [w.astype(jnp.bfloat16) for w in weights]   # bf16 operands for the MXU
    biases = [b.astype(jnp.float32) for b in biases]

    flat = []
    for w, b in zip(weights, biases):
        flat += [w, b]

    const_map = lambda i: (0, 0)  # weights/biases: fetched once, resident across tiles
    in_specs = [pl.BlockSpec((TB, F), lambda i: (i, 0))]   # fp32 x tile, no pre-copy
    in_specs += [pl.BlockSpec(a.shape, const_map) for a in flat]

    out = pl.pallas_call(
        _net_kernel,
        out_shape=jax.ShapeDtypeStruct((1, B_pad), jnp.float32),
        grid=(num_tiles,),
        in_specs=in_specs,
        out_specs=pl.BlockSpec((1, TB), lambda i: (0, i)),   # lane-dense row blocks
        compiler_params=pltpu.CompilerParams(
            dimension_semantics=("parallel",),   # megacore sharding on v7x
            vmem_limit_bytes=32 << 20,           # TB=2048 peaks well under 32 MiB
        ),
    )(x, *flat)

    # Tail columns beyond B come from partial-block (undefined) input rows; each
    # output column depends only on its own row, so slicing them off is exact.
    return out.reshape(-1)[:B].reshape(B, 1)


def _xavier_uniform(key, fan_in, fan_out):
    # torch.nn.init.xavier_uniform_: U(-a, a), a = sqrt(6 / (fan_in + fan_out)).
    a = math.sqrt(6.0 / (fan_in + fan_out))
    # Stored as [fan_in, fan_out] (transposed vs. PyTorch's [out, in]).
    return jax.random.uniform(key, (fan_in, fan_out), jnp.float32, -a, a)


def init_params(key, num_features=227):
    dims = [num_features, 64, 256, 512, 64, 1]
    params = []
    keys = jax.random.split(key, len(dims) - 1)
    for k, fin, fout in zip(keys, dims[:-1], dims[1:]):
        w = _xavier_uniform(k, fin, fout)
        b = jnp.full((1, fout), 0.01, jnp.float32)  # bias.data.fill_(0.01)
        params.append((w, b))
    return params


def reference_forward_fp32(x, params):
    """Full-precision reference (PyTorch semantics)."""
    h = x
    for i, (w, b) in enumerate(params):
        h = jnp.dot(h, w, precision=jax.lax.Precision.HIGHEST) + b
        if i < len(params) - 1:
            h = _leaky_relu(h)
    return h


def reference_forward_bf16(x, params):
    """Pure-JAX reference with the same bf16-compute / fp32-accumulate recipe."""
    ws = [w.astype(jnp.bfloat16) for w, _ in params]
    bs = [b.astype(jnp.float32) for _, b in params]
    h = x.astype(jnp.bfloat16)
    for i in range(4):
        a = jnp.dot(h, ws[i], preferred_element_type=jnp.float32) + bs[i]
        h = _leaky_relu(a).astype(jnp.bfloat16)
    return jnp.dot(h, ws[4], preferred_element_type=jnp.float32) + bs[4]


if __name__ == "__main__":
    key = jax.random.PRNGKey(0)
    k_param, k_x = jax.random.split(key)

    num_features = 227
    batch = 300  # not a multiple of 128: exercises the partial last batch tile

    params = init_params(k_param, num_features)
    x = jax.random.normal(k_x, (batch, num_features), jnp.float32)

    out = jax.block_until_ready(net_forward(x, params))

    ref_bf16 = reference_forward_bf16(x, params)
    ref_fp32 = reference_forward_fp32(x, params)

    assert out.shape == (batch, 1), out.shape
    err_matched = float(jnp.max(jnp.abs(out - ref_bf16)))
    err_fp32 = float(jnp.max(jnp.abs(out - ref_fp32)))
    assert err_matched < 5e-3, f"max abs diff vs bf16 reference {err_matched}"
    assert err_fp32 < 1e-1, f"max abs diff vs fp32 reference {err_fp32}"

    print("KERNEL_OK")
</pallas_src>

<mosaic_0001>
module attributes {stable_mosaic.version = 11 : i64} {
  func.func @_net_kernel(%arg0: i32, %arg1: memref<384x227xf32, #tpu.memory_space<vmem>>, %arg2: memref<227x64xbf16, #tpu.memory_space<vmem>>, %arg3: memref<1x64xf32, #tpu.memory_space<vmem>>, %arg4: memref<64x256xbf16, #tpu.memory_space<vmem>>, %arg5: memref<1x256xf32, #tpu.memory_space<vmem>>, %arg6: memref<256x512xbf16, #tpu.memory_space<vmem>>, %arg7: memref<1x512xf32, #tpu.memory_space<vmem>>, %arg8: memref<512x64xbf16, #tpu.memory_space<vmem>>, %arg9: memref<1x64xf32, #tpu.memory_space<vmem>>, %arg10: memref<1x64xbf16, #tpu.memory_space<vmem>>, %arg11: memref<1x1xf32, #tpu.memory_space<vmem>>, %arg12: memref<1x384xf32, #tpu.memory_space<vmem>>) attributes {dimension_semantics = [#tpu.dimension_semantics<parallel>], iteration_bounds = array<i64: 1>, scalar_prefetch = 0 : i64, scratch_operands = 0 : i64, tpu.core_type = #tpu.core_type<tc>, window_params = [{transform_indices = @transform_0, window_bounds = array<i64: 384, 227>}, {pipeline_mode = #tpu.pipeline_mode<synchronous>, transform_indices = @transform_1, window_bounds = array<i64: 227, 64>}, {pipeline_mode = #tpu.pipeline_mode<synchronous>, transform_indices = @transform_2, window_bounds = array<i64: 1, 64>}, {pipeline_mode = #tpu.pipeline_mode<synchronous>, transform_indices = @transform_3, window_bounds = array<i64: 64, 256>}, {pipeline_mode = #tpu.pipeline_mode<synchronous>, transform_indices = @transform_4, window_bounds = array<i64: 1, 256>}, {pipeline_mode = #tpu.pipeline_mode<synchronous>, transform_indices = @transform_5, window_bounds = array<i64: 256, 512>}, {pipeline_mode = #tpu.pipeline_mode<synchronous>, transform_indices = @transform_6, window_bounds = array<i64: 1, 512>}, {pipeline_mode = #tpu.pipeline_mode<synchronous>, transform_indices = @transform_7, window_bounds = array<i64: 512, 64>}, {pipeline_mode = #tpu.pipeline_mode<synchronous>, transform_indices = @transform_8, window_bounds = array<i64: 1, 64>}, {pipeline_mode = #tpu.pipeline_mode<synchronous>, transform_indices = @transform_9, window_bounds = array<i64: 1, 64>}, {pipeline_mode = #tpu.pipeline_mode<synchronous>, transform_indices = @transform_10, window_bounds = array<i64: 1, 1>}, {transform_indices = @transform_11, window_bounds = array<i64: 1, 384>}]} {
    %c0 = arith.constant 0 : index
    %c0_0 = arith.constant 0 : index
    %0 = vector.load %arg1[%c0, %c0_0] : memref<384x227xf32, #tpu.memory_space<vmem>>, vector<384x227xf32>
    %1 = arith.truncf %0 : vector<384x227xf32> to vector<384x227xbf16>
    %c0_1 = arith.constant 0 : index
    %c0_2 = arith.constant 0 : index
    %2 = vector.load %arg2[%c0_1, %c0_2] : memref<227x64xbf16, #tpu.memory_space<vmem>>, vector<227x64xbf16>
    %cst = arith.constant dense<0.000000e+00> : vector<384x64xf32>
    %3 = tpu.matmul %1, %2, %cst {dimension_numbers = #tpu.dot_dimension_numbers<[1], [0], [0], [1], [0, 0, 1, 1], [], []>} : vector<384x227xbf16>, vector<227x64xbf16>, vector<384x64xf32> -> vector<384x64xf32>
    %c0_3 = arith.constant 0 : index
    %c0_4 = arith.constant 0 : index
    %4 = vector.load %arg3[%c0_3, %c0_4] : memref<1x64xf32, #tpu.memory_space<vmem>>, vector<1x64xf32>
    %5 = vector.broadcast %4 : vector<1x64xf32> to vector<384x64xf32>
    %6 = arith.addf %3, %5 : vector<384x64xf32>
    %cst_5 = arith.constant 0.000000e+00 : f32
    %7 = vector.broadcast %cst_5 : f32 to vector<384x64xf32>
    %8 = arith.cmpf oge, %6, %7 : vector<384x64xf32>
    %cst_6 = arith.constant 0.00999999977 : f32
    %9 = vector.broadcast %cst_6 : f32 to vector<384x64xf32>
    %10 = arith.mulf %9, %6 : vector<384x64xf32>
    %11 = arith.select %8, %6, %10 : vector<384x64xi1>, vector<384x64xf32>
    %12 = arith.truncf %11 : vector<384x64xf32> to vector<384x64xbf16>
    %c0_7 = arith.constant 0 : index
    %c0_8 = arith.constant 0 : index
    %13 = vector.load %arg4[%c0_7, %c0_8] : memref<64x256xbf16, #tpu.memory_space<vmem>>, vector<64x256xbf16>
    %cst_9 = arith.constant dense<0.000000e+00> : vector<384x256xf32>
    %14 = tpu.matmul %12, %13, %cst_9 {dimension_numbers = #tpu.dot_dimension_numbers<[1], [0], [0], [1], [0, 0, 1, 1], [], []>} : vector<384x64xbf16>, vector<64x256xbf16>, vector<384x256xf32> -> vector<384x256xf32>
    %c0_10 = arith.constant 0 : index
    %c0_11 = arith.constant 0 : index
    %15 = vector.load %arg5[%c0_10, %c0_11] : memref<1x256xf32, #tpu.memory_space<vmem>>, vector<1x256xf32>
    %16 = vector.broadcast %15 : vector<1x256xf32> to vector<384x256xf32>
    %17 = arith.addf %14, %16 : vector<384x256xf32>
    %cst_12 = arith.constant 0.000000e+00 : f32
    %18 = vector.broadcast %cst_12 : f32 to vector<384x256xf32>
    %19 = arith.cmpf oge, %17, %18 : vector<384x256xf32>
    %cst_13 = arith.constant 0.00999999977 : f32
    %20 = vector.broadcast %cst_13 : f32 to vector<384x256xf32>
    %21 = arith.mulf %20, %17 : vector<384x256xf32>
    %22 = arith.select %19, %17, %21 : vector<384x256xi1>, vector<384x256xf32>
    %23 = arith.truncf %22 : vector<384x256xf32> to vector<384x256xbf16>
    %c0_14 = arith.constant 0 : index
    %c0_15 = arith.constant 0 : index
    %24 = vector.load %arg6[%c0_14, %c0_15] : memref<256x512xbf16, #tpu.memory_space<vmem>>, vector<256x512xbf16>
    %cst_16 = arith.constant dense<0.000000e+00> : vector<384x512xf32>
    %25 = tpu.matmul %23, %24, %cst_16 {dimension_numbers = #tpu.dot_dimension_numbers<[1], [0], [0], [1], [0, 0, 1, 1], [], []>} : vector<384x256xbf16>, vector<256x512xbf16>, vector<384x512xf32> -> vector<384x512xf32>
    %c0_17 = arith.constant 0 : index
    %c0_18 = arith.constant 0 : index
    %26 = vector.load %arg7[%c0_17, %c0_18] : memref<1x512xf32, #tpu.memory_space<vmem>>, vector<1x512xf32>
    %27 = vector.broadcast %26 : vector<1x512xf32> to vector<384x512xf32>
    %28 = arith.addf %25, %27 : vector<384x512xf32>
    %cst_19 = arith.constant 0.000000e+00 : f32
    %29 = vector.broadcast %cst_19 : f32 to vector<384x512xf32>
    %30 = arith.cmpf oge, %28, %29 : vector<384x512xf32>
    %cst_20 = arith.constant 0.00999999977 : f32
    %31 = vector.broadcast %cst_20 : f32 to vector<384x512xf32>
    %32 = arith.mulf %31, %28 : vector<384x512xf32>
    %33 = arith.select %30, %28, %32 : vector<384x512xi1>, vector<384x512xf32>
    %34 = arith.truncf %33 : vector<384x512xf32> to vector<384x512xbf16>
    %c0_21 = arith.constant 0 : index
    %c0_22 = arith.constant 0 : index
    %35 = vector.load %arg8[%c0_21, %c0_22] : memref<512x64xbf16, #tpu.memory_space<vmem>>, vector<512x64xbf16>
    %cst_23 = arith.constant dense<0.000000e+00> : vector<384x64xf32>
    %36 = tpu.matmul %34, %35, %cst_23 {dimension_numbers = #tpu.dot_dimension_numbers<[1], [0], [0], [1], [0, 0, 1, 1], [], []>} : vector<384x512xbf16>, vector<512x64xbf16>, vector<384x64xf32> -> vector<384x64xf32>
    %c0_24 = arith.constant 0 : index
    %c0_25 = arith.constant 0 : index
    %37 = vector.load %arg9[%c0_24, %c0_25] : memref<1x64xf32, #tpu.memory_space<vmem>>, vector<1x64xf32>
    %38 = vector.broadcast %37 : vector<1x64xf32> to vector<384x64xf32>
    %39 = arith.addf %36, %38 : vector<384x64xf32>
    %cst_26 = arith.constant 0.000000e+00 : f32
    %40 = vector.broadcast %cst_26 : f32 to vector<384x64xf32>
    %41 = arith.cmpf oge, %39, %40 : vector<384x64xf32>
    %cst_27 = arith.constant 0.00999999977 : f32
    %42 = vector.broadcast %cst_27 : f32 to vector<384x64xf32>
    %43 = arith.mulf %42, %39 : vector<384x64xf32>
    %44 = arith.select %41, %39, %43 : vector<384x64xi1>, vector<384x64xf32>
    %45 = arith.truncf %44 : vector<384x64xf32> to vector<384x64xbf16>
    %c0_28 = arith.constant 0 : index
    %c0_29 = arith.constant 0 : index
    %46 = vector.load %arg10[%c0_28, %c0_29] : memref<1x64xbf16, #tpu.memory_space<vmem>>, vector<1x64xbf16>
    %cst_30 = arith.constant dense<0.000000e+00> : vector<1x384xf32>
    %47 = tpu.matmul %46, %45, %cst_30 {dimension_numbers = #tpu.dot_dimension_numbers<[1], [1], [0], [0], [0, 0, 1, 0], [], []>} : vector<1x64xbf16>, vector<384x64xbf16>, vector<1x384xf32> -> vector<1x384xf32>
    %c0_31 = arith.constant 0 : index
    %c0_32 = arith.constant 0 : index
    %48 = vector.load %arg11[%c0_31, %c0_32] : memref<1x1xf32, #tpu.memory_space<vmem>>, vector<1x1xf32>
    %49 = vector.broadcast %48 : vector<1x1xf32> to vector<1x384xf32>
    %50 = arith.addf %47, %49 : vector<1x384xf32>
    %c0_33 = arith.constant 0 : index
    %c0_34 = arith.constant 0 : index
    %51 = vector.load %arg12[%c0_33, %c0_34] : memref<1x384xf32, #tpu.memory_space<vmem>>, vector<1x384xf32>
    tpu.vector_store %arg12[%c0_33, %c0_34], %50 {strides = array<i32>} : memref<1x384xf32, #tpu.memory_space<vmem>>, vector<1x384xf32>,
    return
  }
  func.func @transform_0(%arg0: i32) -> (i32, i32) {
    %c0_i32 = arith.constant 0 : i32
    %c0_i32_0 = arith.constant 0 : i32
    return %arg0, %c0_i32 : i32, i32
  }
  func.func @transform_1(%arg0: i32) -> (i32, i32) {
    %c0_i32 = arith.constant 0 : i32
    %c0_i32_0 = arith.constant 0 : i32
    %c0_i32_1 = arith.constant 0 : i32
    return %c0_i32, %c0_i32_0 : i32, i32
  }
  func.func @transform_2(%arg0: i32) -> (i32, i32) {
    %c0_i32 = arith.constant 0 : i32
    %c0_i32_0 = arith.constant 0 : i32
    %c0_i32_1 = arith.constant 0 : i32
    return %c0_i32, %c0_i32_0 : i32, i32
  }
  func.func @transform_3(%arg0: i32) -> (i32, i32) {
    %c0_i32 = arith.constant 0 : i32
    %c0_i32_0 = arith.constant 0 : i32
    %c0_i32_1 = arith.constant 0 : i32
    return %c0_i32, %c0_i32_0 : i32, i32
  }
  func.func @transform_4(%arg0: i32) -> (i32, i32) {
    %c0_i32 = arith.constant 0 : i32
    %c0_i32_0 = arith.constant 0 : i32
    %c0_i32_1 = arith.constant 0 : i32
    return %c0_i32, %c0_i32_0 : i32, i32
  }
  func.func @transform_5(%arg0: i32) -> (i32, i32) {
    %c0_i32 = arith.constant 0 : i32
    %c0_i32_0 = arith.constant 0 : i32
    %c0_i32_1 = arith.constant 0 : i32
    return %c0_i32, %c0_i32_0 : i32, i32
  }
  func.func @transform_6(%arg0: i32) -> (i32, i32) {
    %c0_i32 = arith.constant 0 : i32
    %c0_i32_0 = arith.constant 0 : i32
    %c0_i32_1 = arith.constant 0 : i32
    return %c0_i32, %c0_i32_0 : i32, i32
  }
  func.func @transform_7(%arg0: i32) -> (i32, i32) {
    %c0_i32 = arith.constant 0 : i32
    %c0_i32_0 = arith.constant 0 : i32
    %c0_i32_1 = arith.constant 0 : i32
    return %c0_i32, %c0_i32_0 : i32, i32
  }
  func.func @transform_8(%arg0: i32) -> (i32, i32) {
    %c0_i32 = arith.constant 0 : i32
    %c0_i32_0 = arith.constant 0 : i32
    %c0_i32_1 = arith.constant 0 : i32
    return %c0_i32, %c0_i32_0 : i32, i32
  }
  func.func @transform_9(%arg0: i32) -> (i32, i32) {
    %c0_i32 = arith.constant 0 : i32
    %c0_i32_0 = arith.constant 0 : i32
    %c0_i32_1 = arith.constant 0 : i32
    return %c0_i32, %c0_i32_0 : i32, i32
  }
  func.func @transform_10(%arg0: i32) -> (i32, i32) {
    %c0_i32 = arith.constant 0 : i32
    %c0_i32_0 = arith.constant 0 : i32
    %c0_i32_1 = arith.constant 0 : i32
    return %c0_i32, %c0_i32_0 : i32, i32
  }
  func.func @transform_11(%arg0: i32) -> (i32, i32) {
    %c0_i32 = arith.constant 0 : i32
    %c0_i32_0 = arith.constant 0 : i32
    return %c0_i32, %arg0 : i32, i32
  }
}

</mosaic_0001>

<llo_original>
// kernel: tpu_custom_call.1
$region0: #{tpu_custom_call.1}
  #allocation0 [shape = 'u32[]', space=smem, size = 0x4, offset = 0x4, fixed_abs, tag = 'smem constant byte address 0x4 - core index']
  #allocation1 [shape = 'u32[72,128]{1,0:T(1,128)}', space=vmem, size = 0x9000, scoped, tag = 'internal scratch']
  #allocation2 [shape = 'f32[1,1]{1,0:T(1,128)S(1)}', space=vmem, size = 0x200, scoped, tag = 'scoped memory for tpu_custom_call.1']
  %s0 = inlined_call_operand.hbm [shape: f32[300,227], index: 0, kind: input, shape index: {}]
  %s1 = inlined_call_operand.vmem [shape: bf16[227,64], index: 1, kind: input, shape index: {}]
  %s2 = inlined_call_operand.vmem [shape: f32[1,64], index: 2, kind: input, shape index: {}]
  %s3 = inlined_call_operand.vmem [shape: bf16[64,256], index: 3, kind: input, shape index: {}]
  %s4 = inlined_call_operand.vmem [shape: f32[1,256], index: 4, kind: input, shape index: {}]
  %s5 = inlined_call_operand.hbm [shape: bf16[256,512], index: 5, kind: input, shape index: {}]
  %s6 = inlined_call_operand.vmem [shape: f32[1,512], index: 6, kind: input, shape index: {}]
  %s7 = inlined_call_operand.vmem [shape: bf16[512,64], index: 7, kind: input, shape index: {}]
  %s8 = inlined_call_operand.vmem [shape: f32[1,64], index: 8, kind: input, shape index: {}]
  %s9 = inlined_call_operand.vmem [shape: bf16[1,64], index: 9, kind: input, shape index: {}]
  %s10 = inlined_call_operand.<no memory space> [shape: f32[1,1], index: 10, kind: input, shape index: {}]
  %s11 = inlined_call_operand.hbm [shape: f32[1,384], index: 11, kind: output, shape index: {}]
  %s12 = sld [smem:[#allocation0]]
  $region62: #{tpu_custom_call.1} parent=0
    _
  %s14 = ssub.s32 1, %s12
  %s15 = scalar_select 0, %s14, %s12
  %v16 = vstv %s10
  %17 = vst [vmem:[#allocation2] sm:$0x1] %v16
  $region1: #{tpu_custom_call.1} parent=0
    #allocation3 [shape = 'u8[393216]{0}', space=vmem, size = 0x60000, scoped, tag = 'input window, operand 0, single buffered']
    #allocation4 [shape = 's32[1]{0}', space=sflag, size = 0x4, scoped, tag = 'scoped memory for tpu_custom_call.1']
    #allocation5 [shape = 's32[1]{0}', space=sflag, size = 0x4, scoped, tag = 'scoped memory for tpu_custom_call.1']
    #allocation6 [shape = 'u8[262144]{0}', space=vmem, size = 0x40000, scoped, tag = 'input window, operand 5, single buffered']
    #allocation7 [shape = 's32[1]{0}', space=sflag, size = 0x4, scoped, tag = 'scoped memory for tpu_custom_call.1']
    #allocation8 [shape = 'u8[1536]{0}', space=vmem, size = 0x800, scoped, tag = 'output window, operand 0, single buffered']
    %18 = vsyncpa [#allocation4], 0
    %19 = vsyncpa [#allocation7], 0
    %20 = vsyncpa [#allocation5], 0
    // Predicated region
    $region2: #{tpu_custom_call.1} parent=1 // pred_check
      _
    $region3: #{tpu_custom_call.1} parent=1 // pred_check_branch
      %22 = sbr.rel (0) target = $region5
    $region4: #{tpu_custom_call.1} parent=1 // pred_region
      %24 = vsyncadd [#allocation4], 2560
      %s25 = sshll.u32 %s0, 4
      %s26 = int_to_ptr.hbm [resolvable:$true] %s25
      %s27 = sshll.u32 [#allocation3], 4
      %s28 = int_to_ptr.vmem [resolvable:$true] %s27
      %33 = dma.hbm_to_vmem [thread:$0]  %s26, 9728, %s28, [#allocation4], 256, 256, 16
    $region5: #{tpu_custom_call.1} parent=1 // pred_fallthru
      _
    // Predicated region
    $region6: #{tpu_custom_call.1} parent=1 // pred_check
      _
    $region7: #{tpu_custom_call.1} parent=1 // pred_check_branch
      %35 = sbr.rel (0) target = $region9
    $region8: #{tpu_custom_call.1} parent=1 // pred_region
      _
    $region9: #{tpu_custom_call.1} parent=1 // pred_fallthru
      _
    // Predicated region
    $region10: #{tpu_custom_call.1} parent=1 // pred_check
      _
    $region11: #{tpu_custom_call.1} parent=1 // pred_check_branch
      %37 = sbr.rel (0) target = $region13
    $region12: #{tpu_custom_call.1} parent=1 // pred_region
      _
    $region13: #{tpu_custom_call.1} parent=1 // pred_fallthru
      _
    // Predicated region
    $region14: #{tpu_custom_call.1} parent=1 // pred_check
      _
    $region15: #{tpu_custom_call.1} parent=1 // pred_check_branch
      %39 = sbr.rel (0) target = $region17
    $region16: #{tpu_custom_call.1} parent=1 // pred_region
      _
    $region17: #{tpu_custom_call.1} parent=1 // pred_fallthru
      _
    // Predicated region
    $region18: #{tpu_custom_call.1} parent=1 // pred_check
      _
    $region19: #{tpu_custom_call.1} parent=1 // pred_check_branch
      %41 = sbr.rel (0) target = $region21
    $region20: #{tpu_custom_call.1} parent=1 // pred_region
      _
    $region21: #{tpu_custom_call.1} parent=1 // pred_fallthru
      _
    // Predicated region
    $region22: #{tpu_custom_call.1} parent=1 // pred_check
      _
    $region23: #{tpu_custom_call.1} parent=1 // pred_check_branch
      %43 = sbr.rel (0) target = $region25
    $region24: #{tpu_custom_call.1} parent=1 // pred_region
      %45 = vsyncadd [#allocation7], 0
      %s46 = sshll.u32 %s5, 4
      %s47 = int_to_ptr.hbm [resolvable:$true] %s46
      %s48 = sshll.u32 [#allocation6], 4
      %s49 = int_to_ptr.vmem [resolvable:$true] %s48
      %54 = dma.hbm_to_vmem [thread:$0]  %s47, 8192, %s49, [#allocation7], 256, 256, 16
    $region25: #{tpu_custom_call.1} parent=1 // pred_fallthru
      _
    // Predicated region
    $region26: #{tpu_custom_call.1} parent=1 // pred_check
      _
    $region27: #{tpu_custom_call.1} parent=1 // pred_check_branch
      %56 = sbr.rel (0) target = $region29
    $region28: #{tpu_custom_call.1} parent=1 // pred_region
      _
    $region29: #{tpu_custom_call.1} parent=1 // pred_fallthru
      _
    // Predicated region
    $region30: #{tpu_custom_call.1} parent=1 // pred_check
      _
    $region31: #{tpu_custom_call.1} parent=1 // pred_check_branch
      %58 = sbr.rel (0) target = $region33
    $region32: #{tpu_custom_call.1} parent=1 // pred_region
      _
    $region33: #{tpu_custom_call.1} parent=1 // pred_fallthru
      _
    // Predicated region
    $region34: #{tpu_custom_call.1} parent=1 // pred_check
      _
    $region35: #{tpu_custom_call.1} parent=1 // pred_check_branch
      %60 = sbr.rel (0) target = $region37
    $region36: #{tpu_custom_call.1} parent=1 // pred_region
      _
    $region37: #{tpu_custom_call.1} parent=1 // pred_fallthru
      _
    // Predicated region
    $region38: #{tpu_custom_call.1} parent=1 // pred_check
      _
    $region39: #{tpu_custom_call.1} parent=1 // pred_check_branch
      %62 = sbr.rel (0) target = $region41
    $region40: #{tpu_custom_call.1} parent=1 // pred_region
      _
    $region41: #{tpu_custom_call.1} parent=1 // pred_fallthru
      _
    // Predicated region
    $region42: #{tpu_custom_call.1} parent=1 // pred_check
      _
    $region43: #{tpu_custom_call.1} parent=1 // pred_check_branch
      %64 = sbr.rel (0) target = $region45
    $region44: #{tpu_custom_call.1} parent=1 // pred_region
      _
    $region45: #{tpu_custom_call.1} parent=1 // pred_fallthru
      _
    // Predicated region
    $region46: #{tpu_custom_call.1} parent=1 // pred_check
      _
    $region47: #{tpu_custom_call.1} parent=1 // pred_check_branch
      %66 = sbr.rel (0) target = $region49
    $region48: #{tpu_custom_call.1} parent=1 // pred_region
      %68 = dma.done [#allocation4], 12288
    $region49: #{tpu_custom_call.1} parent=1 // pred_fallthru
      _
    // Predicated region
    $region50: #{tpu_custom_call.1} parent=1 // pred_check
      _
    $region51: #{tpu_custom_call.1} parent=1 // pred_check_branch
      %70 = sbr.rel (0) target = $region53
    $region52: #{tpu_custom_call.1} parent=1 // pred_region
      %72 = dma.done [#allocation7], 8192
    $region53: #{tpu_custom_call.1} parent=1 // pred_fallthru
      _
    %v74 = vld [vmem:[#allocation3] sm:$0xff]
    %v75 = vld [vmem:[#allocation3 + $0x8] sm:$0xff]
    %v76 = vld [vmem:[#allocation3 + $0x10] sm:$0xff]
    %v77 = vld [vmem:[#allocation3 + $0x18] sm:$0xff]
    %v78 = vld [vmem:[#allocation3 + $0x20] sm:$0xff]
    %v79 = vld [vmem:[#allocation3 + $0x28] sm:$0xff]
    %v80 = vld [vmem:[#allocation3 + $0x30] sm:$0xff]
    %v81 = vld [vmem:[#allocation3 + $0x38] sm:$0xff]
    %v82 = vld [vmem:[#allocation3 + $0x40] sm:$0xff]
    %v83 = vld [vmem:[#allocation3 + $0x48] sm:$0xff]
    %v84 = vld [vmem:[#allocation3 + $0x50] sm:$0xff]
    %v85 = vld [vmem:[#allocation3 + $0x58] sm:$0xff]
    %v86 = vld [vmem:[#allocation3 + $0x60] sm:$0xff]
    %v87 = vld [vmem:[#allocation3 + $0x68] sm:$0xff]
    %v88 = vld [vmem:[#allocation3 + $0x70] sm:$0xff]
    %v89 = vld [vmem:[#allocation3 + $0x78] sm:$0xff]
    %v90 = vld [vmem:[#allocation3 + $0x80] sm:$0xff]
    %v91 = vld [vmem:[#allocation3 + $0x88] sm:$0xff]
    %v92 = vld [vmem:[#allocation3 + $0x90] sm:$0xff]
    %v93 = vld [vmem:[#allocation3 + $0x98] sm:$0xff]
    %v94 = vld [vmem:[#allocation3 + $0xa0] sm:$0xff]
    %v95 = vld [vmem:[#allocation3 + $0xa8] sm:$0xff]
    %v96 = vld [vmem:[#allocation3 + $0xb0] sm:$0xff]
    %v97 = vld [vmem:[#allocation3 + $0xb8] sm:$0xff]
    %v98 = vld [vmem:[#allocation3 + $0xc0] sm:$0xff]
    %v99 = vld [vmem:[#allocation3 + $0xc8] sm:$0xff]
    %v100 = vld [vmem:[#allocation3 + $0xd0] sm:$0xff]
    %v101 = vld [vmem:[#allocation3 + $0xd8] sm:$0xff]
    %v102 = vld [vmem:[#allocation3 + $0xe0] sm:$0xff]
    %v103 = vld [vmem:[#allocation3 + $0xe8] sm:$0xff]
    %v104 = vld [vmem:[#allocation3 + $0xf0] sm:$0xff]
    %v105 = vld [vmem:[#allocation3 + $0xf8] sm:$0xff]
    %v106 = vld [vmem:[#allocation3 + $0x100] sm:$0xff]
    %v107 = vld [vmem:[#allocation3 + $0x108] sm:$0xff]
    %v108 = vld [vmem:[#allocation3 + $0x110] sm:$0xff]
    %v109 = vld [vmem:[#allocation3 + $0x118] sm:$0xff]
    %v110 = vld [vmem:[#allocation3 + $0x120] sm:$0xff]
    %v111 = vld [vmem:[#allocation3 + $0x128] sm:$0xff]
    %v112 = vld [vmem:[#allocation3 + $0x130] sm:$0xff]
    %v113 = vld [vmem:[#allocation3 + $0x138] sm:$0xff]
    %v114 = vld [vmem:[#allocation3 + $0x140] sm:$0xff]
    %v115 = vld [vmem:[#allocation3 + $0x148] sm:$0xff]
    %v116 = vld [vmem:[#allocation3 + $0x150] sm:$0xff]
    %v117 = vld [vmem:[#allocation3 + $0x158] sm:$0xff]
    %v118 = vld [vmem:[#allocation3 + $0x160] sm:$0xff]
    %v119 = vld [vmem:[#allocation3 + $0x168] sm:$0xff]
    %v120 = vld [vmem:[#allocation3 + $0x170] sm:$0xff]
    %v121 = vld [vmem:[#allocation3 + $0x178] sm:$0xff]
    %v122 = vld [vmem:[#allocation3 + $0x180] sm:$0xff]
    %v123 = vld [vmem:[#allocation3 + $0x188] sm:$0xff]
    %v124 = vld [vmem:[#allocation3 + $0x190] sm:$0xff]
    %v125 = vld [vmem:[#allocation3 + $0x198] sm:$0xff]
    %v126 = vld [vmem:[#allocation3 + $0x1a0] sm:$0xff]
    %v127 = vld [vmem:[#allocation3 + $0x1a8] sm:$0xff]
    %v128 = vld [vmem:[#allocation3 + $0x1b0] sm:$0xff]
    %v129 = vld [vmem:[#allocation3 + $0x1b8] sm:$0xff]
    %v130 = vld [vmem:[#allocation3 + $0x1c0] sm:$0xff]
    %v131 = vld [vmem:[#allocation3 + $0x1c8] sm:$0xff]
    %v132 = vld [vmem:[#allocation3 + $0x1d0] sm:$0xff]
    %v133 = vld [vmem:[#allocation3 + $0x1d8] sm:$0xff]
    %v134 = vld [vmem:[#allocation3 + $0x1e0] sm:$0xff]
    %v135 = vld [vmem:[#allocation3 + $0x1e8] sm:$0xff]
    %v136 = vld [vmem:[#allocation3 + $0x1f0] sm:$0xff]
    %v137 = vld [vmem:[#allocation3 + $0x1f8] sm:$0xff]
    %v138 = vld [vmem:[#allocation3 + $0x200] sm:$0xff]
    %v139 = vld [vmem:[#allocation3 + $0x208] sm:$0xff]
    %v140 = vld [vmem:[#allocation3 + $0x210] sm:$0xff]
    %v141 = vld [vmem:[#allocation3 + $0x218] sm:$0xff]
    %v142 = vld [vmem:[#allocation3 + $0x220] sm:$0xff]
    %v143 = vld [vmem:[#allocation3 + $0x228] sm:$0xff]
    %v144 = vld [vmem:[#allocation3 + $0x230] sm:$0xff]
    %v145 = vld [vmem:[#allocation3 + $0x238] sm:$0xff]
    %v146 = vld [vmem:[#allocation3 + $0x240] sm:$0xff]
    %v147 = vld [vmem:[#allocation3 + $0x248] sm:$0xff]
    %v148 = vld [vmem:[#allocation3 + $0x250] sm:$0xff]
    %v149 = vld [vmem:[#allocation3 + $0x258] sm:$0xff]
    %v150 = vld [vmem:[#allocation3 + $0x260] sm:$0xff]
    %v151 = vld [vmem:[#allocation3 + $0x268] sm:$0xff]
    %v152 = vld [vmem:[#allocation3 + $0x270] sm:$0xff]
    %v153 = vld [vmem:[#allocation3 + $0x278] sm:$0xff]
    %v154 = vld [vmem:[#allocation3 + $0x280] sm:$0xff]
    %v155 = vld [vmem:[#allocation3 + $0x288] sm:$0xff]
    %v156 = vld [vmem:[#allocation3 + $0x290] sm:$0xff]
    %v157 = vld [vmem:[#allocation3 + $0x298] sm:$0xff]
    %v158 = vld [vmem:[#allocation3 + $0x2a0] sm:$0xff]
    %v159 = vld [vmem:[#allocation3 + $0x2a8] sm:$0xff]
    %v160 = vld [vmem:[#allocation3 + $0x2b0] sm:$0xff]
    %v161 = vld [vmem:[#allocation3 + $0x2b8] sm:$0xff]
    %v162 = vld [vmem:[#allocation3 + $0x2c0] sm:$0xff]
    %v163 = vld [vmem:[#allocation3 + $0x2c8] sm:$0xff]
    %v164 = vld [vmem:[#allocation3 + $0x2d0] sm:$0xff]
    %v165 = vld [vmem:[#allocation3 + $0x2d8] sm:$0xff]
    %v166 = vld [vmem:[#allocation3 + $0x2e0] sm:$0xff]
    %v167 = vld [vmem:[#allocation3 + $0x2e8] sm:$0xff]
    %v168 = vld [vmem:[#allocation3 + $0x2f0] sm:$0xff]
    %v169 = vld [vmem:[#allocation3 + $0x2f8] sm:$0xff]
    %v170 = vpack.c.bf16 %v76, %v74
    %v171 = vpack.c.bf16 %v77, %v75
    %v172 = vpack.c.bf16 %v80, %v78
    %v173 = vpack.c.bf16 %v81, %v79
    %v174 = vpack.c.bf16 %v84, %v82
    %v175 = vpack.c.bf16 %v85, %v83
    %v176 = vpack.c.bf16 %v88, %v86
    %v177 = vpack.c.bf16 %v89, %v87
    %v178 = vpack.c.bf16 %v92, %v90
    %v179 = vpack.c.bf16 %v93, %v91
    %v180 = vpack.c.bf16 %v96, %v94
    %v181 = vpack.c.bf16 %v97, %v95
    %v182 = vpack.c.bf16 %v100, %v98
    %v183 = vpack.c.bf16 %v101, %v99
    %v184 = vpack.c.bf16 %v104, %v102
    %v185 = vpack.c.bf16 %v105, %v103
    %v186 = vpack.c.bf16 %v108, %v106
    %v187 = vpack.c.bf16 %v109, %v107
    %v188 = vpack.c.bf16 %v112, %v110
    %v189 = vpack.c.bf16 %v113, %v111
    %v190 = vpack.c.bf16 %v116, %v114
    %v191 = vpack.c.bf16 %v117, %v115
    %v192 = vpack.c.bf16 %v120, %v118
    %v193 = vpack.c.bf16 %v121, %v119
    %v194 = vpack.c.bf16 %v124, %v122
    %v195 = vpack.c.bf16 %v125, %v123
    %v196 = vpack.c.bf16 %v128, %v126
    %v197 = vpack.c.bf16 %v129, %v127
    %v198 = vpack.c.bf16 %v132, %v130
    %v199 = vpack.c.bf16 %v133, %v131
    %v200 = vpack.c.bf16 %v136, %v134
    %v201 = vpack.c.bf16 %v137, %v135
    %v202 = vpack.c.bf16 %v140, %v138
    %v203 = vpack.c.bf16 %v141, %v139
    %v204 = vpack.c.bf16 %v144, %v142
    %v205 = vpack.c.bf16 %v145, %v143
    %v206 = vpack.c.bf16 %v148, %v146
    %v207 = vpack.c.bf16 %v149, %v147
    %v208 = vpack.c.bf16 %v152, %v150
    %v209 = vpack.c.bf16 %v153, %v151
    %v210 = vpack.c.bf16 %v156, %v154
    %v211 = vpack.c.bf16 %v157, %v155
    %v212 = vpack.c.bf16 %v160, %v158
    %v213 = vpack.c.bf16 %v161, %v159
    %v214 = vpack.c.bf16 %v164, %v162
    %v215 = vpack.c.bf16 %v165, %v163
    %v216 = vpack.c.bf16 %v168, %v166
    %v217 = vpack.c.bf16 %v169, %v167
    %v218 = vld [vmem:[%s1] sm:$0xf]
    %v219 = vld [vmem:[%s1 + $0x4] sm:$0xf]
    %v220 = vld [vmem:[%s1 + $0x8] sm:$0xf]
    %v221 = vld [vmem:[%s1 + $0xc] sm:$0xf]
    %v222 = vld [vmem:[%s1 + $0x10] sm:$0xf]
    %v223 = vld [vmem:[%s1 + $0x14] sm:$0xf]
    %v224 = vld [vmem:[%s1 + $0x18] sm:$0xf]
    %v225 = vld [vmem:[%s1 + $0x1c] sm:$0xf]
    %v226 = vld [vmem:[%s1 + $0x20] sm:$0xf]
    %v227 = vld [vmem:[%s1 + $0x24] sm:$0xf]
    %v228 = vld [vmem:[%s1 + $0x28] sm:$0xf]
    %v229 = vld [vmem:[%s1 + $0x2c] sm:$0xf]
    %v230 = vld [vmem:[%s1 + $0x30] sm:$0xf]
    %v231 = vld [vmem:[%s1 + $0x34] sm:$0xf]
    %v232 = vld [vmem:[%s1 + $0x38] sm:$0xf]
    %v233 = vld [vmem:[%s1 + $0x3c] sm:$0xf]
    %v234 = vld [vmem:[%s1 + $0x40] sm:$0xf]
    %v235 = vld [vmem:[%s1 + $0x44] sm:$0xf]
    %v236 = vld [vmem:[%s1 + $0x48] sm:$0xf]
    %v237 = vld [vmem:[%s1 + $0x4c] sm:$0xf]
    %v238 = vld [vmem:[%s1 + $0x50] sm:$0xf]
    %v239 = vld [vmem:[%s1 + $0x54] sm:$0xf]
    %v240 = vld [vmem:[%s1 + $0x58] sm:$0xf]
    %v241 = vld [vmem:[%s1 + $0x5c] sm:$0xf]
    %v242 = vld [vmem:[%s1 + $0x60] sm:$0xf]
    %v243 = vld [vmem:[%s1 + $0x64] sm:$0xf]
    %v244 = vld [vmem:[%s1 + $0x68] sm:$0xf]
    %v245 = vld [vmem:[%s1 + $0x6c] sm:$0xf]
    %v246 = vld [vmem:[%s1 + $0x70] sm:$0x3]
    %v247 = vld [vmem:[%s2] sm:$0x1]
    %v249 = vperm.slane %v247, 0
    %v280 = vunpack.c.l.b16 %v218
    %v281 = vunpack.c.l.b16 %v219
    %v282 = vunpack.c.l.b16 %v220
    %v283 = vunpack.c.l.b16 %v221
    %v284 = vunpack.c.l.b16 %v222
    %v285 = vunpack.c.l.b16 %v223
    %v286 = vunpack.c.l.b16 %v224
    %v287 = vunpack.c.l.b16 %v225
    %v288 = vunpack.c.l.b16 %v226
    %v289 = vunpack.c.l.b16 %v227
    %v290 = vunpack.c.l.b16 %v228
    %v291 = vunpack.c.l.b16 %v229
    %v292 = vunpack.c.l.b16 %v230
    %v293 = vunpack.c.l.b16 %v231
    %v294 = vunpack.c.l.b16 %v232
    %v295 = vunpack.c.l.b16 %v233
    %v296 = vunpack.c.l.b16 %v234
    %v297 = vunpack.c.l.b16 %v235
    %v298 = vunpack.c.l.b16 %v236
    %v299 = vunpack.c.l.b16 %v237
    %v300 = vunpack.c.l.b16 %v238
    %v301 = vunpack.c.l.b16 %v239
    %v302 = vunpack.c.l.b16 %v240
    %v303 = vunpack.c.l.b16 %v241
    %v304 = vunpack.c.l.b16 %v242
    %v305 = vunpack.c.l.b16 %v243
    %v306 = vunpack.c.l.b16 %v244
    %v307 = vunpack.c.l.b16 %v245
    %v308 = vunpack.c.l.b16 %v246
    %v309 = vpack.c.b16 %v281, %v280
    %v310 = vpack.c.b16 %v283, %v282
    %v311 = vpack.c.b16 %v285, %v284
    %v312 = vpack.c.b16 %v287, %v286
    %v313 = vpack.c.b16 %v289, %v288
    %v314 = vpack.c.b16 %v291, %v290
    %v315 = vpack.c.b16 %v293, %v292
    %v316 = vpack.c.b16 %v295, %v294
    %v317 = vpack.c.b16 %v297, %v296
    %v318 = vpack.c.b16 %v299, %v298
    %v319 = vpack.c.b16 %v301, %v300
    %v320 = vpack.c.b16 %v303, %v302
    %v321 = vpack.c.b16 %v305, %v304
    %v322 = vpack.c.b16 %v307, %v306
    %v323 = vpack.c.b16 %v308, %v308
    %vm338 = vcmask 809984
    %v340 = vsel %vm338, %v171, 0
    %v343 = vsel %vm338, %v173, 0
    %v346 = vsel %vm338, %v175, 0
    %v349 = vsel %vm338, %v177, 0
    %v352 = vsel %vm338, %v179, 0
    %v355 = vsel %vm338, %v181, 0
    %v358 = vsel %vm338, %v183, 0
    %v361 = vsel %vm338, %v185, 0
    %v364 = vsel %vm338, %v187, 0
    %v367 = vsel %vm338, %v189, 0
    %v370 = vsel %vm338, %v191, 0
    %v373 = vsel %vm338, %v193, 0
    %v376 = vsel %vm338, %v195, 0
    %v379 = vsel %vm338, %v197, 0
    %v382 = vsel %vm338, %v199, 0
    %v385 = vsel %vm338, %v201, 0
    %v388 = vsel %vm338, %v203, 0
    %v391 = vsel %vm338, %v205, 0
    %v394 = vsel %vm338, %v207, 0
    %v397 = vsel %vm338, %v209, 0
    %v400 = vsel %vm338, %v211, 0
    %v403 = vsel %vm338, %v213, 0
    %v406 = vsel %vm338, %v215, 0
    %v409 = vsel %vm338, %v217, 0
    %vm411 = vcmask 1040384
    %vm412 = vcmask 1041408
    %v413 = vsel %vm411, 4294967295, 65535
    %v414 = vsel %vm412, %v413, 0
    %v416 = vand.u32 %v323, %v414
    %418 = vmatpush.bf16.msra.mxu0 %v316
    %419 = vmatpush.bf16.msra.mxu0 %v315
    %420 = vmatpush.bf16.msra.mxu0 %v314
    %421 = vmatpush.bf16.msra.mxu0 %v313
    %422 = vmatpush.bf16.msra.mxu0 %v312
    %423 = vmatpush.bf16.msra.mxu0 %v311
    %424 = vmatpush.bf16.msra.mxu0 %v310
    %425 = vmatpush.bf16.msra.mxu0 %v309
    %426 = vmatmul.bf16.gmra.mxu0 %v170
    %v427 = vpop.f32.mrf.mxu0
    %v428 = vadd.f32 %v249, %v427
    %v429 = vpop.f32.mrf.mxu0
    %v430 = vadd.f32 %v249, %v429
    %431 = vmatmul.bf16.gmra.mxu0 %v172
    %v432 = vpop.f32.mrf.mxu0
    %v433 = vadd.f32 %v249, %v432
    %v434 = vpop.f32.mrf.mxu0
    %v435 = vadd.f32 %v249, %v434
    %436 = vmatmul.bf16.gmra.mxu0 %v174
    %v437 = vpop.f32.mrf.mxu0
    %v438 = vadd.f32 %v249, %v437
    %v439 = vpop.f32.mrf.mxu0
    %v440 = vadd.f32 %v249, %v439
    %441 = vmatmul.bf16.gmra.mxu0 %v176
    %v442 = vpop.f32.mrf.mxu0
    %v443 = vadd.f32 %v249, %v442
    %v444 = vpop.f32.mrf.mxu0
    %v445 = vadd.f32 %v249, %v444
    %446 = vmatmul.bf16.gmra.mxu0 %v178
    %v447 = vpop.f32.mrf.mxu0
    %v448 = vadd.f32 %v249, %v447
    %v449 = vpop.f32.mrf.mxu0
    %v450 = vadd.f32 %v249, %v449
    %451 = vmatmul.bf16.gmra.mxu0 %v180
    %v452 = vpop.f32.mrf.mxu0
    %v453 = vadd.f32 %v249, %v452
    %v454 = vpop.f32.mrf.mxu0
    %v455 = vadd.f32 %v249, %v454
    %456 = vmatmul.bf16.gmra.mxu0 %v182
    %v457 = vpop.f32.mrf.mxu0
    %v458 = vadd.f32 %v249, %v457
    %v459 = vpop.f32.mrf.mxu0
    %v460 = vadd.f32 %v249, %v459
    %461 = vmatmul.bf16.gmra.mxu0 %v184
    %v462 = vpop.f32.mrf.mxu0
    %v463 = vadd.f32 %v249, %v462
    %v464 = vpop.f32.mrf.mxu0
    %v465 = vadd.f32 %v249, %v464
    %466 = vmatmul.bf16.gmra.mxu0 %v186
    %v467 = vpop.f32.mrf.mxu0
    %v468 = vadd.f32 %v249, %v467
    %v469 = vpop.f32.mrf.mxu0
    %v470 = vadd.f32 %v249, %v469
    %471 = vmatmul.bf16.gmra.mxu0 %v188
    %v472 = vpop.f32.mrf.mxu0
    %v473 = vadd.f32 %v249, %v472
    %v474 = vpop.f32.mrf.mxu0
    %v475 = vadd.f32 %v249, %v474
    %476 = vmatmul.bf16.gmra.mxu0 %v190
    %v477 = vpop.f32.mrf.mxu0
    %v478 = vadd.f32 %v249, %v477
    %v479 = vpop.f32.mrf.mxu0
    %v480 = vadd.f32 %v249, %v479
    %481 = vmatmul.bf16.gmra.mxu0 %v192
    %v482 = vpop.f32.mrf.mxu0
    %v483 = vadd.f32 %v249, %v482
    %v484 = vpop.f32.mrf.mxu0
    %v485 = vadd.f32 %v249, %v484
    %486 = vmatmul.bf16.gmra.mxu0 %v194
    %v487 = vpop.f32.mrf.mxu0
    %v488 = vadd.f32 %v249, %v487
    %v489 = vpop.f32.mrf.mxu0
    %v490 = vadd.f32 %v249, %v489
    %491 = vmatmul.bf16.gmra.mxu0 %v196
    %v492 = vpop.f32.mrf.mxu0
    %v493 = vadd.f32 %v249, %v492
    %v494 = vpop.f32.mrf.mxu0
    %v495 = vadd.f32 %v249, %v494
    %496 = vmatmul.bf16.gmra.mxu0 %v198
    %v497 = vpop.f32.mrf.mxu0
    %v498 = vadd.f32 %v249, %v497
    %v499 = vpop.f32.mrf.mxu0
    %v500 = vadd.f32 %v249, %v499
    %501 = vmatmul.bf16.gmra.mxu0 %v200
    %v502 = vpop.f32.mrf.mxu0
    %v503 = vadd.f32 %v249, %v502
    %v504 = vpop.f32.mrf.mxu0
    %v505 = vadd.f32 %v249, %v504
    %506 = vmatmul.bf16.gmra.mxu0 %v202
    %v507 = vpop.f32.mrf.mxu0
    %v508 = vadd.f32 %v249, %v507
    %v509 = vpop.f32.mrf.mxu0
    %v510 = vadd.f32 %v249, %v509
    %511 = vmatmul.bf16.gmra.mxu0 %v204
    %v512 = vpop.f32.mrf.mxu0
    %v513 = vadd.f32 %v249, %v512
    %v514 = vpop.f32.mrf.mxu0
    %v515 = vadd.f32 %v249, %v514
    %516 = vmatmul.bf16.gmra.mxu0 %v206
    %v517 = vpop.f32.mrf.mxu0
    %v518 = vadd.f32 %v249, %v517
    %v519 = vpop.f32.mrf.mxu0
    %v520 = vadd.f32 %v249, %v519
    %521 = vmatmul.bf16.gmra.mxu0 %v208
    %v522 = vpop.f32.mrf.mxu0
    %v523 = vadd.f32 %v249, %v522
    %v524 = vpop.f32.mrf.mxu0
    %v525 = vadd.f32 %v249, %v524
    %526 = vmatmul.bf16.gmra.mxu0 %v210
    %v527 = vpop.f32.mrf.mxu0
    %v528 = vadd.f32 %v249, %v527
    %v529 = vpop.f32.mrf.mxu0
    %v530 = vadd.f32 %v249, %v529
    %531 = vmatmul.bf16.gmra.mxu0 %v212
    %v532 = vpop.f32.mrf.mxu0
    %v533 = vadd.f32 %v249, %v532
    %v534 = vpop.f32.mrf.mxu0
    %v535 = vadd.f32 %v249, %v534
    %536 = vmatmul.bf16.gmra.mxu0 %v214
    %v537 = vpop.f32.mrf.mxu0
    %v538 = vadd.f32 %v249, %v537
    %v539 = vpop.f32.mrf.mxu0
    %v540 = vadd.f32 %v249, %v539
    %541 = vmatmul.bf16.gmra.mxu0 %v216
    %v542 = vpop.f32.mrf.mxu0
    %v543 = vadd.f32 %v249, %v542
    %v544 = vpop.f32.mrf.mxu0
    %v545 = vadd.f32 %v249, %v544
    %546 = vdwg.mxu0
    %547 = vmatpush.bf16.msra.mxu0 0
    %548 = vmatpush.bf16.msra.mxu0 %v416
    %549 = vmatpush.bf16.msra.mxu0 %v322
    %550 = vmatpush.bf16.msra.mxu0 %v321
    %551 = vmatpush.bf16.msra.mxu0 %v320
    %552 = vmatpush.bf16.msra.mxu0 %v319
    %553 = vmatpush.bf16.msra.mxu0 %v318
    %554 = vmatpush.bf16.msra.mxu0 %v317
    %555 = vmatmul.bf16.gmra.mxu0 %v340
    %v556 = vpop.f32.mrf.mxu0
    %v557 = vadd.f32 %v428, %v556
    %v558 = vpop.f32.mrf.mxu0
    %v559 = vadd.f32 %v430, %v558
    %560 = vmatmul.bf16.gmra.mxu0 %v343
    %v561 = vpop.f32.mrf.mxu0
    %v562 = vadd.f32 %v433, %v561
    %v563 = vpop.f32.mrf.mxu0
    %v564 = vadd.f32 %v435, %v563
    %565 = vmatmul.bf16.gmra.mxu0 %v346
    %v566 = vpop.f32.mrf.mxu0
    %v567 = vadd.f32 %v438, %v566
    %v568 = vpop.f32.mrf.mxu0
    %v569 = vadd.f32 %v440, %v568
    %570 = vmatmul.bf16.gmra.mxu0 %v349
    %v571 = vpop.f32.mrf.mxu0
    %v572 = vadd.f32 %v443, %v571
    %v573 = vpop.f32.mrf.mxu0
    %v574 = vadd.f32 %v445, %v573
    %575 = vmatmul.bf16.gmra.mxu0 %v352
    %v576 = vpop.f32.mrf.mxu0
    %v577 = vadd.f32 %v448, %v576
    %v578 = vpop.f32.mrf.mxu0
    %v579 = vadd.f32 %v450, %v578
    %580 = vmatmul.bf16.gmra.mxu0 %v355
    %v581 = vpop.f32.mrf.mxu0
    %v582 = vadd.f32 %v453, %v581
    %v583 = vpop.f32.mrf.mxu0
    %v584 = vadd.f32 %v455, %v583
    %585 = vmatmul.bf16.gmra.mxu0 %v358
    %v586 = vpop.f32.mrf.mxu0
    %v587 = vadd.f32 %v458, %v586
    %v588 = vpop.f32.mrf.mxu0
    %v589 = vadd.f32 %v460, %v588
    %590 = vmatmul.bf16.gmra.mxu0 %v361
    %v591 = vpop.f32.mrf.mxu0
    %v592 = vadd.f32 %v463, %v591
    %v593 = vpop.f32.mrf.mxu0
    %v594 = vadd.f32 %v465, %v593
    %595 = vmatmul.bf16.gmra.mxu0 %v364
    %v596 = vpop.f32.mrf.mxu0
    %v597 = vadd.f32 %v468, %v596
    %v598 = vpop.f32.mrf.mxu0
    %v599 = vadd.f32 %v470, %v598
    %600 = vmatmul.bf16.gmra.mxu0 %v367
    %v601 = vpop.f32.mrf.mxu0
    %v602 = vadd.f32 %v473, %v601
    %v603 = vpop.f32.mrf.mxu0
    %v604 = vadd.f32 %v475, %v603
    %605 = vmatmul.bf16.gmra.mxu0 %v370
    %v606 = vpop.f32.mrf.mxu0
    %v607 = vadd.f32 %v478, %v606
    %v608 = vpop.f32.mrf.mxu0
    %v609 = vadd.f32 %v480, %v608
    %610 = vmatmul.bf16.gmra.mxu0 %v373
    %v611 = vpop.f32.mrf.mxu0
    %v612 = vadd.f32 %v483, %v611
    %v613 = vpop.f32.mrf.mxu0
    %v614 = vadd.f32 %v485, %v613
    %615 = vmatmul.bf16.gmra.mxu0 %v376
    %v616 = vpop.f32.mrf.mxu0
    %v617 = vadd.f32 %v488, %v616
    %v618 = vpop.f32.mrf.mxu0
    %v619 = vadd.f32 %v490, %v618
    %620 = vmatmul.bf16.gmra.mxu0 %v379
    %v621 = vpop.f32.mrf.mxu0
    %v622 = vadd.f32 %v493, %v621
    %v623 = vpop.f32.mrf.mxu0
    %v624 = vadd.f32 %v495, %v623
    %625 = vmatmul.bf16.gmra.mxu0 %v382
    %v626 = vpop.f32.mrf.mxu0
    %v627 = vadd.f32 %v498, %v626
    %v628 = vpop.f32.mrf.mxu0
    %v629 = vadd.f32 %v500, %v628
    %630 = vmatmul.bf16.gmra.mxu0 %v385
    %v631 = vpop.f32.mrf.mxu0
    %v632 = vadd.f32 %v503, %v631
    %v633 = vpop.f32.mrf.mxu0
    %v634 = vadd.f32 %v505, %v633
    %635 = vmatmul.bf16.gmra.mxu0 %v388
    %v636 = vpop.f32.mrf.mxu0
    %v637 = vadd.f32 %v508, %v636
    %v638 = vpop.f32.mrf.mxu0
    %v639 = vadd.f32 %v510, %v638
    %640 = vmatmul.bf16.gmra.mxu0 %v391
    %v641 = vpop.f32.mrf.mxu0
    %v642 = vadd.f32 %v513, %v641
    %v643 = vpop.f32.mrf.mxu0
    %v644 = vadd.f32 %v515, %v643
    %645 = vmatmul.bf16.gmra.mxu0 %v394
    %v646 = vpop.f32.mrf.mxu0
    %v647 = vadd.f32 %v518, %v646
    %v648 = vpop.f32.mrf.mxu0
    %v649 = vadd.f32 %v520, %v648
    %650 = vmatmul.bf16.gmra.mxu0 %v397
    %v651 = vpop.f32.mrf.mxu0
    %v652 = vadd.f32 %v523, %v651
    %v653 = vpop.f32.mrf.mxu0
    %v654 = vadd.f32 %v525, %v653
    %655 = vmatmul.bf16.gmra.mxu0 %v400
    %v656 = vpop.f32.mrf.mxu0
    %v657 = vadd.f32 %v528, %v656
    %v658 = vpop.f32.mrf.mxu0
    %v659 = vadd.f32 %v530, %v658
    %660 = vmatmul.bf16.gmra.mxu0 %v403
    %v661 = vpop.f32.mrf.mxu0
    %v662 = vadd.f32 %v533, %v661
    %v663 = vpop.f32.mrf.mxu0
    %v664 = vadd.f32 %v535, %v663
    %665 = vmatmul.bf16.gmra.mxu0 %v406
    %v666 = vpop.f32.mrf.mxu0
    %v667 = vadd.f32 %v538, %v666
    %v668 = vpop.f32.mrf.mxu0
    %v669 = vadd.f32 %v540, %v668
    %670 = vmatmul.bf16.gmra.mxu0 %v409
    %v671 = vpop.f32.mrf.mxu0
    %v672 = vadd.f32 %v543, %v671
    %v673 = vpop.f32.mrf.mxu0
    %v674 = vadd.f32 %v545, %v673
    %675 = vdwg.mxu0
    %vm676 = vcmp.ge.f32.partialorder %v557, 0.0
    %vm677 = vcmp.ge.f32.partialorder %v559, 0.0
    %vm678 = vcmp.ge.f32.partialorder %v562, 0.0
    %vm679 = vcmp.ge.f32.partialorder %v564, 0.0
    %vm680 = vcmp.ge.f32.partialorder %v567, 0.0
    %vm681 = vcmp.ge.f32.partialorder %v569, 0.0
    %vm682 = vcmp.ge.f32.partialorder %v572, 0.0
    %vm683 = vcmp.ge.f32.partialorder %v574, 0.0
    %vm684 = vcmp.ge.f32.partialorder %v577, 0.0
    %vm685 = vcmp.ge.f32.partialorder %v579, 0.0
    %vm686 = vcmp.ge.f32.partialorder %v582, 0.0
    %vm687 = vcmp.ge.f32.partialorder %v584, 0.0
    %vm688 = vcmp.ge.f32.partialorder %v587, 0.0
    %vm689 = vcmp.ge.f32.partialorder %v589, 0.0
    %vm690 = vcmp.ge.f32.partialorder %v592, 0.0
    %vm691 = vcmp.ge.f32.partialorder %v594, 0.0
    %vm692 = vcmp.ge.f32.partialorder %v597, 0.0
    %vm693 = vcmp.ge.f32.partialorder %v599, 0.0
    %vm694 = vcmp.ge.f32.partialorder %v602, 0.0
    %vm695 = vcmp.ge.f32.partialorder %v604, 0.0
    %vm696 = vcmp.ge.f32.partialorder %v607, 0.0
    %vm697 = vcmp.ge.f32.partialorder %v609, 0.0
    %vm698 = vcmp.ge.f32.partialorder %v612, 0.0
    %vm699 = vcmp.ge.f32.partialorder %v614, 0.0
    %vm700 = vcmp.ge.f32.partialorder %v617, 0.0
    %vm701 = vcmp.ge.f32.partialorder %v619, 0.0
    %vm702 = vcmp.ge.f32.partialorder %v622, 0.0
    %vm703 = vcmp.ge.f32.partialorder %v624, 0.0
    %vm704 = vcmp.ge.f32.partialorder %v627, 0.0
    %vm705 = vcmp.ge.f32.partialorder %v629, 0.0
    %vm706 = vcmp.ge.f32.partialorder %v632, 0.0
    %vm707 = vcmp.ge.f32.partialorder %v634, 0.0
    %vm708 = vcmp.ge.f32.partialorder %v637, 0.0
    %vm709 = vcmp.ge.f32.partialorder %v639, 0.0
    %vm710 = vcmp.ge.f32.partialorder %v642, 0.0
    %vm711 = vcmp.ge.f32.partialorder %v644, 0.0
    %vm712 = vcmp.ge.f32.partialorder %v647, 0.0
    %vm713 = vcmp.ge.f32.partialorder %v649, 0.0
    %vm714 = vcmp.ge.f32.partialorder %v652, 0.0
    %vm715 = vcmp.ge.f32.partialorder %v654, 0.0
    %vm716 = vcmp.ge.f32.partialorder %v657, 0.0
    %vm717 = vcmp.ge.f32.partialorder %v659, 0.0
    %vm718 = vcmp.ge.f32.partialorder %v662, 0.0
    %vm719 = vcmp.ge.f32.partialorder %v664, 0.0
    %vm720 = vcmp.ge.f32.partialorder %v667, 0.0
    %vm721 = vcmp.ge.f32.partialorder %v669, 0.0
    %vm722 = vcmp.ge.f32.partialorder %v672, 0.0
    %vm723 = vcmp.ge.f32.partialorder %v674, 0.0
    %v724 = vmul.f32 %v557, 0.01
    %v725 = vmul.f32 %v559, 0.01
    %v726 = vmul.f32 %v562, 0.01
    %v727 = vmul.f32 %v564, 0.01
    %v728 = vmul.f32 %v567, 0.01
    %v729 = vmul.f32 %v569, 0.01
    %v730 = vmul.f32 %v572, 0.01
    %v731 = vmul.f32 %v574, 0.01
    %v732 = vmul.f32 %v577, 0.01
    %v733 = vmul.f32 %v579, 0.01
    %v734 = vmul.f32 %v582, 0.01
    %v735 = vmul.f32 %v584, 0.01
    %v736 = vmul.f32 %v587, 0.01
    %v737 = vmul.f32 %v589, 0.01
    %v738 = vmul.f32 %v592, 0.01
    %v739 = vmul.f32 %v594, 0.01
    %v740 = vmul.f32 %v597, 0.01
    %v741 = vmul.f32 %v599, 0.01
    %v742 = vmul.f32 %v602, 0.01
    %v743 = vmul.f32 %v604, 0.01
    %v744 = vmul.f32 %v607, 0.01
    %v745 = vmul.f32 %v609, 0.01
    %v746 = vmul.f32 %v612, 0.01
    %v747 = vmul.f32 %v614, 0.01
    %v748 = vmul.f32 %v617, 0.01
    %v749 = vmul.f32 %v619, 0.01
    %v750 = vmul.f32 %v622, 0.01
    %v751 = vmul.f32 %v624, 0.01
    %v752 = vmul.f32 %v627, 0.01
    %v753 = vmul.f32 %v629, 0.01
    %v754 = vmul.f32 %v632, 0.01
    %v755 = vmul.f32 %v634, 0.01
    %v756 = vmul.f32 %v637, 0.01
    %v757 = vmul.f32 %v639, 0.01
    %v758 = vmul.f32 %v642, 0.01
    %v759 = vmul.f32 %v644, 0.01
    %v760 = vmul.f32 %v647, 0.01
    %v761 = vmul.f32 %v649, 0.01
    %v762 = vmul.f32 %v652, 0.01
    %v763 = vmul.f32 %v654, 0.01
    %v764 = vmul.f32 %v657, 0.01
    %v765 = vmul.f32 %v659, 0.01
    %v766 = vmul.f32 %v662, 0.01
    %v767 = vmul.f32 %v664, 0.01
    %v768 = vmul.f32 %v667, 0.01
    %v769 = vmul.f32 %v669, 0.01
    %v770 = vmul.f32 %v672, 0.01
    %v771 = vmul.f32 %v674, 0.01
    %v772 = vsel %vm676, %v557, %v724
    %v773 = vsel %vm677, %v559, %v725
    %v774 = vsel %vm678, %v562, %v726
    %v775 = vsel %vm679, %v564, %v727
    %v776 = vsel %vm680, %v567, %v728
    %v777 = vsel %vm681, %v569, %v729
    %v778 = vsel %vm682, %v572, %v730
    %v779 = vsel %vm683, %v574, %v731
    %v780 = vsel %vm684, %v577, %v732
    %v781 = vsel %vm685, %v579, %v733
    %v782 = vsel %vm686, %v582, %v734
    %v783 = vsel %vm687, %v584, %v735
    %v784 = vsel %vm688, %v587, %v736
    %v785 = vsel %vm689, %v589, %v737
    %v786 = vsel %vm690, %v592, %v738
    %v787 = vsel %vm691, %v594, %v739
    %v788 = vsel %vm692, %v597, %v740
    %v789 = vsel %vm693, %v599, %v741
    %v790 = vsel %vm694, %v602, %v742
    %v791 = vsel %vm695, %v604, %v743
    %v792 = vsel %vm696, %v607, %v744
    %v793 = vsel %vm697, %v609, %v745
    %v794 = vsel %vm698, %v612, %v746
    %v795 = vsel %vm699, %v614, %v747
    %v796 = vsel %vm700, %v617, %v748
    %v797 = vsel %vm701, %v619, %v749
    %v798 = vsel %vm702, %v622, %v750
    %v799 = vsel %vm703, %v624, %v751
    %v800 = vsel %vm704, %v627, %v752
    %v801 = vsel %vm705, %v629, %v753
    %v802 = vsel %vm706, %v632, %v754
    %v803 = vsel %vm707, %v634, %v755
    %v804 = vsel %vm708, %v637, %v756
    %v805 = vsel %vm709, %v639, %v757
    %v806 = vsel %vm710, %v642, %v758
    %v807 = vsel %vm711, %v644, %v759
    %v808 = vsel %vm712, %v647, %v760
    %v809 = vsel %vm713, %v649, %v761
    %v810 = vsel %vm714, %v652, %v762
    %v811 = vsel %vm715, %v654, %v763
    %v812 = vsel %vm716, %v657, %v764
    %v813 = vsel %vm717, %v659, %v765
    %v814 = vsel %vm718, %v662, %v766
    %v815 = vsel %vm719, %v664, %v767
    %v816 = vsel %vm720, %v667, %v768
    %v817 = vsel %vm721, %v669, %v769
    %v818 = vsel %vm722, %v672, %v770
    %v819 = vsel %vm723, %v674, %v771
    %v820 = vpack.c.bf16 %v773, %v772
    %v821 = vpack.c.bf16 %v775, %v774
    %v822 = vpack.c.bf16 %v777, %v776
    %v823 = vpack.c.bf16 %v779, %v778
    %v824 = vpack.c.bf16 %v781, %v780
    %v825 = vpack.c.bf16 %v783, %v782
    %v826 = vpack.c.bf16 %v785, %v784
    %v827 = vpack.c.bf16 %v787, %v786
    %v828 = vpack.c.bf16 %v789, %v788
    %v829 = vpack.c.bf16 %v791, %v790
    %v830 = vpack.c.bf16 %v793, %v792
    %v831 = vpack.c.bf16 %v795, %v794
    %v832 = vpack.c.bf16 %v797, %v796
    %v833 = vpack.c.bf16 %v799, %v798
    %v834 = vpack.c.bf16 %v801, %v800
    %v835 = vpack.c.bf16 %v803, %v802
    %v836 = vpack.c.bf16 %v805, %v804
    %v837 = vpack.c.bf16 %v807, %v806
    %v838 = vpack.c.bf16 %v809, %v808
    %v839 = vpack.c.bf16 %v811, %v810
    %v840 = vpack.c.bf16 %v813, %v812
    %v841 = vpack.c.bf16 %v815, %v814
    %v842 = vpack.c.bf16 %v817, %v816
    %v843 = vpack.c.bf16 %v819, %v818
    %v844 = vld [vmem:[%s3] sm:$0xff]
    %v845 = vld [vmem:[%s3 + $0x8] sm:$0xff]
    %v846 = vld [vmem:[%s3 + $0x10] sm:$0xff]
    %v847 = vld [vmem:[%s3 + $0x18] sm:$0xff]
    %v848 = vld [vmem:[%s3 + $0x20] sm:$0xff]
    %v849 = vld [vmem:[%s3 + $0x28] sm:$0xff]
    %v850 = vld [vmem:[%s3 + $0x30] sm:$0xff]
    %v851 = vld [vmem:[%s3 + $0x38] sm:$0xff]
    %v852 = vld [vmem:[%s4] sm:$0x3]
    %v854 = vperm.slane %v852, 0
    %v855 = vperm.slane %v852, 1
    %v866 = vunpack.c.l.b16 %v844
    %v867 = vunpack.c.h.b16 %v844
    %v868 = vunpack.c.l.b16 %v845
    %v869 = vunpack.c.h.b16 %v845
    %v870 = vunpack.c.l.b16 %v846
    %v871 = vunpack.c.h.b16 %v846
    %v872 = vunpack.c.l.b16 %v847
    %v873 = vunpack.c.h.b16 %v847
    %v874 = vunpack.c.l.b16 %v848
    %v875 = vunpack.c.h.b16 %v848
    %v876 = vunpack.c.l.b16 %v849
    %v877 = vunpack.c.h.b16 %v849
    %v878 = vunpack.c.l.b16 %v850
    %v879 = vunpack.c.h.b16 %v850
    %v880 = vunpack.c.l.b16 %v851
    %v881 = vunpack.c.h.b16 %v851
    %v882 = vpack.c.b16 %v868, %v866
    %v883 = vpack.c.b16 %v869, %v867
    %v884 = vpack.c.b16 %v872, %v870
    %v885 = vpack.c.b16 %v873, %v871
    %v886 = vpack.c.b16 %v876, %v874
    %v887 = vpack.c.b16 %v877, %v875
    %v888 = vpack.c.b16 %v880, %v878
    %v889 = vpack.c.b16 %v881, %v879
    %vm898 = vcmask 523264
    %v900 = vsel %vm898, %v820, 0
    %v903 = vsel %vm898, %v821, 0
    %v906 = vsel %vm898, %v822, 0
    %v909 = vsel %vm898, %v823, 0
    %v912 = vsel %vm898, %v824, 0
    %v915 = vsel %vm898, %v825, 0
    %v918 = vsel %vm898, %v826, 0
    %v921 = vsel %vm898, %v827, 0
    %v924 = vsel %vm898, %v828, 0
    %v927 = vsel %vm898, %v829, 0
    %v930 = vsel %vm898, %v830, 0
    %v933 = vsel %vm898, %v831, 0
    %v936 = vsel %vm898, %v832, 0
    %v939 = vsel %vm898, %v833, 0
    %v942 = vsel %vm898, %v834, 0
    %v945 = vsel %vm898, %v835, 0
    %v948 = vsel %vm898, %v836, 0
    %v951 = vsel %vm898, %v837, 0
    %v954 = vsel %vm898, %v838, 0
    %v957 = vsel %vm898, %v839, 0
    %v960 = vsel %vm898, %v840, 0
    %v963 = vsel %vm898, %v841, 0
    %v966 = vsel %vm898, %v842, 0
    %v969 = vsel %vm898, %v843, 0
    %971 = vmatpush.bf16.msra.mxu0 0
    %972 = vmatpush.bf16.msra.mxu0 0
    %973 = vmatpush.bf16.msra.mxu0 0
    %974 = vmatpush.bf16.msra.mxu0 0
    %975 = vmatpush.bf16.msra.mxu0 %v888
    %976 = vmatpush.bf16.msra.mxu0 %v886
    %977 = vmatpush.bf16.msra.mxu0 %v884
    %978 = vmatpush.bf16.msra.mxu0 %v882
    %979 = vmatmul.bf16.gmra.mxu0 %v900
    %v980 = vpop.f32.mrf.mxu0
    %v981 = vadd.f32 %v854, %v980
    %v982 = vpop.f32.mrf.mxu0
    %v983 = vadd.f32 %v854, %v982
    %984 = vmatmul.bf16.gmra.mxu0 %v903
    %v985 = vpop.f32.mrf.mxu0
    %v986 = vadd.f32 %v854, %v985
    %v987 = vpop.f32.mrf.mxu0
    %v988 = vadd.f32 %v854, %v987
    %989 = vmatmul.bf16.gmra.mxu0 %v906
    %v990 = vpop.f32.mrf.mxu0
    %v991 = vadd.f32 %v854, %v990
    %v992 = vpop.f32.mrf.mxu0
    %v993 = vadd.f32 %v854, %v992
    %994 = vmatmul.bf16.gmra.mxu0 %v909
    %v995 = vpop.f32.mrf.mxu0
    %v996 = vadd.f32 %v854, %v995
    %v997 = vpop.f32.mrf.mxu0
    %v998 = vadd.f32 %v854, %v997
    %999 = vmatmul.bf16.gmra.mxu0 %v912
    %v1000 = vpop.f32.mrf.mxu0
    %v1001 = vadd.f32 %v854, %v1000
    %v1002 = vpop.f32.mrf.mxu0
    %v1003 = vadd.f32 %v854, %v1002
    %1004 = vmatmul.bf16.gmra.mxu0 %v915
    %v1005 = vpop.f32.mrf.mxu0
    %v1006 = vadd.f32 %v854, %v1005
    %v1007 = vpop.f32.mrf.mxu0
    %v1008 = vadd.f32 %v854, %v1007
    %1009 = vmatmul.bf16.gmra.mxu0 %v918
    %v1010 = vpop.f32.mrf.mxu0
    %v1011 = vadd.f32 %v854, %v1010
    %v1012 = vpop.f32.mrf.mxu0
    %v1013 = vadd.f32 %v854, %v1012
    %1014 = vmatmul.bf16.gmra.mxu0 %v921
    %v1015 = vpop.f32.mrf.mxu0
    %v1016 = vadd.f32 %v854, %v1015
    %v1017 = vpop.f32.mrf.mxu0
    %v1018 = vadd.f32 %v854, %v1017
    %1019 = vmatmul.bf16.gmra.mxu0 %v924
    %v1020 = vpop.f32.mrf.mxu0
    %v1021 = vadd.f32 %v854, %v1020
    %v1022 = vpop.f32.mrf.mxu0
    %v1023 = vadd.f32 %v854, %v1022
    %1024 = vmatmul.bf16.gmra.mxu0 %v927
    %v1025 = vpop.f32.mrf.mxu0
    %v1026 = vadd.f32 %v854, %v1025
    %v1027 = vpop.f32.mrf.mxu0
    %v1028 = vadd.f32 %v854, %v1027
    %1029 = vmatmul.bf16.gmra.mxu0 %v930
    %v1030 = vpop.f32.mrf.mxu0
    %v1031 = vadd.f32 %v854, %v1030
    %v1032 = vpop.f32.mrf.mxu0
    %v1033 = vadd.f32 %v854, %v1032
    %1034 = vmatmul.bf16.gmra.mxu0 %v933
    %v1035 = vpop.f32.mrf.mxu0
    %v1036 = vadd.f32 %v854, %v1035
    %v1037 = vpop.f32.mrf.mxu0
    %v1038 = vadd.f32 %v854, %v1037
    %1039 = vmatmul.bf16.gmra.mxu0 %v936
    %v1040 = vpop.f32.mrf.mxu0
    %v1041 = vadd.f32 %v854, %v1040
    %v1042 = vpop.f32.mrf.mxu0
    %v1043 = vadd.f32 %v854, %v1042
    %1044 = vmatmul.bf16.gmra.mxu0 %v939
    %v1045 = vpop.f32.mrf.mxu0
    %v1046 = vadd.f32 %v854, %v1045
    %v1047 = vpop.f32.mrf.mxu0
    %v1048 = vadd.f32 %v854, %v1047
    %1049 = vmatmul.bf16.gmra.mxu0 %v942
    %v1050 = vpop.f32.mrf.mxu0
    %v1051 = vadd.f32 %v854, %v1050
    %v1052 = vpop.f32.mrf.mxu0
    %v1053 = vadd.f32 %v854, %v1052
    %1054 = vmatmul.bf16.gmra.mxu0 %v945
    %v1055 = vpop.f32.mrf.mxu0
    %v1056 = vadd.f32 %v854, %v1055
    %v1057 = vpop.f32.mrf.mxu0
    %v1058 = vadd.f32 %v854, %v1057
    %1059 = vmatmul.bf16.gmra.mxu0 %v948
    %v1060 = vpop.f32.mrf.mxu0
    %v1061 = vadd.f32 %v854, %v1060
    %v1062 = vpop.f32.mrf.mxu0
    %v1063 = vadd.f32 %v854, %v1062
    %1064 = vmatmul.bf16.gmra.mxu0 %v951
    %v1065 = vpop.f32.mrf.mxu0
    %v1066 = vadd.f32 %v854, %v1065
    %v1067 = vpop.f32.mrf.mxu0
    %v1068 = vadd.f32 %v854, %v1067
    %1069 = vmatmul.bf16.gmra.mxu0 %v954
    %v1070 = vpop.f32.mrf.mxu0
    %v1071 = vadd.f32 %v854, %v1070
    %v1072 = vpop.f32.mrf.mxu0
    %v1073 = vadd.f32 %v854, %v1072
    %1074 = vmatmul.bf16.gmra.mxu0 %v957
    %v1075 = vpop.f32.mrf.mxu0
    %v1076 = vadd.f32 %v854, %v1075
    %v1077 = vpop.f32.mrf.mxu0
    %v1078 = vadd.f32 %v854, %v1077
    %1079 = vmatmul.bf16.gmra.mxu0 %v960
    %v1080 = vpop.f32.mrf.mxu0
    %v1081 = vadd.f32 %v854, %v1080
    %v1082 = vpop.f32.mrf.mxu0
    %v1083 = vadd.f32 %v854, %v1082
    %1084 = vmatmul.bf16.gmra.mxu0 %v963
    %v1085 = vpop.f32.mrf.mxu0
    %v1086 = vadd.f32 %v854, %v1085
    %v1087 = vpop.f32.mrf.mxu0
    %v1088 = vadd.f32 %v854, %v1087
    %1089 = vmatmul.bf16.gmra.mxu0 %v966
    %v1090 = vpop.f32.mrf.mxu0
    %v1091 = vadd.f32 %v854, %v1090
    %v1092 = vpop.f32.mrf.mxu0
    %v1093 = vadd.f32 %v854, %v1092
    %1094 = vmatmul.bf16.gmra.mxu0 %v969
    %v1095 = vpop.f32.mrf.mxu0
    %v1096 = vadd.f32 %v854, %v1095
    %v1097 = vpop.f32.mrf.mxu0
    %v1098 = vadd.f32 %v854, %v1097
    %1099 = vdwg.mxu0
    %1100 = vmatpush.bf16.msra.mxu0 0
    %1101 = vmatpush.bf16.msra.mxu0 0
    %1102 = vmatpush.bf16.msra.mxu0 0
    %1103 = vmatpush.bf16.msra.mxu0 0
    %1104 = vmatpush.bf16.msra.mxu0 %v889
    %1105 = vmatpush.bf16.msra.mxu0 %v887
    %1106 = vmatpush.bf16.msra.mxu0 %v885
    %1107 = vmatpush.bf16.msra.mxu0 %v883
    %1108 = vmatmul.bf16.gmra.mxu0 %v900
    %v1109 = vpop.f32.mrf.mxu0
    %v1110 = vadd.f32 %v855, %v1109
    %v1111 = vpop.f32.mrf.mxu0
    %v1112 = vadd.f32 %v855, %v1111
    %1113 = vmatmul.bf16.gmra.mxu0 %v903
    %v1114 = vpop.f32.mrf.mxu0
    %v1115 = vadd.f32 %v855, %v1114
    %v1116 = vpop.f32.mrf.mxu0
    %v1117 = vadd.f32 %v855, %v1116
    %1118 = vmatmul.bf16.gmra.mxu0 %v906
    %v1119 = vpop.f32.mrf.mxu0
    %v1120 = vadd.f32 %v855, %v1119
    %v1121 = vpop.f32.mrf.mxu0
    %v1122 = vadd.f32 %v855, %v1121
    %1123 = vmatmul.bf16.gmra.mxu0 %v909
    %v1124 = vpop.f32.mrf.mxu0
    %v1125 = vadd.f32 %v855, %v1124
    %v1126 = vpop.f32.mrf.mxu0
    %v1127 = vadd.f32 %v855, %v1126
    %1128 = vmatmul.bf16.gmra.mxu0 %v912
    %v1129 = vpop.f32.mrf.mxu0
    %v1130 = vadd.f32 %v855, %v1129
    %v1131 = vpop.f32.mrf.mxu0
    %v1132 = vadd.f32 %v855, %v1131
    %1133 = vmatmul.bf16.gmra.mxu0 %v915
    %v1134 = vpop.f32.mrf.mxu0
    %v1135 = vadd.f32 %v855, %v1134
    %v1136 = vpop.f32.mrf.mxu0
    %v1137 = vadd.f32 %v855, %v1136
    %1138 = vmatmul.bf16.gmra.mxu0 %v918
    %v1139 = vpop.f32.mrf.mxu0
    %v1140 = vadd.f32 %v855, %v1139
    %v1141 = vpop.f32.mrf.mxu0
    %v1142 = vadd.f32 %v855, %v1141
    %1143 = vmatmul.bf16.gmra.mxu0 %v921
    %v1144 = vpop.f32.mrf.mxu0
    %v1145 = vadd.f32 %v855, %v1144
    %v1146 = vpop.f32.mrf.mxu0
    %v1147 = vadd.f32 %v855, %v1146
    %1148 = vmatmul.bf16.gmra.mxu0 %v924
    %v1149 = vpop.f32.mrf.mxu0
    %v1150 = vadd.f32 %v855, %v1149
    %v1151 = vpop.f32.mrf.mxu0
    %v1152 = vadd.f32 %v855, %v1151
    %1153 = vmatmul.bf16.gmra.mxu0 %v927
    %v1154 = vpop.f32.mrf.mxu0
    %v1155 = vadd.f32 %v855, %v1154
    %v1156 = vpop.f32.mrf.mxu0
    %v1157 = vadd.f32 %v855, %v1156
    %1158 = vmatmul.bf16.gmra.mxu0 %v930
    %v1159 = vpop.f32.mrf.mxu0
    %v1160 = vadd.f32 %v855, %v1159
    %v1161 = vpop.f32.mrf.mxu0
    %v1162 = vadd.f32 %v855, %v1161
    %1163 = vmatmul.bf16.gmra.mxu0 %v933
    %v1164 = vpop.f32.mrf.mxu0
    %v1165 = vadd.f32 %v855, %v1164
    %v1166 = vpop.f32.mrf.mxu0
    %v1167 = vadd.f32 %v855, %v1166
    %1168 = vmatmul.bf16.gmra.mxu0 %v936
    %v1169 = vpop.f32.mrf.mxu0
    %v1170 = vadd.f32 %v855, %v1169
    %v1171 = vpop.f32.mrf.mxu0
    %v1172 = vadd.f32 %v855, %v1171
    %1173 = vmatmul.bf16.gmra.mxu0 %v939
    %v1174 = vpop.f32.mrf.mxu0
    %v1175 = vadd.f32 %v855, %v1174
    %v1176 = vpop.f32.mrf.mxu0
    %v1177 = vadd.f32 %v855, %v1176
    %1178 = vmatmul.bf16.gmra.mxu0 %v942
    %v1179 = vpop.f32.mrf.mxu0
    %v1180 = vadd.f32 %v855, %v1179
    %v1181 = vpop.f32.mrf.mxu0
    %v1182 = vadd.f32 %v855, %v1181
    %1183 = vmatmul.bf16.gmra.mxu0 %v945
    %v1184 = vpop.f32.mrf.mxu0
    %v1185 = vadd.f32 %v855, %v1184
    %v1186 = vpop.f32.mrf.mxu0
    %v1187 = vadd.f32 %v855, %v1186
    %1188 = vmatmul.bf16.gmra.mxu0 %v948
    %v1189 = vpop.f32.mrf.mxu0
    %v1190 = vadd.f32 %v855, %v1189
    %v1191 = vpop.f32.mrf.mxu0
    %v1192 = vadd.f32 %v855, %v1191
    %1193 = vmatmul.bf16.gmra.mxu0 %v951
    %v1194 = vpop.f32.mrf.mxu0
    %v1195 = vadd.f32 %v855, %v1194
    %v1196 = vpop.f32.mrf.mxu0
    %v1197 = vadd.f32 %v855, %v1196
    %1198 = vmatmul.bf16.gmra.mxu0 %v954
    %v1199 = vpop.f32.mrf.mxu0
    %v1200 = vadd.f32 %v855, %v1199
    %v1201 = vpop.f32.mrf.mxu0
    %v1202 = vadd.f32 %v855, %v1201
    %1203 = vmatmul.bf16.gmra.mxu0 %v957
    %v1204 = vpop.f32.mrf.mxu0
    %v1205 = vadd.f32 %v855, %v1204
    %v1206 = vpop.f32.mrf.mxu0
    %v1207 = vadd.f32 %v855, %v1206
    %1208 = vmatmul.bf16.gmra.mxu0 %v960
    %v1209 = vpop.f32.mrf.mxu0
    %v1210 = vadd.f32 %v855, %v1209
    %v1211 = vpop.f32.mrf.mxu0
    %v1212 = vadd.f32 %v855, %v1211
    %1213 = vmatmul.bf16.gmra.mxu0 %v963
    %v1214 = vpop.f32.mrf.mxu0
    %v1215 = vadd.f32 %v855, %v1214
    %v1216 = vpop.f32.mrf.mxu0
    %v1217 = vadd.f32 %v855, %v1216
    %1218 = vmatmul.bf16.gmra.mxu0 %v966
    %v1219 = vpop.f32.mrf.mxu0
    %v1220 = vadd.f32 %v855, %v1219
    %v1221 = vpop.f32.mrf.mxu0
    %v1222 = vadd.f32 %v855, %v1221
    %1223 = vmatmul.bf16.gmra.mxu0 %v969
    %v1224 = vpop.f32.mrf.mxu0
    %v1225 = vadd.f32 %v855, %v1224
    %v1226 = vpop.f32.mrf.mxu0
    %v1227 = vadd.f32 %v855, %v1226
    %1228 = vdwg.mxu0
    %vm1229 = vcmp.ge.f32.partialorder %v981, 0.0
    %vm1230 = vcmp.ge.f32.partialorder %v1110, 0.0
    %vm1231 = vcmp.ge.f32.partialorder %v983, 0.0
    %vm1232 = vcmp.ge.f32.partialorder %v1112, 0.0
    %vm1233 = vcmp.ge.f32.partialorder %v986, 0.0
    %vm1234 = vcmp.ge.f32.partialorder %v1115, 0.0
    %vm1235 = vcmp.ge.f32.partialorder %v988, 0.0
    %vm1236 = vcmp.ge.f32.partialorder %v1117, 0.0
    %vm1237 = vcmp.ge.f32.partialorder %v991, 0.0
    %vm1238 = vcmp.ge.f32.partialorder %v1120, 0.0
    %vm1239 = vcmp.ge.f32.partialorder %v993, 0.0
    %vm1240 = vcmp.ge.f32.partialorder %v1122, 0.0
    %vm1241 = vcmp.ge.f32.partialorder %v996, 0.0
    %vm1242 = vcmp.ge.f32.partialorder %v1125, 0.0
    %vm1243 = vcmp.ge.f32.partialorder %v998, 0.0
    %vm1244 = vcmp.ge.f32.partialorder %v1127, 0.0
    %vm1245 = vcmp.ge.f32.partialorder %v1001, 0.0
    %vm1246 = vcmp.ge.f32.partialorder %v1130, 0.0
    %vm1247 = vcmp.ge.f32.partialorder %v1003, 0.0
    %vm1248 = vcmp.ge.f32.partialorder %v1132, 0.0
    %vm1249 = vcmp.ge.f32.partialorder %v1006, 0.0
    %vm1250 = vcmp.ge.f32.partialorder %v1135, 0.0
    %vm1251 = vcmp.ge.f32.partialorder %v1008, 0.0
    %vm1252 = vcmp.ge.f32.partialorder %v1137, 0.0
    %vm1253 = vcmp.ge.f32.partialorder %v1011, 0.0
    %vm1254 = vcmp.ge.f32.partialorder %v1140, 0.0
    %vm1255 = vcmp.ge.f32.partialorder %v1013, 0.0
    %vm1256 = vcmp.ge.f32.partialorder %v1142, 0.0
    %vm1257 = vcmp.ge.f32.partialorder %v1016, 0.0
    %vm1258 = vcmp.ge.f32.partialorder %v1145, 0.0
    %vm1259 = vcmp.ge.f32.partialorder %v1018, 0.0
    %vm1260 = vcmp.ge.f32.partialorder %v1147, 0.0
    %vm1261 = vcmp.ge.f32.partialorder %v1021, 0.0
    %vm1262 = vcmp.ge.f32.partialorder %v1150, 0.0
    %vm1263 = vcmp.ge.f32.partialorder %v1023, 0.0
    %vm1264 = vcmp.ge.f32.partialorder %v1152, 0.0
    %vm1265 = vcmp.ge.f32.partialorder %v1026, 0.0
    %vm1266 = vcmp.ge.f32.partialorder %v1155, 0.0
    %vm1267 = vcmp.ge.f32.partialorder %v1028, 0.0
    %vm1268 = vcmp.ge.f32.partialorder %v1157, 0.0
    %vm1269 = vcmp.ge.f32.partialorder %v1031, 0.0
    %vm1270 = vcmp.ge.f32.partialorder %v1160, 0.0
    %vm1271 = vcmp.ge.f32.partialorder %v1033, 0.0
    %vm1272 = vcmp.ge.f32.partialorder %v1162, 0.0
    %vm1273 = vcmp.ge.f32.partialorder %v1036, 0.0
    %vm1274 = vcmp.ge.f32.partialorder %v1165, 0.0
    %vm1275 = vcmp.ge.f32.partialorder %v1038, 0.0
    %vm1276 = vcmp.ge.f32.partialorder %v1167, 0.0
    %vm1277 = vcmp.ge.f32.partialorder %v1041, 0.0
    %vm1278 = vcmp.ge.f32.partialorder %v1170, 0.0
    %vm1279 = vcmp.ge.f32.partialorder %v1043, 0.0
    %vm1280 = vcmp.ge.f32.partialorder %v1172, 0.0
    %vm1281 = vcmp.ge.f32.partialorder %v1046, 0.0
    %vm1282 = vcmp.ge.f32.partialorder %v1175, 0.0
    %vm1283 = vcmp.ge.f32.partialorder %v1048, 0.0
    %vm1284 = vcmp.ge.f32.partialorder %v1177, 0.0
    %vm1285 = vcmp.ge.f32.partialorder %v1051, 0.0
    %vm1286 = vcmp.ge.f32.partialorder %v1180, 0.0
    %vm1287 = vcmp.ge.f32.partialorder %v1053, 0.0
    %vm1288 = vcmp.ge.f32.partialorder %v1182, 0.0
    %vm1289 = vcmp.ge.f32.partialorder %v1056, 0.0
    %vm1290 = vcmp.ge.f32.partialorder %v1185, 0.0
    %vm1291 = vcmp.ge.f32.partialorder %v1058, 0.0
    %vm1292 = vcmp.ge.f32.partialorder %v1187, 0.0
    %vm1293 = vcmp.ge.f32.partialorder %v1061, 0.0
    %vm1294 = vcmp.ge.f32.partialorder %v1190, 0.0
    %vm1295 = vcmp.ge.f32.partialorder %v1063, 0.0
    %vm1296 = vcmp.ge.f32.partialorder %v1192, 0.0
    %vm1297 = vcmp.ge.f32.partialorder %v1066, 0.0
    %vm1298 = vcmp.ge.f32.partialorder %v1195, 0.0
    %vm1299 = vcmp.ge.f32.partialorder %v1068, 0.0
    %vm1300 = vcmp.ge.f32.partialorder %v1197, 0.0
    %vm1301 = vcmp.ge.f32.partialorder %v1071, 0.0
    %vm1302 = vcmp.ge.f32.partialorder %v1200, 0.0
    %vm1303 = vcmp.ge.f32.partialorder %v1073, 0.0
    %vm1304 = vcmp.ge.f32.partialorder %v1202, 0.0
    %vm1305 = vcmp.ge.f32.partialorder %v1076, 0.0
    %vm1306 = vcmp.ge.f32.partialorder %v1205, 0.0
    %vm1307 = vcmp.ge.f32.partialorder %v1078, 0.0
    %vm1308 = vcmp.ge.f32.partialorder %v1207, 0.0
    %vm1309 = vcmp.ge.f32.partialorder %v1081, 0.0
    %vm1310 = vcmp.ge.f32.partialorder %v1210, 0.0
    %vm1311 = vcmp.ge.f32.partialorder %v1083, 0.0
    %vm1312 = vcmp.ge.f32.partialorder %v1212, 0.0
    %vm1313 = vcmp.ge.f32.partialorder %v1086, 0.0
    %vm1314 = vcmp.ge.f32.partialorder %v1215, 0.0
    %vm1315 = vcmp.ge.f32.partialorder %v1088, 0.0
    %vm1316 = vcmp.ge.f32.partialorder %v1217, 0.0
    %vm1317 = vcmp.ge.f32.partialorder %v1091, 0.0
    %vm1318 = vcmp.ge.f32.partialorder %v1220, 0.0
    %vm1319 = vcmp.ge.f32.partialorder %v1093, 0.0
    %vm1320 = vcmp.ge.f32.partialorder %v1222, 0.0
    %vm1321 = vcmp.ge.f32.partialorder %v1096, 0.0
    %vm1322 = vcmp.ge.f32.partialorder %v1225, 0.0
    %vm1323 = vcmp.ge.f32.partialorder %v1098, 0.0
    %vm1324 = vcmp.ge.f32.partialorder %v1227, 0.0
    %v1325 = vmul.f32 %v981, 0.01
    %v1326 = vmul.f32 %v1110, 0.01
    %v1327 = vmul.f32 %v983, 0.01
    %v1328 = vmul.f32 %v1112, 0.01
    %v1329 = vmul.f32 %v986, 0.01
    %v1330 = vmul.f32 %v1115, 0.01
    %v1331 = vmul.f32 %v988, 0.01
    %v1332 = vmul.f32 %v1117, 0.01
    %v1333 = vmul.f32 %v991, 0.01
    %v1334 = vmul.f32 %v1120, 0.01
    %v1335 = vmul.f32 %v993, 0.01
    %v1336 = vmul.f32 %v1122, 0.01
    %v1337 = vmul.f32 %v996, 0.01
    %v1338 = vmul.f32 %v1125, 0.01
    %v1339 = vmul.f32 %v998, 0.01
    %v1340 = vmul.f32 %v1127, 0.01
    %v1341 = vmul.f32 %v1001, 0.01
    %v1342 = vmul.f32 %v1130, 0.01
    %v1343 = vmul.f32 %v1003, 0.01
    %v1344 = vmul.f32 %v1132, 0.01
    %v1345 = vmul.f32 %v1006, 0.01
    %v1346 = vmul.f32 %v1135, 0.01
    %v1347 = vmul.f32 %v1008, 0.01
    %v1348 = vmul.f32 %v1137, 0.01
    %v1349 = vmul.f32 %v1011, 0.01
    %v1350 = vmul.f32 %v1140, 0.01
    %v1351 = vmul.f32 %v1013, 0.01
    %v1352 = vmul.f32 %v1142, 0.01
    %v1353 = vmul.f32 %v1016, 0.01
    %v1354 = vmul.f32 %v1145, 0.01
    %v1355 = vmul.f32 %v1018, 0.01
    %v1356 = vmul.f32 %v1147, 0.01
    %v1357 = vmul.f32 %v1021, 0.01
    %v1358 = vmul.f32 %v1150, 0.01
    %v1359 = vmul.f32 %v1023, 0.01
    %v1360 = vmul.f32 %v1152, 0.01
    %v1361 = vmul.f32 %v1026, 0.01
    %v1362 = vmul.f32 %v1155, 0.01
    %v1363 = vmul.f32 %v1028, 0.01
    %v1364 = vmul.f32 %v1157, 0.01
    %v1365 = vmul.f32 %v1031, 0.01
    %v1366 = vmul.f32 %v1160, 0.01
    %v1367 = vmul.f32 %v1033, 0.01
    %v1368 = vmul.f32 %v1162, 0.01
    %v1369 = vmul.f32 %v1036, 0.01
    %v1370 = vmul.f32 %v1165, 0.01
    %v1371 = vmul.f32 %v1038, 0.01
    %v1372 = vmul.f32 %v1167, 0.01
    %v1373 = vmul.f32 %v1041, 0.01
    %v1374 = vmul.f32 %v1170, 0.01
    %v1375 = vmul.f32 %v1043, 0.01
    %v1376 = vmul.f32 %v1172, 0.01
    %v1377 = vmul.f32 %v1046, 0.01
    %v1378 = vmul.f32 %v1175, 0.01
    %v1379 = vmul.f32 %v1048, 0.01
    %v1380 = vmul.f32 %v1177, 0.01
    %v1381 = vmul.f32 %v1051, 0.01
    %v1382 = vmul.f32 %v1180, 0.01
    %v1383 = vmul.f32 %v1053, 0.01
    %v1384 = vmul.f32 %v1182, 0.01
    %v1385 = vmul.f32 %v1056, 0.01
    %v1386 = vmul.f32 %v1185, 0.01
    %v1387 = vmul.f32 %v1058, 0.01
    %v1388 = vmul.f32 %v1187, 0.01
    %v1389 = vmul.f32 %v1061, 0.01
    %v1390 = vmul.f32 %v1190, 0.01
    %v1391 = vmul.f32 %v1063, 0.01
    %v1392 = vmul.f32 %v1192, 0.01
    %v1393 = vmul.f32 %v1066, 0.01
    %v1394 = vmul.f32 %v1195, 0.01
    %v1395 = vmul.f32 %v1068, 0.01
    %v1396 = vmul.f32 %v1197, 0.01
    %v1397 = vmul.f32 %v1071, 0.01
    %v1398 = vmul.f32 %v1200, 0.01
    %v1399 = vmul.f32 %v1073, 0.01
    %v1400 = vmul.f32 %v1202, 0.01
    %v1401 = vmul.f32 %v1076, 0.01
    %v1402 = vmul.f32 %v1205, 0.01
    %v1403 = vmul.f32 %v1078, 0.01
    %v1404 = vmul.f32 %v1207, 0.01
    %v1405 = vmul.f32 %v1081, 0.01
    %v1406 = vmul.f32 %v1210, 0.01
    %v1407 = vmul.f32 %v1083, 0.01
    %v1408 = vmul.f32 %v1212, 0.01
    %v1409 = vmul.f32 %v1086, 0.01
    %v1410 = vmul.f32 %v1215, 0.01
    %v1411 = vmul.f32 %v1088, 0.01
    %v1412 = vmul.f32 %v1217, 0.01
    %v1413 = vmul.f32 %v1091, 0.01
    %v1414 = vmul.f32 %v1220, 0.01
    %v1415 = vmul.f32 %v1093, 0.01
    %v1416 = vmul.f32 %v1222, 0.01
    %v1417 = vmul.f32 %v1096, 0.01
    %v1418 = vmul.f32 %v1225, 0.01
    %v1419 = vmul.f32 %v1098, 0.01
    %v1420 = vmul.f32 %v1227, 0.01
    %v1421 = vsel %vm1229, %v981, %v1325
    %v1422 = vsel %vm1230, %v1110, %v1326
    %v1423 = vsel %vm1231, %v983, %v1327
    %v1424 = vsel %vm1232, %v1112, %v1328
    %v1425 = vsel %vm1233, %v986, %v1329
    %v1426 = vsel %vm1234, %v1115, %v1330
    %v1427 = vsel %vm1235, %v988, %v1331
    %v1428 = vsel %vm1236, %v1117, %v1332
    %v1429 = vsel %vm1237, %v991, %v1333
    %v1430 = vsel %vm1238, %v1120, %v1334
    %v1431 = vsel %vm1239, %v993, %v1335
    %v1432 = vsel %vm1240, %v1122, %v1336
    %v1433 = vsel %vm1241, %v996, %v1337
    %v1434 = vsel %vm1242, %v1125, %v1338
    %v1435 = vsel %vm1243, %v998, %v1339
    %v1436 = vsel %vm1244, %v1127, %v1340
    %v1437 = vsel %vm1245, %v1001, %v1341
    %v1438 = vsel %vm1246, %v1130, %v1342
    %v1439 = vsel %vm1247, %v1003, %v1343
    %v1440 = vsel %vm1248, %v1132, %v1344
    %v1441 = vsel %vm1249, %v1006, %v1345
    %v1442 = vsel %vm1250, %v1135, %v1346
    %v1443 = vsel %vm1251, %v1008, %v1347
    %v1444 = vsel %vm1252, %v1137, %v1348
    %v1445 = vsel %vm1253, %v1011, %v1349
    %v1446 = vsel %vm1254, %v1140, %v1350
    %v1447 = vsel %vm1255, %v1013, %v1351
    %v1448 = vsel %vm1256, %v1142, %v1352
    %v1449 = vsel %vm1257, %v1016, %v1353
    %v1450 = vsel %vm1258, %v1145, %v1354
    %v1451 = vsel %vm1259, %v1018, %v1355
    %v1452 = vsel %vm1260, %v1147, %v1356
    %v1453 = vsel %vm1261, %v1021, %v1357
    %v1454 = vsel %vm1262, %v1150, %v1358
    %v1455 = vsel %vm1263, %v1023, %v1359
    %v1456 = vsel %vm1264, %v1152, %v1360
    %v1457 = vsel %vm1265, %v1026, %v1361
    %v1458 = vsel %vm1266, %v1155, %v1362
    %v1459 = vsel %vm1267, %v1028, %v1363
    %v1460 = vsel %vm1268, %v1157, %v1364
    %v1461 = vsel %vm1269, %v1031, %v1365
    %v1462 = vsel %vm1270, %v1160, %v1366
    %v1463 = vsel %vm1271, %v1033, %v1367
    %v1464 = vsel %vm1272, %v1162, %v1368
    %v1465 = vsel %vm1273, %v1036, %v1369
    %v1466 = vsel %vm1274, %v1165, %v1370
    %v1467 = vsel %vm1275, %v1038, %v1371
    %v1468 = vsel %vm1276, %v1167, %v1372
    %v1469 = vsel %vm1277, %v1041, %v1373
    %v1470 = vsel %vm1278, %v1170, %v1374
    %v1471 = vsel %vm1279, %v1043, %v1375
    %v1472 = vsel %vm1280, %v1172, %v1376
    %v1473 = vsel %vm1281, %v1046, %v1377
    %v1474 = vsel %vm1282, %v1175, %v1378
    %v1475 = vsel %vm1283, %v1048, %v1379
    %v1476 = vsel %vm1284, %v1177, %v1380
    %v1477 = vsel %vm1285, %v1051, %v1381
    %v1478 = vsel %vm1286, %v1180, %v1382
    %v1479 = vsel %vm1287, %v1053, %v1383
    %v1480 = vsel %vm1288, %v1182, %v1384
    %v1481 = vsel %vm1289, %v1056, %v1385
    %v1482 = vsel %vm1290, %v1185, %v1386
    %v1483 = vsel %vm1291, %v1058, %v1387
    %v1484 = vsel %vm1292, %v1187, %v1388
    %v1485 = vsel %vm1293, %v1061, %v1389
    %v1486 = vsel %vm1294, %v1190, %v1390
    %v1487 = vsel %vm1295, %v1063, %v1391
    %v1488 = vsel %vm1296, %v1192, %v1392
    %v1489 = vsel %vm1297, %v1066, %v1393
    %v1490 = vsel %vm1298, %v1195, %v1394
    %v1491 = vsel %vm1299, %v1068, %v1395
    %v1492 = vsel %vm1300, %v1197, %v1396
    %v1493 = vsel %vm1301, %v1071, %v1397
    %v1494 = vsel %vm1302, %v1200, %v1398
    %v1495 = vsel %vm1303, %v1073, %v1399
    %v1496 = vsel %vm1304, %v1202, %v1400
    %v1497 = vsel %vm1305, %v1076, %v1401
    %v1498 = vsel %vm1306, %v1205, %v1402
    %v1499 = vsel %vm1307, %v1078, %v1403
    %v1500 = vsel %vm1308, %v1207, %v1404
    %v1501 = vsel %vm1309, %v1081, %v1405
    %v1502 = vsel %vm1310, %v1210, %v1406
    %v1503 = vsel %vm1311, %v1083, %v1407
    %v1504 = vsel %vm1312, %v1212, %v1408
    %v1505 = vsel %vm1313, %v1086, %v1409
    %v1506 = vsel %vm1314, %v1215, %v1410
    %v1507 = vsel %vm1315, %v1088, %v1411
    %v1508 = vsel %vm1316, %v1217, %v1412
    %v1509 = vsel %vm1317, %v1091, %v1413
    %v1510 = vsel %vm1318, %v1220, %v1414
    %v1511 = vsel %vm1319, %v1093, %v1415
    %v1512 = vsel %vm1320, %v1222, %v1416
    %v1513 = vsel %vm1321, %v1096, %v1417
    %v1514 = vsel %vm1322, %v1225, %v1418
    %v1515 = vsel %vm1323, %v1098, %v1419
    %v1516 = vsel %vm1324, %v1227, %v1420
    %v1517 = vpack.c.bf16 %v1423, %v1421
    %v1518 = vpack.c.bf16 %v1424, %v1422
    %v1519 = vpack.c.bf16 %v1427, %v1425
    %v1520 = vpack.c.bf16 %v1428, %v1426
    %v1521 = vpack.c.bf16 %v1431, %v1429
    %v1522 = vpack.c.bf16 %v1432, %v1430
    %v1523 = vpack.c.bf16 %v1435, %v1433
    %v1524 = vpack.c.bf16 %v1436, %v1434
    %v1525 = vpack.c.bf16 %v1439, %v1437
    %v1526 = vpack.c.bf16 %v1440, %v1438
    %v1527 = vpack.c.bf16 %v1443, %v1441
    %v1528 = vpack.c.bf16 %v1444, %v1442
    %v1529 = vpack.c.bf16 %v1447, %v1445
    %v1530 = vpack.c.bf16 %v1448, %v1446
    %v1531 = vpack.c.bf16 %v1451, %v1449
    %v1532 = vpack.c.bf16 %v1452, %v1450
    %v1533 = vpack.c.bf16 %v1455, %v1453
    %v1534 = vpack.c.bf16 %v1456, %v1454
    %v1535 = vpack.c.bf16 %v1459, %v1457
    %v1536 = vpack.c.bf16 %v1460, %v1458
    %v1537 = vpack.c.bf16 %v1463, %v1461
    %v1538 = vpack.c.bf16 %v1464, %v1462
    %v1539 = vpack.c.bf16 %v1467, %v1465
    %v1540 = vpack.c.bf16 %v1468, %v1466
    %v1541 = vpack.c.bf16 %v1471, %v1469
    %v1542 = vpack.c.bf16 %v1472, %v1470
    %v1543 = vpack.c.bf16 %v1475, %v1473
    %v1544 = vpack.c.bf16 %v1476, %v1474
    %v1545 = vpack.c.bf16 %v1479, %v1477
    %v1546 = vpack.c.bf16 %v1480, %v1478
    %v1547 = vpack.c.bf16 %v1483, %v1481
    %v1548 = vpack.c.bf16 %v1484, %v1482
    %v1549 = vpack.c.bf16 %v1487, %v1485
    %v1550 = vpack.c.bf16 %v1488, %v1486
    %v1551 = vpack.c.bf16 %v1491, %v1489
    %v1552 = vpack.c.bf16 %v1492, %v1490
    %v1553 = vpack.c.bf16 %v1495, %v1493
    %v1554 = vpack.c.bf16 %v1496, %v1494
    %v1555 = vpack.c.bf16 %v1499, %v1497
    %v1556 = vpack.c.bf16 %v1500, %v1498
    %v1557 = vpack.c.bf16 %v1503, %v1501
    %v1558 = vpack.c.bf16 %v1504, %v1502
    %v1559 = vpack.c.bf16 %v1507, %v1505
    %v1560 = vpack.c.bf16 %v1508, %v1506
    %v1561 = vpack.c.bf16 %v1511, %v1509
    %v1562 = vpack.c.bf16 %v1512, %v1510
    %v1563 = vpack.c.bf16 %v1515, %v1513
    %v1564 = vpack.c.bf16 %v1516, %v1514
    %v1565 = vld [vmem:[#allocation6] sm:$0xff]
    %v1566 = vld [vmem:[#allocation6 + $0x8] sm:$0xff]
    %v1567 = vld [vmem:[#allocation6 + $0x10] sm:$0xff]
    %v1568 = vld [vmem:[#allocation6 + $0x18] sm:$0xff]
    %v1569 = vld [vmem:[#allocation6 + $0x20] sm:$0xff]
    %v1570 = vld [vmem:[#allocation6 + $0x28] sm:$0xff]
    %v1571 = vld [vmem:[#allocation6 + $0x30] sm:$0xff]
    %v1572 = vld [vmem:[#allocation6 + $0x38] sm:$0xff]
    %v1573 = vld [vmem:[#allocation6 + $0x40] sm:$0xff]
    %v1574 = vld [vmem:[#allocation6 + $0x48] sm:$0xff]
    %v1575 = vld [vmem:[#allocation6 + $0x50] sm:$0xff]
    %v1576 = vld [vmem:[#allocation6 + $0x58] sm:$0xff]
    %v1577 = vld [vmem:[#allocation6 + $0x60] sm:$0xff]
    %v1578 = vld [vmem:[#allocation6 + $0x68] sm:$0xff]
    %v1579 = vld [vmem:[#allocation6 + $0x70] sm:$0xff]
    %v1580 = vld [vmem:[#allocation6 + $0x78] sm:$0xff]
    %v1581 = vld [vmem:[#allocation6 + $0x80] sm:$0xff]
    %v1582 = vld [vmem:[#allocation6 + $0x88] sm:$0xff]
    %v1583 = vld [vmem:[#allocation6 + $0x90] sm:$0xff]
    %v1584 = vld [vmem:[#allocation6 + $0x98] sm:$0xff]
    %v1585 = vld [vmem:[#allocation6 + $0xa0] sm:$0xff]
    %v1586 = vld [vmem:[#allocation6 + $0xa8] sm:$0xff]
    %v1587 = vld [vmem:[#allocation6 + $0xb0] sm:$0xff]
    %v1588 = vld [vmem:[#allocation6 + $0xb8] sm:$0xff]
    %v1589 = vld [vmem:[#allocation6 + $0xc0] sm:$0xff]
    %v1590 = vld [vmem:[#allocation6 + $0xc8] sm:$0xff]
    %v1591 = vld [vmem:[#allocation6 + $0xd0] sm:$0xff]
    %v1592 = vld [vmem:[#allocation6 + $0xd8] sm:$0xff]
    %v1593 = vld [vmem:[#allocation6 + $0xe0] sm:$0xff]
    %v1594 = vld [vmem:[#allocation6 + $0xe8] sm:$0xff]
    %v1595 = vld [vmem:[#allocation6 + $0xf0] sm:$0xff]
    %v1596 = vld [vmem:[#allocation6 + $0xf8] sm:$0xff]
    %v1597 = vld [vmem:[#allocation6 + $0x100] sm:$0xff]
    %v1598 = vld [vmem:[#allocation6 + $0x108] sm:$0xff]
    %v1599 = vld [vmem:[#allocation6 + $0x110] sm:$0xff]
    %v1600 = vld [vmem:[#allocation6 + $0x118] sm:$0xff]
    %v1601 = vld [vmem:[#allocation6 + $0x120] sm:$0xff]
    %v1602 = vld [vmem:[#allocation6 + $0x128] sm:$0xff]
    %v1603 = vld [vmem:[#allocation6 + $0x130] sm:$0xff]
    %v1604 = vld [vmem:[#allocation6 + $0x138] sm:$0xff]
    %v1605 = vld [vmem:[#allocation6 + $0x140] sm:$0xff]
    %v1606 = vld [vmem:[#allocation6 + $0x148] sm:$0xff]
    %v1607 = vld [vmem:[#allocation6 + $0x150] sm:$0xff]
    %v1608 = vld [vmem:[#allocation6 + $0x158] sm:$0xff]
    %v1609 = vld [vmem:[#allocation6 + $0x160] sm:$0xff]
    %v1610 = vld [vmem:[#allocation6 + $0x168] sm:$0xff]
    %v1611 = vld [vmem:[#allocation6 + $0x170] sm:$0xff]
    %v1612 = vld [vmem:[#allocation6 + $0x178] sm:$0xff]
    %v1613 = vld [vmem:[#allocation6 + $0x180] sm:$0xff]
    %v1614 = vld [vmem:[#allocation6 + $0x188] sm:$0xff]
    %v1615 = vld [vmem:[#allocation6 + $0x190] sm:$0xff]
    %v1616 = vld [vmem:[#allocation6 + $0x198] sm:$0xff]
    %v1617 = vld [vmem:[#allocation6 + $0x1a0] sm:$0xff]
    %v1618 = vld [vmem:[#allocation6 + $0x1a8] sm:$0xff]
    %v1619 = vld [vmem:[#allocation6 + $0x1b0] sm:$0xff]
    %v1620 = vld [vmem:[#allocation6 + $0x1b8] sm:$0xff]
    %v1621 = vld [vmem:[#allocation6 + $0x1c0] sm:$0xff]
    %v1622 = vld [vmem:[#allocation6 + $0x1c8] sm:$0xff]
    %v1623 = vld [vmem:[#allocation6 + $0x1d0] sm:$0xff]
    %v1624 = vld [vmem:[#allocation6 + $0x1d8] sm:$0xff]
    %v1625 = vld [vmem:[#allocation6 + $0x1e0] sm:$0xff]
    %v1626 = vld [vmem:[#allocation6 + $0x1e8] sm:$0xff]
    %v1627 = vld [vmem:[#allocation6 + $0x1f0] sm:$0xff]
    %v1628 = vld [vmem:[#allocation6 + $0x1f8] sm:$0xff]
    %v1629 = vld [vmem:[%s6] sm:$0xf]
    %v1631 = vperm.slane %v1629, 0
    %v1632 = vperm.slane %v1629, 1
    %v1633 = vperm.slane %v1629, 2
    %v1634 = vperm.slane %v1629, 3
    %v1703 = vunpack.c.l.b16 %v1565
    %v1704 = vunpack.c.h.b16 %v1565
    %v1705 = vunpack.c.l.b16 %v1566
    %v1706 = vunpack.c.h.b16 %v1566
    %v1707 = vunpack.c.l.b16 %v1567
    %v1708 = vunpack.c.h.b16 %v1567
    %v1709 = vunpack.c.l.b16 %v1568
    %v1710 = vunpack.c.h.b16 %v1568
    %v1711 = vunpack.c.l.b16 %v1569
    %v1712 = vunpack.c.h.b16 %v1569
    %v1713 = vunpack.c.l.b16 %v1570
    %v1714 = vunpack.c.h.b16 %v1570
    %v1715 = vunpack.c.l.b16 %v1571
    %v1716 = vunpack.c.h.b16 %v1571
    %v1717 = vunpack.c.l.b16 %v1572
    %v1718 = vunpack.c.h.b16 %v1572
    %v1719 = vunpack.c.l.b16 %v1573
    %v1720 = vunpack.c.h.b16 %v1573
    %v1721 = vunpack.c.l.b16 %v1574
    %v1722 = vunpack.c.h.b16 %v1574
    %v1723 = vunpack.c.l.b16 %v1575
    %v1724 = vunpack.c.h.b16 %v1575
    %v1725 = vunpack.c.l.b16 %v1576
    %v1726 = vunpack.c.h.b16 %v1576
    %v1727 = vunpack.c.l.b16 %v1577
    %v1728 = vunpack.c.h.b16 %v1577
    %v1729 = vunpack.c.l.b16 %v1578
    %v1730 = vunpack.c.h.b16 %v1578
    %v1731 = vunpack.c.l.b16 %v1579
    %v1732 = vunpack.c.h.b16 %v1579
    %v1733 = vunpack.c.l.b16 %v1580
    %v1734 = vunpack.c.h.b16 %v1580
    %v1735 = vunpack.c.l.b16 %v1581
    %v1736 = vunpack.c.h.b16 %v1581
    %v1737 = vunpack.c.l.b16 %v1582
    %v1738 = vunpack.c.h.b16 %v1582
    %v1739 = vunpack.c.l.b16 %v1583
    %v1740 = vunpack.c.h.b16 %v1583
    %v1741 = vunpack.c.l.b16 %v1584
    %v1742 = vunpack.c.h.b16 %v1584
    %v1743 = vunpack.c.l.b16 %v1585
    %v1744 = vunpack.c.h.b16 %v1585
    %v1745 = vunpack.c.l.b16 %v1586
    %v1746 = vunpack.c.h.b16 %v1586
    %v1747 = vunpack.c.l.b16 %v1587
    %v1748 = vunpack.c.h.b16 %v1587
    %v1749 = vunpack.c.l.b16 %v1588
    %v1750 = vunpack.c.h.b16 %v1588
    %v1751 = vunpack.c.l.b16 %v1589
    %v1752 = vunpack.c.h.b16 %v1589
    %v1753 = vunpack.c.l.b16 %v1590
    %v1754 = vunpack.c.h.b16 %v1590
    %v1755 = vunpack.c.l.b16 %v1591
    %v1756 = vunpack.c.h.b16 %v1591
    %v1757 = vunpack.c.l.b16 %v1592
    %v1758 = vunpack.c.h.b16 %v1592
    %v1759 = vunpack.c.l.b16 %v1593
    %v1760 = vunpack.c.h.b16 %v1593
    %v1761 = vunpack.c.l.b16 %v1594
    %v1762 = vunpack.c.h.b16 %v1594
    %v1763 = vunpack.c.l.b16 %v1595
    %v1764 = vunpack.c.h.b16 %v1595
    %v1765 = vunpack.c.l.b16 %v1596
    %v1766 = vunpack.c.h.b16 %v1596
    %v1767 = vunpack.c.l.b16 %v1597
    %v1768 = vunpack.c.h.b16 %v1597
    %v1769 = vunpack.c.l.b16 %v1598
    %v1770 = vunpack.c.h.b16 %v1598
    %v1771 = vunpack.c.l.b16 %v1599
    %v1772 = vunpack.c.h.b16 %v1599
    %v1773 = vunpack.c.l.b16 %v1600
    %v1774 = vunpack.c.h.b16 %v1600
    %v1775 = vunpack.c.l.b16 %v1601
    %v1776 = vunpack.c.h.b16 %v1601
    %v1777 = vunpack.c.l.b16 %v1602
    %v1778 = vunpack.c.h.b16 %v1602
    %v1779 = vunpack.c.l.b16 %v1603
    %v1780 = vunpack.c.h.b16 %v1603
    %v1781 = vunpack.c.l.b16 %v1604
    %v1782 = vunpack.c.h.b16 %v1604
    %v1783 = vunpack.c.l.b16 %v1605
    %v1784 = vunpack.c.h.b16 %v1605
    %v1785 = vunpack.c.l.b16 %v1606
    %v1786 = vunpack.c.h.b16 %v1606
    %v1787 = vunpack.c.l.b16 %v1607
    %v1788 = vunpack.c.h.b16 %v1607
    %v1789 = vunpack.c.l.b16 %v1608
    %v1790 = vunpack.c.h.b16 %v1608
    %v1791 = vunpack.c.l.b16 %v1609
    %v1792 = vunpack.c.h.b16 %v1609
    %v1793 = vunpack.c.l.b16 %v1610
    %v1794 = vunpack.c.h.b16 %v1610
    %v1795 = vunpack.c.l.b16 %v1611
    %v1796 = vunpack.c.h.b16 %v1611
    %v1797 = vunpack.c.l.b16 %v1612
    %v1798 = vunpack.c.h.b16 %v1612
    %v1799 = vunpack.c.l.b16 %v1613
    %v1800 = vunpack.c.h.b16 %v1613
    %v1801 = vunpack.c.l.b16 %v1614
    %v1802 = vunpack.c.h.b16 %v1614
    %v1803 = vunpack.c.l.b16 %v1615
    %v1804 = vunpack.c.h.b16 %v1615
    %v1805 = vunpack.c.l.b16 %v1616
    %v1806 = vunpack.c.h.b16 %v1616
    %v1807 = vunpack.c.l.b16 %v1617
    %v1808 = vunpack.c.h.b16 %v1617
    %v1809 = vunpack.c.l.b16 %v1618
    %v1810 = vunpack.c.h.b16 %v1618
    %v1811 = vunpack.c.l.b16 %v1619
    %v1812 = vunpack.c.h.b16 %v1619
    %v1813 = vunpack.c.l.b16 %v1620
    %v1814 = vunpack.c.h.b16 %v1620
    %v1815 = vunpack.c.l.b16 %v1621
    %v1816 = vunpack.c.h.b16 %v1621
    %v1817 = vunpack.c.l.b16 %v1622
    %v1818 = vunpack.c.h.b16 %v1622
    %v1819 = vunpack.c.l.b16 %v1623
    %v1820 = vunpack.c.h.b16 %v1623
    %v1821 = vunpack.c.l.b16 %v1624
    %v1822 = vunpack.c.h.b16 %v1624
    %v1823 = vunpack.c.l.b16 %v1625
    %v1824 = vunpack.c.h.b16 %v1625
    %v1825 = vunpack.c.l.b16 %v1626
    %v1826 = vunpack.c.h.b16 %v1626
    %v1827 = vunpack.c.l.b16 %v1627
    %v1828 = vunpack.c.h.b16 %v1627
    %v1829 = vunpack.c.l.b16 %v1628
    %v1830 = vunpack.c.h.b16 %v1628
    %v1831 = vpack.c.b16 %v1707, %v1703
    %v1832 = vpack.c.b16 %v1708, %v1704
    %v1833 = vpack.c.b16 %v1709, %v1705
    %v1834 = vpack.c.b16 %v1710, %v1706
    %v1835 = vpack.c.b16 %v1715, %v1711
    %v1836 = vpack.c.b16 %v1716, %v1712
    %v1837 = vpack.c.b16 %v1717, %v1713
    %v1838 = vpack.c.b16 %v1718, %v1714
    %v1839 = vpack.c.b16 %v1723, %v1719
    %v1840 = vpack.c.b16 %v1724, %v1720
    %v1841 = vpack.c.b16 %v1725, %v1721
    %v1842 = vpack.c.b16 %v1726, %v1722
    %v1843 = vpack.c.b16 %v1731, %v1727
    %v1844 = vpack.c.b16 %v1732, %v1728
    %v1845 = vpack.c.b16 %v1733, %v1729
    %v1846 = vpack.c.b16 %v1734, %v1730
    %v1847 = vpack.c.b16 %v1739, %v1735
    %v1848 = vpack.c.b16 %v1740, %v1736
    %v1849 = vpack.c.b16 %v1741, %v1737
    %v1850 = vpack.c.b16 %v1742, %v1738
    %v1851 = vpack.c.b16 %v1747, %v1743
    %v1852 = vpack.c.b16 %v1748, %v1744
    %v1853 = vpack.c.b16 %v1749, %v1745
    %v1854 = vpack.c.b16 %v1750, %v1746
    %v1855 = vpack.c.b16 %v1755, %v1751
    %v1856 = vpack.c.b16 %v1756, %v1752
    %v1857 = vpack.c.b16 %v1757, %v1753
    %v1858 = vpack.c.b16 %v1758, %v1754
    %v1859 = vpack.c.b16 %v1763, %v1759
    %v1860 = vpack.c.b16 %v1764, %v1760
    %v1861 = vpack.c.b16 %v1765, %v1761
    %v1862 = vpack.c.b16 %v1766, %v1762
    %v1863 = vpack.c.b16 %v1771, %v1767
    %v1864 = vpack.c.b16 %v1772, %v1768
    %v1865 = vpack.c.b16 %v1773, %v1769
    %v1866 = vpack.c.b16 %v1774, %v1770
    %v1867 = vpack.c.b16 %v1779, %v1775
    %v1868 = vpack.c.b16 %v1780, %v1776
    %v1869 = vpack.c.b16 %v1781, %v1777
    %v1870 = vpack.c.b16 %v1782, %v1778
    %v1871 = vpack.c.b16 %v1787, %v1783
    %v1872 = vpack.c.b16 %v1788, %v1784
    %v1873 = vpack.c.b16 %v1789, %v1785
    %v1874 = vpack.c.b16 %v1790, %v1786
    %v1875 = vpack.c.b16 %v1795, %v1791
    %v1876 = vpack.c.b16 %v1796, %v1792
    %v1877 = vpack.c.b16 %v1797, %v1793
    %v1878 = vpack.c.b16 %v1798, %v1794
    %v1879 = vpack.c.b16 %v1803, %v1799
    %v1880 = vpack.c.b16 %v1804, %v1800
    %v1881 = vpack.c.b16 %v1805, %v1801
    %v1882 = vpack.c.b16 %v1806, %v1802
    %v1883 = vpack.c.b16 %v1811, %v1807
    %v1884 = vpack.c.b16 %v1812, %v1808
    %v1885 = vpack.c.b16 %v1813, %v1809
    %v1886 = vpack.c.b16 %v1814, %v1810
    %v1887 = vpack.c.b16 %v1819, %v1815
    %v1888 = vpack.c.b16 %v1820, %v1816
    %v1889 = vpack.c.b16 %v1821, %v1817
    %v1890 = vpack.c.b16 %v1822, %v1818
    %v1891 = vpack.c.b16 %v1827, %v1823
    %v1892 = vpack.c.b16 %v1828, %v1824
    %v1893 = vpack.c.b16 %v1829, %v1825
    %v1894 = vpack.c.b16 %v1830, %v1826
    %1959 = vmatpush.bf16.msra.mxu0 %v1859
    %1960 = vmatpush.bf16.msra.mxu0 %v1855
    %1961 = vmatpush.bf16.msra.mxu0 %v1851
    %1962 = vmatpush.bf16.msra.mxu0 %v1847
    %1963 = vmatpush.bf16.msra.mxu0 %v1843
    %1964 = vmatpush.bf16.msra.mxu0 %v1839
    %1965 = vmatpush.bf16.msra.mxu0 %v1835
    %1966 = vmatpush.bf16.msra.mxu0 %v1831
    %1967 = vmatmul.bf16.gmra.mxu0 %v1517
    %v1968 = vpop.f32.mrf.mxu0
    %v1969 = vadd.f32 %v1631, %v1968
    %v1970 = vpop.f32.mrf.mxu0
    %v1971 = vadd.f32 %v1631, %v1970
    %1972 = vmatmul.bf16.gmra.mxu0 %v1519
    %v1973 = vpop.f32.mrf.mxu0
    %v1974 = vadd.f32 %v1631, %v1973
    %v1975 = vpop.f32.mrf.mxu0
    %v1976 = vadd.f32 %v1631, %v1975
    %1977 = vmatmul.bf16.gmra.mxu0 %v1521
    %v1978 = vpop.f32.mrf.mxu0
    %v1979 = vadd.f32 %v1631, %v1978
    %v1980 = vpop.f32.mrf.mxu0
    %v1981 = vadd.f32 %v1631, %v1980
    %1982 = vmatmul.bf16.gmra.mxu0 %v1523
    %v1983 = vpop.f32.mrf.mxu0
    %v1984 = vadd.f32 %v1631, %v1983
    %v1985 = vpop.f32.mrf.mxu0
    %v1986 = vadd.f32 %v1631, %v1985
    %1987 = vmatmul.bf16.gmra.mxu0 %v1525
    %v1988 = vpop.f32.mrf.mxu0
    %v1989 = vadd.f32 %v1631, %v1988
    %v1990 = vpop.f32.mrf.mxu0
    %v1991 = vadd.f32 %v1631, %v1990
    %1992 = vmatmul.bf16.gmra.mxu0 %v1527
    %v1993 = vpop.f32.mrf.mxu0
    %v1994 = vadd.f32 %v1631, %v1993
    %v1995 = vpop.f32.mrf.mxu0
    %v1996 = vadd.f32 %v1631, %v1995
    %1997 = vmatmul.bf16.gmra.mxu0 %v1529
    %v1998 = vpop.f32.mrf.mxu0
    %v1999 = vadd.f32 %v1631, %v1998
    %v2000 = vpop.f32.mrf.mxu0
    %v2001 = vadd.f32 %v1631, %v2000
    %2002 = vmatmul.bf16.gmra.mxu0 %v1531
    %v2003 = vpop.f32.mrf.mxu0
    %v2004 = vadd.f32 %v1631, %v2003
    %v2005 = vpop.f32.mrf.mxu0
    %v2006 = vadd.f32 %v1631, %v2005
    %2007 = vmatmul.bf16.gmra.mxu0 %v1533
    %v2008 = vpop.f32.mrf.mxu0
    %v2009 = vadd.f32 %v1631, %v2008
    %v2010 = vpop.f32.mrf.mxu0
    %v2011 = vadd.f32 %v1631, %v2010
    %2012 = vmatmul.bf16.gmra.mxu0 %v1535
    %v2013 = vpop.f32.mrf.mxu0
    %v2014 = vadd.f32 %v1631, %v2013
    %v2015 = vpop.f32.mrf.mxu0
    %v2016 = vadd.f32 %v1631, %v2015
    %2017 = vmatmul.bf16.gmra.mxu0 %v1537
    %v2018 = vpop.f32.mrf.mxu0
    %v2019 = vadd.f32 %v1631, %v2018
    %v2020 = vpop.f32.mrf.mxu0
    %v2021 = vadd.f32 %v1631, %v2020
    %2022 = vmatmul.bf16.gmra.mxu0 %v1539
    %v2023 = vpop.f32.mrf.mxu0
    %v2024 = vadd.f32 %v1631, %v2023
    %v2025 = vpop.f32.mrf.mxu0
    %v2026 = vadd.f32 %v1631, %v2025
    %2027 = vmatmul.bf16.gmra.mxu0 %v1541
    %v2028 = vpop.f32.mrf.mxu0
    %v2029 = vadd.f32 %v1631, %v2028
    %v2030 = vpop.f32.mrf.mxu0
    %v2031 = vadd.f32 %v1631, %v2030
    %2032 = vmatmul.bf16.gmra.mxu0 %v1543
    %v2033 = vpop.f32.mrf.mxu0
    %v2034 = vadd.f32 %v1631, %v2033
    %v2035 = vpop.f32.mrf.mxu0
    %v2036 = vadd.f32 %v1631, %v2035
    %2037 = vmatmul.bf16.gmra.mxu0 %v1545
    %v2038 = vpop.f32.mrf.mxu0
    %v2039 = vadd.f32 %v1631, %v2038
    %v2040 = vpop.f32.mrf.mxu0
    %v2041 = vadd.f32 %v1631, %v2040
    %2042 = vmatmul.bf16.gmra.mxu0 %v1547
    %v2043 = vpop.f32.mrf.mxu0
    %v2044 = vadd.f32 %v1631, %v2043
    %v2045 = vpop.f32.mrf.mxu0
    %v2046 = vadd.f32 %v1631, %v2045
    %2047 = vmatmul.bf16.gmra.mxu0 %v1549
    %v2048 = vpop.f32.mrf.mxu0
    %v2049 = vadd.f32 %v1631, %v2048
    %v2050 = vpop.f32.mrf.mxu0
    %v2051 = vadd.f32 %v1631, %v2050
    %2052 = vmatmul.bf16.gmra.mxu0 %v1551
    %v2053 = vpop.f32.mrf.mxu0
    %v2054 = vadd.f32 %v1631, %v2053
    %v2055 = vpop.f32.mrf.mxu0
    %v2056 = vadd.f32 %v1631, %v2055
    %2057 = vmatmul.bf16.gmra.mxu0 %v1553
    %v2058 = vpop.f32.mrf.mxu0
    %v2059 = vadd.f32 %v1631, %v2058
    %v2060 = vpop.f32.mrf.mxu0
    %v2061 = vadd.f32 %v1631, %v2060
    %2062 = vmatmul.bf16.gmra.mxu0 %v1555
    %v2063 = vpop.f32.mrf.mxu0
    %v2064 = vadd.f32 %v1631, %v2063
    %v2065 = vpop.f32.mrf.mxu0
    %v2066 = vadd.f32 %v1631, %v2065
    %2067 = vmatmul.bf16.gmra.mxu0 %v1557
    %v2068 = vpop.f32.mrf.mxu0
    %v2069 = vadd.f32 %v1631, %v2068
    %v2070 = vpop.f32.mrf.mxu0
    %v2071 = vadd.f32 %v1631, %v2070
    %2072 = vmatmul.bf16.gmra.mxu0 %v1559
    %v2073 = vpop.f32.mrf.mxu0
    %v2074 = vadd.f32 %v1631, %v2073
    %v2075 = vpop.f32.mrf.mxu0
    %v2076 = vadd.f32 %v1631, %v2075
    %2077 = vmatmul.bf16.gmra.mxu0 %v1561
    %v2078 = vpop.f32.mrf.mxu0
    %v2079 = vadd.f32 %v1631, %v2078
    %v2080 = vpop.f32.mrf.mxu0
    %v2081 = vadd.f32 %v1631, %v2080
    %2082 = vmatmul.bf16.gmra.mxu0 %v1563
    %v2083 = vpop.f32.mrf.mxu0
    %v2084 = vadd.f32 %v1631, %v2083
    %v2085 = vpop.f32.mrf.mxu0
    %v2086 = vadd.f32 %v1631, %v2085
    %2087 = vdwg.mxu0
    %2088 = vmatpush.bf16.msra.mxu0 %v1891
    %2089 = vmatpush.bf16.msra.mxu0 %v1887
    %2090 = vmatpush.bf16.msra.mxu0 %v1883
    %2091 = vmatpush.bf16.msra.mxu0 %v1879
    %2092 = vmatpush.bf16.msra.mxu0 %v1875
    %2093 = vmatpush.bf16.msra.mxu0 %v1871
    %2094 = vmatpush.bf16.msra.mxu0 %v1867
    %2095 = vmatpush.bf16.msra.mxu0 %v1863
    %2096 = vmatmul.bf16.gmra.mxu0 %v1518
    %v2097 = vpop.f32.mrf.mxu0
    %v2098 = vadd.f32 %v1969, %v2097
    %v2099 = vpop.f32.mrf.mxu0
    %v2100 = vadd.f32 %v1971, %v2099
    %2101 = vmatmul.bf16.gmra.mxu0 %v1520
    %v2102 = vpop.f32.mrf.mxu0
    %v2103 = vadd.f32 %v1974, %v2102
    %v2104 = vpop.f32.mrf.mxu0
    %v2105 = vadd.f32 %v1976, %v2104
    %2106 = vmatmul.bf16.gmra.mxu0 %v1522
    %v2107 = vpop.f32.mrf.mxu0
    %v2108 = vadd.f32 %v1979, %v2107
    %v2109 = vpop.f32.mrf.mxu0
    %v2110 = vadd.f32 %v1981, %v2109
    %2111 = vmatmul.bf16.gmra.mxu0 %v1524
    %v2112 = vpop.f32.mrf.mxu0
    %v2113 = vadd.f32 %v1984, %v2112
    %v2114 = vpop.f32.mrf.mxu0
    %v2115 = vadd.f32 %v1986, %v2114
    %2116 = vmatmul.bf16.gmra.mxu0 %v1526
    %v2117 = vpop.f32.mrf.mxu0
    %v2118 = vadd.f32 %v1989, %v2117
    %v2119 = vpop.f32.mrf.mxu0
    %v2120 = vadd.f32 %v1991, %v2119
    %2121 = vmatmul.bf16.gmra.mxu0 %v1528
    %v2122 = vpop.f32.mrf.mxu0
    %v2123 = vadd.f32 %v1994, %v2122
    %v2124 = vpop.f32.mrf.mxu0
    %v2125 = vadd.f32 %v1996, %v2124
    %2126 = vmatmul.bf16.gmra.mxu0 %v1530
    %v2127 = vpop.f32.mrf.mxu0
    %v2128 = vadd.f32 %v1999, %v2127
    %v2129 = vpop.f32.mrf.mxu0
    %v2130 = vadd.f32 %v2001, %v2129
    %2131 = vmatmul.bf16.gmra.mxu0 %v1532
    %v2132 = vpop.f32.mrf.mxu0
    %v2133 = vadd.f32 %v2004, %v2132
    %v2134 = vpop.f32.mrf.mxu0
    %v2135 = vadd.f32 %v2006, %v2134
    %2136 = vmatmul.bf16.gmra.mxu0 %v1534
    %v2137 = vpop.f32.mrf.mxu0
    %v2138 = vadd.f32 %v2009, %v2137
    %v2139 = vpop.f32.mrf.mxu0
    %v2140 = vadd.f32 %v2011, %v2139
    %2141 = vmatmul.bf16.gmra.mxu0 %v1536
    %v2142 = vpop.f32.mrf.mxu0
    %v2143 = vadd.f32 %v2014, %v2142
    %v2144 = vpop.f32.mrf.mxu0
    %v2145 = vadd.f32 %v2016, %v2144
    %2146 = vmatmul.bf16.gmra.mxu0 %v1538
    %v2147 = vpop.f32.mrf.mxu0
    %v2148 = vadd.f32 %v2019, %v2147
    %v2149 = vpop.f32.mrf.mxu0
    %v2150 = vadd.f32 %v2021, %v2149
    %2151 = vmatmul.bf16.gmra.mxu0 %v1540
    %v2152 = vpop.f32.mrf.mxu0
    %v2153 = vadd.f32 %v2024, %v2152
    %v2154 = vpop.f32.mrf.mxu0
    %v2155 = vadd.f32 %v2026, %v2154
    %2156 = vmatmul.bf16.gmra.mxu0 %v1542
    %v2157 = vpop.f32.mrf.mxu0
    %v2158 = vadd.f32 %v2029, %v2157
    %v2159 = vpop.f32.mrf.mxu0
    %v2160 = vadd.f32 %v2031, %v2159
    %2161 = vmatmul.bf16.gmra.mxu0 %v1544
    %v2162 = vpop.f32.mrf.mxu0
    %v2163 = vadd.f32 %v2034, %v2162
    %v2164 = vpop.f32.mrf.mxu0
    %v2165 = vadd.f32 %v2036, %v2164
    %2166 = vmatmul.bf16.gmra.mxu0 %v1546
    %v2167 = vpop.f32.mrf.mxu0
    %v2168 = vadd.f32 %v2039, %v2167
    %v2169 = vpop.f32.mrf.mxu0
    %v2170 = vadd.f32 %v2041, %v2169
    %2171 = vmatmul.bf16.gmra.mxu0 %v1548
    %v2172 = vpop.f32.mrf.mxu0
    %v2173 = vadd.f32 %v2044, %v2172
    %v2174 = vpop.f32.mrf.mxu0
    %v2175 = vadd.f32 %v2046, %v2174
    %2176 = vmatmul.bf16.gmra.mxu0 %v1550
    %v2177 = vpop.f32.mrf.mxu0
    %v2178 = vadd.f32 %v2049, %v2177
    %v2179 = vpop.f32.mrf.mxu0
    %v2180 = vadd.f32 %v2051, %v2179
    %2181 = vmatmul.bf16.gmra.mxu0 %v1552
    %v2182 = vpop.f32.mrf.mxu0
    %v2183 = vadd.f32 %v2054, %v2182
    %v2184 = vpop.f32.mrf.mxu0
    %v2185 = vadd.f32 %v2056, %v2184
    %2186 = vmatmul.bf16.gmra.mxu0 %v1554
    %v2187 = vpop.f32.mrf.mxu0
    %v2188 = vadd.f32 %v2059, %v2187
    %v2189 = vpop.f32.mrf.mxu0
    %v2190 = vadd.f32 %v2061, %v2189
    %2191 = vmatmul.bf16.gmra.mxu0 %v1556
    %v2192 = vpop.f32.mrf.mxu0
    %v2193 = vadd.f32 %v2064, %v2192
    %v2194 = vpop.f32.mrf.mxu0
    %v2195 = vadd.f32 %v2066, %v2194
    %2196 = vmatmul.bf16.gmra.mxu0 %v1558
    %v2197 = vpop.f32.mrf.mxu0
    %v2198 = vadd.f32 %v2069, %v2197
    %v2199 = vpop.f32.mrf.mxu0
    %v2200 = vadd.f32 %v2071, %v2199
    %2201 = vmatmul.bf16.gmra.mxu0 %v1560
    %v2202 = vpop.f32.mrf.mxu0
    %v2203 = vadd.f32 %v2074, %v2202
    %v2204 = vpop.f32.mrf.mxu0
    %v2205 = vadd.f32 %v2076, %v2204
    %2206 = vmatmul.bf16.gmra.mxu0 %v1562
    %v2207 = vpop.f32.mrf.mxu0
    %v2208 = vadd.f32 %v2079, %v2207
    %v2209 = vpop.f32.mrf.mxu0
    %v2210 = vadd.f32 %v2081, %v2209
    %2211 = vmatmul.bf16.gmra.mxu0 %v1564
    %v2212 = vpop.f32.mrf.mxu0
    %v2213 = vadd.f32 %v2084, %v2212
    %v2214 = vpop.f32.mrf.mxu0
    %v2215 = vadd.f32 %v2086, %v2214
    %2216 = vdwg.mxu0
    %2217 = vmatpush.bf16.msra.mxu0 %v1860
    %2218 = vmatpush.bf16.msra.mxu0 %v1856
    %2219 = vmatpush.bf16.msra.mxu0 %v1852
    %2220 = vmatpush.bf16.msra.mxu0 %v1848
    %2221 = vmatpush.bf16.msra.mxu0 %v1844
    %2222 = vmatpush.bf16.msra.mxu0 %v1840
    %2223 = vmatpush.bf16.msra.mxu0 %v1836
    %2224 = vmatpush.bf16.msra.mxu0 %v1832
    %2225 = vmatmul.bf16.gmra.mxu0 %v1517
    %v2226 = vpop.f32.mrf.mxu0
    %v2227 = vadd.f32 %v1632, %v2226
    %v2228 = vpop.f32.mrf.mxu0
    %v2229 = vadd.f32 %v1632, %v2228
    %2230 = vmatmul.bf16.gmra.mxu0 %v1519
    %v2231 = vpop.f32.mrf.mxu0
    %v2232 = vadd.f32 %v1632, %v2231
    %v2233 = vpop.f32.mrf.mxu0
    %v2234 = vadd.f32 %v1632, %v2233
    %2235 = vmatmul.bf16.gmra.mxu0 %v1521
    %v2236 = vpop.f32.mrf.mxu0
    %v2237 = vadd.f32 %v1632, %v2236
    %v2238 = vpop.f32.mrf.mxu0
    %v2239 = vadd.f32 %v1632, %v2238
    %2240 = vmatmul.bf16.gmra.mxu0 %v1523
    %v2241 = vpop.f32.mrf.mxu0
    %v2242 = vadd.f32 %v1632, %v2241
    %v2243 = vpop.f32.mrf.mxu0
    %v2244 = vadd.f32 %v1632, %v2243
    %2245 = vmatmul.bf16.gmra.mxu0 %v1525
    %v2246 = vpop.f32.mrf.mxu0
    %v2247 = vadd.f32 %v1632, %v2246
    %v2248 = vpop.f32.mrf.mxu0
    %v2249 = vadd.f32 %v1632, %v2248
    %2250 = vmatmul.bf16.gmra.mxu0 %v1527
    %v2251 = vpop.f32.mrf.mxu0
    %v2252 = vadd.f32 %v1632, %v2251
    %v2253 = vpop.f32.mrf.mxu0
    %v2254 = vadd.f32 %v1632, %v2253
    %2255 = vmatmul.bf16.gmra.mxu0 %v1529
    %v2256 = vpop.f32.mrf.mxu0
    %v2257 = vadd.f32 %v1632, %v2256
    %v2258 = vpop.f32.mrf.mxu0
    %v2259 = vadd.f32 %v1632, %v2258
    %2260 = vmatmul.bf16.gmra.mxu0 %v1531
    %v2261 = vpop.f32.mrf.mxu0
    %v2262 = vadd.f32 %v1632, %v2261
    %v2263 = vpop.f32.mrf.mxu0
    %v2264 = vadd.f32 %v1632, %v2263
    %2265 = vmatmul.bf16.gmra.mxu0 %v1533
    %v2266 = vpop.f32.mrf.mxu0
    %v2267 = vadd.f32 %v1632, %v2266
    %v2268 = vpop.f32.mrf.mxu0
    %v2269 = vadd.f32 %v1632, %v2268
    %2270 = vmatmul.bf16.gmra.mxu0 %v1535
    %v2271 = vpop.f32.mrf.mxu0
    %v2272 = vadd.f32 %v1632, %v2271
    %v2273 = vpop.f32.mrf.mxu0
    %v2274 = vadd.f32 %v1632, %v2273
    %2275 = vmatmul.bf16.gmra.mxu0 %v1537
    %v2276 = vpop.f32.mrf.mxu0
    %v2277 = vadd.f32 %v1632, %v2276
    %v2278 = vpop.f32.mrf.mxu0
    %v2279 = vadd.f32 %v1632, %v2278
    %2280 = vmatmul.bf16.gmra.mxu0 %v1539
    %v2281 = vpop.f32.mrf.mxu0
    %v2282 = vadd.f32 %v1632, %v2281
    %v2283 = vpop.f32.mrf.mxu0
    %v2284 = vadd.f32 %v1632, %v2283
    %2285 = vmatmul.bf16.gmra.mxu0 %v1541
    %v2286 = vpop.f32.mrf.mxu0
    %v2287 = vadd.f32 %v1632, %v2286
    %v2288 = vpop.f32.mrf.mxu0
    %v2289 = vadd.f32 %v1632, %v2288
    %2290 = vmatmul.bf16.gmra.mxu0 %v1543
    %v2291 = vpop.f32.mrf.mxu0
    %v2292 = vadd.f32 %v1632, %v2291
    %v2293 = vpop.f32.mrf.mxu0
    %v2294 = vadd.f32 %v1632, %v2293
    %2295 = vmatmul.bf16.gmra.mxu0 %v1545
    %v2296 = vpop.f32.mrf.mxu0
    %v2297 = vadd.f32 %v1632, %v2296
    %v2298 = vpop.f32.mrf.mxu0
    %v2299 = vadd.f32 %v1632, %v2298
    %2300 = vmatmul.bf16.gmra.mxu0 %v1547
    %v2301 = vpop.f32.mrf.mxu0
    %v2302 = vadd.f32 %v1632, %v2301
    %v2303 = vpop.f32.mrf.mxu0
    %v2304 = vadd.f32 %v1632, %v2303
    %2305 = vmatmul.bf16.gmra.mxu0 %v1549
    %v2306 = vpop.f32.mrf.mxu0
    %v2307 = vadd.f32 %v1632, %v2306
    %v2308 = vpop.f32.mrf.mxu0
    %v2309 = vadd.f32 %v1632, %v2308
    %2310 = vmatmul.bf16.gmra.mxu0 %v1551
    %v2311 = vpop.f32.mrf.mxu0
    %v2312 = vadd.f32 %v1632, %v2311
    %v2313 = vpop.f32.mrf.mxu0
    %v2314 = vadd.f32 %v1632, %v2313
    %2315 = vmatmul.bf16.gmra.mxu0 %v1553
    %v2316 = vpop.f32.mrf.mxu0
    %v2317 = vadd.f32 %v1632, %v2316
    %v2318 = vpop.f32.mrf.mxu0
    %v2319 = vadd.f32 %v1632, %v2318
    %2320 = vmatmul.bf16.gmra.mxu0 %v1555
    %v2321 = vpop.f32.mrf.mxu0
    %v2322 = vadd.f32 %v1632, %v2321
    %v2323 = vpop.f32.mrf.mxu0
    %v2324 = vadd.f32 %v1632, %v2323
    %2325 = vmatmul.bf16.gmra.mxu0 %v1557
    %v2326 = vpop.f32.mrf.mxu0
    %v2327 = vadd.f32 %v1632, %v2326
    %v2328 = vpop.f32.mrf.mxu0
    %v2329 = vadd.f32 %v1632, %v2328
    %2330 = vmatmul.bf16.gmra.mxu0 %v1559
    %v2331 = vpop.f32.mrf.mxu0
    %v2332 = vadd.f32 %v1632, %v2331
    %v2333 = vpop.f32.mrf.mxu0
    %v2334 = vadd.f32 %v1632, %v2333
    %2335 = vmatmul.bf16.gmra.mxu0 %v1561
    %v2336 = vpop.f32.mrf.mxu0
    %v2337 = vadd.f32 %v1632, %v2336
    %v2338 = vpop.f32.mrf.mxu0
    %v2339 = vadd.f32 %v1632, %v2338
    %2340 = vmatmul.bf16.gmra.mxu0 %v1563
    %v2341 = vpop.f32.mrf.mxu0
    %v2342 = vadd.f32 %v1632, %v2341
    %v2343 = vpop.f32.mrf.mxu0
    %v2344 = vadd.f32 %v1632, %v2343
    %2345 = vdwg.mxu0
    %2346 = vmatpush.bf16.msra.mxu0 %v1892
    %2347 = vmatpush.bf16.msra.mxu0 %v1888
    %2348 = vmatpush.bf16.msra.mxu0 %v1884
    %2349 = vmatpush.bf16.msra.mxu0 %v1880
    %2350 = vmatpush.bf16.msra.mxu0 %v1876
    %2351 = vmatpush.bf16.msra.mxu0 %v1872
    %2352 = vmatpush.bf16.msra.mxu0 %v1868
    %2353 = vmatpush.bf16.msra.mxu0 %v1864
    %2354 = vmatmul.bf16.gmra.mxu0 %v1518
    %v2355 = vpop.f32.mrf.mxu0
    %v2356 = vadd.f32 %v2227, %v2355
    %v2357 = vpop.f32.mrf.mxu0
    %v2358 = vadd.f32 %v2229, %v2357
    %2359 = vmatmul.bf16.gmra.mxu0 %v1520
    %v2360 = vpop.f32.mrf.mxu0
    %v2361 = vadd.f32 %v2232, %v2360
    %v2362 = vpop.f32.mrf.mxu0
    %v2363 = vadd.f32 %v2234, %v2362
    %2364 = vmatmul.bf16.gmra.mxu0 %v1522
    %v2365 = vpop.f32.mrf.mxu0
    %v2366 = vadd.f32 %v2237, %v2365
    %v2367 = vpop.f32.mrf.mxu0
    %v2368 = vadd.f32 %v2239, %v2367
    %2369 = vmatmul.bf16.gmra.mxu0 %v1524
    %v2370 = vpop.f32.mrf.mxu0
    %v2371 = vadd.f32 %v2242, %v2370
    %v2372 = vpop.f32.mrf.mxu0
    %v2373 = vadd.f32 %v2244, %v2372
    %2374 = vmatmul.bf16.gmra.mxu0 %v1526
    %v2375 = vpop.f32.mrf.mxu0
    %v2376 = vadd.f32 %v2247, %v2375
    %v2377 = vpop.f32.mrf.mxu0
    %v2378 = vadd.f32 %v2249, %v2377
    %2379 = vmatmul.bf16.gmra.mxu0 %v1528
    %v2380 = vpop.f32.mrf.mxu0
    %v2381 = vadd.f32 %v2252, %v2380
    %v2382 = vpop.f32.mrf.mxu0
    %v2383 = vadd.f32 %v2254, %v2382
    %2384 = vmatmul.bf16.gmra.mxu0 %v1530
    %v2385 = vpop.f32.mrf.mxu0
    %v2386 = vadd.f32 %v2257, %v2385
    %v2387 = vpop.f32.mrf.mxu0
    %v2388 = vadd.f32 %v2259, %v2387
    %2389 = vmatmul.bf16.gmra.mxu0 %v1532
    %v2390 = vpop.f32.mrf.mxu0
    %v2391 = vadd.f32 %v2262, %v2390
    %v2392 = vpop.f32.mrf.mxu0
    %v2393 = vadd.f32 %v2264, %v2392
    %2394 = vmatmul.bf16.gmra.mxu0 %v1534
    %v2395 = vpop.f32.mrf.mxu0
    %v2396 = vadd.f32 %v2267, %v2395
    %v2397 = vpop.f32.mrf.mxu0
    %v2398 = vadd.f32 %v2269, %v2397
    %2399 = vmatmul.bf16.gmra.mxu0 %v1536
    %v2400 = vpop.f32.mrf.mxu0
    %v2401 = vadd.f32 %v2272, %v2400
    %v2402 = vpop.f32.mrf.mxu0
    %v2403 = vadd.f32 %v2274, %v2402
    %2404 = vmatmul.bf16.gmra.mxu0 %v1538
    %v2405 = vpop.f32.mrf.mxu0
    %v2406 = vadd.f32 %v2277, %v2405
    %v2407 = vpop.f32.mrf.mxu0
    %v2408 = vadd.f32 %v2279, %v2407
    %2409 = vmatmul.bf16.gmra.mxu0 %v1540
    %v2410 = vpop.f32.mrf.mxu0
    %v2411 = vadd.f32 %v2282, %v2410
    %v2412 = vpop.f32.mrf.mxu0
    %v2413 = vadd.f32 %v2284, %v2412
    %2414 = vmatmul.bf16.gmra.mxu0 %v1542
    %v2415 = vpop.f32.mrf.mxu0
    %v2416 = vadd.f32 %v2287, %v2415
    %v2417 = vpop.f32.mrf.mxu0
    %v2418 = vadd.f32 %v2289, %v2417
    %2419 = vmatmul.bf16.gmra.mxu0 %v1544
    %v2420 = vpop.f32.mrf.mxu0
    %v2421 = vadd.f32 %v2292, %v2420
    %v2422 = vpop.f32.mrf.mxu0
    %v2423 = vadd.f32 %v2294, %v2422
    %2424 = vmatmul.bf16.gmra.mxu0 %v1546
    %v2425 = vpop.f32.mrf.mxu0
    %v2426 = vadd.f32 %v2297, %v2425
    %v2427 = vpop.f32.mrf.mxu0
    %v2428 = vadd.f32 %v2299, %v2427
    %2429 = vmatmul.bf16.gmra.mxu0 %v1548
    %v2430 = vpop.f32.mrf.mxu0
    %v2431 = vadd.f32 %v2302, %v2430
    %v2432 = vpop.f32.mrf.mxu0
    %v2433 = vadd.f32 %v2304, %v2432
    %2434 = vmatmul.bf16.gmra.mxu0 %v1550
    %v2435 = vpop.f32.mrf.mxu0
    %v2436 = vadd.f32 %v2307, %v2435
    %v2437 = vpop.f32.mrf.mxu0
    %v2438 = vadd.f32 %v2309, %v2437
    %2439 = vmatmul.bf16.gmra.mxu0 %v1552
    %v2440 = vpop.f32.mrf.mxu0
    %v2441 = vadd.f32 %v2312, %v2440
    %v2442 = vpop.f32.mrf.mxu0
    %v2443 = vadd.f32 %v2314, %v2442
    %2444 = vmatmul.bf16.gmra.mxu0 %v1554
    %v2445 = vpop.f32.mrf.mxu0
    %v2446 = vadd.f32 %v2317, %v2445
    %v2447 = vpop.f32.mrf.mxu0
    %v2448 = vadd.f32 %v2319, %v2447
    %2449 = vmatmul.bf16.gmra.mxu0 %v1556
    %v2450 = vpop.f32.mrf.mxu0
    %v2451 = vadd.f32 %v2322, %v2450
    %v2452 = vpop.f32.mrf.mxu0
    %v2453 = vadd.f32 %v2324, %v2452
    %2454 = vmatmul.bf16.gmra.mxu0 %v1558
    %v2455 = vpop.f32.mrf.mxu0
    %v2456 = vadd.f32 %v2327, %v2455
    %v2457 = vpop.f32.mrf.mxu0
    %v2458 = vadd.f32 %v2329, %v2457
    %2459 = vmatmul.bf16.gmra.mxu0 %v1560
    %v2460 = vpop.f32.mrf.mxu0
    %v2461 = vadd.f32 %v2332, %v2460
    %v2462 = vpop.f32.mrf.mxu0
    %v2463 = vadd.f32 %v2334, %v2462
    %2464 = vmatmul.bf16.gmra.mxu0 %v1562
    %v2465 = vpop.f32.mrf.mxu0
    %v2466 = vadd.f32 %v2337, %v2465
    %v2467 = vpop.f32.mrf.mxu0
    %v2468 = vadd.f32 %v2339, %v2467
    %2469 = vmatmul.bf16.gmra.mxu0 %v1564
    %v2470 = vpop.f32.mrf.mxu0
    %v2471 = vadd.f32 %v2342, %v2470
    %v2472 = vpop.f32.mrf.mxu0
    %v2473 = vadd.f32 %v2344, %v2472
    %2474 = vdwg.mxu0
    %2475 = vmatpush.bf16.msra.mxu0 %v1861
    %2476 = vmatpush.bf16.msra.mxu0 %v1857
    %2477 = vmatpush.bf16.msra.mxu0 %v1853
    %2478 = vmatpush.bf16.msra.mxu0 %v1849
    %2479 = vmatpush.bf16.msra.mxu0 %v1845
    %2480 = vmatpush.bf16.msra.mxu0 %v1841
    %2481 = vmatpush.bf16.msra.mxu0 %v1837
    %2482 = vmatpush.bf16.msra.mxu0 %v1833
    %2483 = vmatmul.bf16.gmra.mxu0 %v1517
    %v2484 = vpop.f32.mrf.mxu0
    %v2485 = vadd.f32 %v1633, %v2484
    %v2486 = vpop.f32.mrf.mxu0
    %v2487 = vadd.f32 %v1633, %v2486
    %2488 = vmatmul.bf16.gmra.mxu0 %v1519
    %v2489 = vpop.f32.mrf.mxu0
    %v2490 = vadd.f32 %v1633, %v2489
    %v2491 = vpop.f32.mrf.mxu0
    %v2492 = vadd.f32 %v1633, %v2491
    %2493 = vmatmul.bf16.gmra.mxu0 %v1521
    %v2494 = vpop.f32.mrf.mxu0
    %v2495 = vadd.f32 %v1633, %v2494
    %v2496 = vpop.f32.mrf.mxu0
    %v2497 = vadd.f32 %v1633, %v2496
    %2498 = vmatmul.bf16.gmra.mxu0 %v1523
    %v2499 = vpop.f32.mrf.mxu0
    %v2500 = vadd.f32 %v1633, %v2499
    %v2501 = vpop.f32.mrf.mxu0
    %v2502 = vadd.f32 %v1633, %v2501
    %2503 = vmatmul.bf16.gmra.mxu0 %v1525
    %v2504 = vpop.f32.mrf.mxu0
    %v2505 = vadd.f32 %v1633, %v2504
    %v2506 = vpop.f32.mrf.mxu0
    %v2507 = vadd.f32 %v1633, %v2506
    %2508 = vmatmul.bf16.gmra.mxu0 %v1527
    %v2509 = vpop.f32.mrf.mxu0
    %v2510 = vadd.f32 %v1633, %v2509
    %v2511 = vpop.f32.mrf.mxu0
    %v2512 = vadd.f32 %v1633, %v2511
    %2513 = vmatmul.bf16.gmra.mxu0 %v1529
    %v2514 = vpop.f32.mrf.mxu0
    %v2515 = vadd.f32 %v1633, %v2514
    %v2516 = vpop.f32.mrf.mxu0
    %v2517 = vadd.f32 %v1633, %v2516
    %2518 = vmatmul.bf16.gmra.mxu0 %v1531
    %v2519 = vpop.f32.mrf.mxu0
    %v2520 = vadd.f32 %v1633, %v2519
    %v2521 = vpop.f32.mrf.mxu0
    %v2522 = vadd.f32 %v1633, %v2521
    %2523 = vmatmul.bf16.gmra.mxu0 %v1533
    %v2524 = vpop.f32.mrf.mxu0
    %v2525 = vadd.f32 %v1633, %v2524
    %v2526 = vpop.f32.mrf.mxu0
    %v2527 = vadd.f32 %v1633, %v2526
    %2528 = vmatmul.bf16.gmra.mxu0 %v1535
    %v2529 = vpop.f32.mrf.mxu0
    %v2530 = vadd.f32 %v1633, %v2529
    %v2531 = vpop.f32.mrf.mxu0
    %v2532 = vadd.f32 %v1633, %v2531
    %2533 = vmatmul.bf16.gmra.mxu0 %v1537
    %v2534 = vpop.f32.mrf.mxu0
    %v2535 = vadd.f32 %v1633, %v2534
    %v2536 = vpop.f32.mrf.mxu0
    %v2537 = vadd.f32 %v1633, %v2536
    %2538 = vmatmul.bf16.gmra.mxu0 %v1539
    %v2539 = vpop.f32.mrf.mxu0
    %v2540 = vadd.f32 %v1633, %v2539
    %v2541 = vpop.f32.mrf.mxu0
    %v2542 = vadd.f32 %v1633, %v2541
    %2543 = vmatmul.bf16.gmra.mxu0 %v1541
    %v2544 = vpop.f32.mrf.mxu0
    %v2545 = vadd.f32 %v1633, %v2544
    %v2546 = vpop.f32.mrf.mxu0
    %v2547 = vadd.f32 %v1633, %v2546
    %2548 = vmatmul.bf16.gmra.mxu0 %v1543
    %v2549 = vpop.f32.mrf.mxu0
    %v2550 = vadd.f32 %v1633, %v2549
    %v2551 = vpop.f32.mrf.mxu0
    %v2552 = vadd.f32 %v1633, %v2551
    %2553 = vmatmul.bf16.gmra.mxu0 %v1545
    %v2554 = vpop.f32.mrf.mxu0
    %v2555 = vadd.f32 %v1633, %v2554
    %v2556 = vpop.f32.mrf.mxu0
    %v2557 = vadd.f32 %v1633, %v2556
    %2558 = vmatmul.bf16.gmra.mxu0 %v1547
    %v2559 = vpop.f32.mrf.mxu0
    %v2560 = vadd.f32 %v1633, %v2559
    %v2561 = vpop.f32.mrf.mxu0
    %v2562 = vadd.f32 %v1633, %v2561
    %2563 = vmatmul.bf16.gmra.mxu0 %v1549
    %v2564 = vpop.f32.mrf.mxu0
    %v2565 = vadd.f32 %v1633, %v2564
    %v2566 = vpop.f32.mrf.mxu0
    %v2567 = vadd.f32 %v1633, %v2566
    %2568 = vmatmul.bf16.gmra.mxu0 %v1551
    %v2569 = vpop.f32.mrf.mxu0
    %v2570 = vadd.f32 %v1633, %v2569
    %v2571 = vpop.f32.mrf.mxu0
    %v2572 = vadd.f32 %v1633, %v2571
    %2573 = vmatmul.bf16.gmra.mxu0 %v1553
    %v2574 = vpop.f32.mrf.mxu0
    %v2575 = vadd.f32 %v1633, %v2574
    %v2576 = vpop.f32.mrf.mxu0
    %v2577 = vadd.f32 %v1633, %v2576
    %2578 = vmatmul.bf16.gmra.mxu0 %v1555
    %v2579 = vpop.f32.mrf.mxu0
    %v2580 = vadd.f32 %v1633, %v2579
    %v2581 = vpop.f32.mrf.mxu0
    %v2582 = vadd.f32 %v1633, %v2581
    %2583 = vmatmul.bf16.gmra.mxu0 %v1557
    %v2584 = vpop.f32.mrf.mxu0
    %v2585 = vadd.f32 %v1633, %v2584
    %v2586 = vpop.f32.mrf.mxu0
    %v2587 = vadd.f32 %v1633, %v2586
    %2588 = vmatmul.bf16.gmra.mxu0 %v1559
    %v2589 = vpop.f32.mrf.mxu0
    %v2590 = vadd.f32 %v1633, %v2589
    %v2591 = vpop.f32.mrf.mxu0
    %v2592 = vadd.f32 %v1633, %v2591
    %2593 = vmatmul.bf16.gmra.mxu0 %v1561
    %v2594 = vpop.f32.mrf.mxu0
    %v2595 = vadd.f32 %v1633, %v2594
    %v2596 = vpop.f32.mrf.mxu0
    %v2597 = vadd.f32 %v1633, %v2596
    %2598 = vmatmul.bf16.gmra.mxu0 %v1563
    %v2599 = vpop.f32.mrf.mxu0
    %v2600 = vadd.f32 %v1633, %v2599
    %v2601 = vpop.f32.mrf.mxu0
    %v2602 = vadd.f32 %v1633, %v2601
    %2603 = vdwg.mxu0
    %2604 = vmatpush.bf16.msra.mxu0 %v1893
    %2605 = vmatpush.bf16.msra.mxu0 %v1889
    %2606 = vmatpush.bf16.msra.mxu0 %v1885
    %2607 = vmatpush.bf16.msra.mxu0 %v1881
    %2608 = vmatpush.bf16.msra.mxu0 %v1877
    %2609 = vmatpush.bf16.msra.mxu0 %v1873
    %2610 = vmatpush.bf16.msra.mxu0 %v1869
    %2611 = vmatpush.bf16.msra.mxu0 %v1865
    %2612 = vmatmul.bf16.gmra.mxu0 %v1518
    %v2613 = vpop.f32.mrf.mxu0
    %v2614 = vadd.f32 %v2485, %v2613
    %v2615 = vpop.f32.mrf.mxu0
    %v2616 = vadd.f32 %v2487, %v2615
    %2617 = vmatmul.bf16.gmra.mxu0 %v1520
    %v2618 = vpop.f32.mrf.mxu0
    %v2619 = vadd.f32 %v2490, %v2618
    %v2620 = vpop.f32.mrf.mxu0
    %v2621 = vadd.f32 %v2492, %v2620
    %2622 = vmatmul.bf16.gmra.mxu0 %v1522
    %v2623 = vpop.f32.mrf.mxu0
    %v2624 = vadd.f32 %v2495, %v2623
    %v2625 = vpop.f32.mrf.mxu0
    %v2626 = vadd.f32 %v2497, %v2625
    %2627 = vmatmul.bf16.gmra.mxu0 %v1524
    %v2628 = vpop.f32.mrf.mxu0
    %v2629 = vadd.f32 %v2500, %v2628
    %v2630 = vpop.f32.mrf.mxu0
    %v2631 = vadd.f32 %v2502, %v2630
    %2632 = vmatmul.bf16.gmra.mxu0 %v1526
    %v2633 = vpop.f32.mrf.mxu0
    %v2634 = vadd.f32 %v2505, %v2633
    %v2635 = vpop.f32.mrf.mxu0
    %v2636 = vadd.f32 %v2507, %v2635
    %2637 = vmatmul.bf16.gmra.mxu0 %v1528
    %v2638 = vpop.f32.mrf.mxu0
    %v2639 = vadd.f32 %v2510, %v2638
    %v2640 = vpop.f32.mrf.mxu0
    %v2641 = vadd.f32 %v2512, %v2640
    %2642 = vmatmul.bf16.gmra.mxu0 %v1530
    %v2643 = vpop.f32.mrf.mxu0
    %v2644 = vadd.f32 %v2515, %v2643
    %v2645 = vpop.f32.mrf.mxu0
    %v2646 = vadd.f32 %v2517, %v2645
    %2647 = vmatmul.bf16.gmra.mxu0 %v1532
    %v2648 = vpop.f32.mrf.mxu0
    %v2649 = vadd.f32 %v2520, %v2648
    %v2650 = vpop.f32.mrf.mxu0
    %v2651 = vadd.f32 %v2522, %v2650
    %2652 = vmatmul.bf16.gmra.mxu0 %v1534
    %v2653 = vpop.f32.mrf.mxu0
    %v2654 = vadd.f32 %v2525, %v2653
    %v2655 = vpop.f32.mrf.mxu0
    %v2656 = vadd.f32 %v2527, %v2655
    %2657 = vmatmul.bf16.gmra.mxu0 %v1536
    %v2658 = vpop.f32.mrf.mxu0
    %v2659 = vadd.f32 %v2530, %v2658
    %v2660 = vpop.f32.mrf.mxu0
    %v2661 = vadd.f32 %v2532, %v2660
    %2662 = vmatmul.bf16.gmra.mxu0 %v1538
    %v2663 = vpop.f32.mrf.mxu0
    %v2664 = vadd.f32 %v2535, %v2663
    %v2665 = vpop.f32.mrf.mxu0
    %v2666 = vadd.f32 %v2537, %v2665
    %2667 = vmatmul.bf16.gmra.mxu0 %v1540
    %v2668 = vpop.f32.mrf.mxu0
    %v2669 = vadd.f32 %v2540, %v2668
    %v2670 = vpop.f32.mrf.mxu0
    %v2671 = vadd.f32 %v2542, %v2670
    %2672 = vmatmul.bf16.gmra.mxu0 %v1542
    %v2673 = vpop.f32.mrf.mxu0
    %v2674 = vadd.f32 %v2545, %v2673
    %v2675 = vpop.f32.mrf.mxu0
    %v2676 = vadd.f32 %v2547, %v2675
    %2677 = vmatmul.bf16.gmra.mxu0 %v1544
    %v2678 = vpop.f32.mrf.mxu0
    %v2679 = vadd.f32 %v2550, %v2678
    %v2680 = vpop.f32.mrf.mxu0
    %v2681 = vadd.f32 %v2552, %v2680
    %2682 = vmatmul.bf16.gmra.mxu0 %v1546
    %v2683 = vpop.f32.mrf.mxu0
    %v2684 = vadd.f32 %v2555, %v2683
    %v2685 = vpop.f32.mrf.mxu0
    %v2686 = vadd.f32 %v2557, %v2685
    %2687 = vmatmul.bf16.gmra.mxu0 %v1548
    %v2688 = vpop.f32.mrf.mxu0
    %v2689 = vadd.f32 %v2560, %v2688
    %v2690 = vpop.f32.mrf.mxu0
    %v2691 = vadd.f32 %v2562, %v2690
    %2692 = vmatmul.bf16.gmra.mxu0 %v1550
    %v2693 = vpop.f32.mrf.mxu0
    %v2694 = vadd.f32 %v2565, %v2693
    %v2695 = vpop.f32.mrf.mxu0
    %v2696 = vadd.f32 %v2567, %v2695
    %2697 = vmatmul.bf16.gmra.mxu0 %v1552
    %v2698 = vpop.f32.mrf.mxu0
    %v2699 = vadd.f32 %v2570, %v2698
    %v2700 = vpop.f32.mrf.mxu0
    %v2701 = vadd.f32 %v2572, %v2700
    %2702 = vmatmul.bf16.gmra.mxu0 %v1554
    %v2703 = vpop.f32.mrf.mxu0
    %v2704 = vadd.f32 %v2575, %v2703
    %v2705 = vpop.f32.mrf.mxu0
    %v2706 = vadd.f32 %v2577, %v2705
    %2707 = vmatmul.bf16.gmra.mxu0 %v1556
    %v2708 = vpop.f32.mrf.mxu0
    %v2709 = vadd.f32 %v2580, %v2708
    %v2710 = vpop.f32.mrf.mxu0
    %v2711 = vadd.f32 %v2582, %v2710
    %2712 = vmatmul.bf16.gmra.mxu0 %v1558
    %v2713 = vpop.f32.mrf.mxu0
    %v2714 = vadd.f32 %v2585, %v2713
    %v2715 = vpop.f32.mrf.mxu0
    %v2716 = vadd.f32 %v2587, %v2715
    %2717 = vmatmul.bf16.gmra.mxu0 %v1560
    %v2718 = vpop.f32.mrf.mxu0
    %v2719 = vadd.f32 %v2590, %v2718
    %v2720 = vpop.f32.mrf.mxu0
    %v2721 = vadd.f32 %v2592, %v2720
    %2722 = vmatmul.bf16.gmra.mxu0 %v1562
    %v2723 = vpop.f32.mrf.mxu0
    %v2724 = vadd.f32 %v2595, %v2723
    %v2725 = vpop.f32.mrf.mxu0
    %v2726 = vadd.f32 %v2597, %v2725
    %2727 = vmatmul.bf16.gmra.mxu0 %v1564
    %v2728 = vpop.f32.mrf.mxu0
    %v2729 = vadd.f32 %v2600, %v2728
    %v2730 = vpop.f32.mrf.mxu0
    %v2731 = vadd.f32 %v2602, %v2730
    %2732 = vdwg.mxu0
    %2733 = vmatpush.bf16.msra.mxu0 %v1862
    %2734 = vmatpush.bf16.msra.mxu0 %v1858
    %2735 = vmatpush.bf16.msra.mxu0 %v1854
    %2736 = vmatpush.bf16.msra.mxu0 %v1850
    %2737 = vmatpush.bf16.msra.mxu0 %v1846
    %2738 = vmatpush.bf16.msra.mxu0 %v1842
    %2739 = vmatpush.bf16.msra.mxu0 %v1838
    %2740 = vmatpush.bf16.msra.mxu0 %v1834
    %2741 = vmatmul.bf16.gmra.mxu0 %v1517
    %v2742 = vpop.f32.mrf.mxu0
    %v2743 = vadd.f32 %v1634, %v2742
    %v2744 = vpop.f32.mrf.mxu0
    %v2745 = vadd.f32 %v1634, %v2744
    %2746 = vmatmul.bf16.gmra.mxu0 %v1519
    %v2747 = vpop.f32.mrf.mxu0
    %v2748 = vadd.f32 %v1634, %v2747
    %v2749 = vpop.f32.mrf.mxu0
    %v2750 = vadd.f32 %v1634, %v2749
    %2751 = vmatmul.bf16.gmra.mxu0 %v1521
    %v2752 = vpop.f32.mrf.mxu0
    %v2753 = vadd.f32 %v1634, %v2752
    %v2754 = vpop.f32.mrf.mxu0
    %v2755 = vadd.f32 %v1634, %v2754
    %2756 = vmatmul.bf16.gmra.mxu0 %v1523
    %v2757 = vpop.f32.mrf.mxu0
    %v2758 = vadd.f32 %v1634, %v2757
    %v2759 = vpop.f32.mrf.mxu0
    %v2760 = vadd.f32 %v1634, %v2759
    %2761 = vmatmul.bf16.gmra.mxu0 %v1525
    %v2762 = vpop.f32.mrf.mxu0
    %v2763 = vadd.f32 %v1634, %v2762
    %v2764 = vpop.f32.mrf.mxu0
    %v2765 = vadd.f32 %v1634, %v2764
    %2766 = vmatmul.bf16.gmra.mxu0 %v1527
    %v2767 = vpop.f32.mrf.mxu0
    %v2768 = vadd.f32 %v1634, %v2767
    %v2769 = vpop.f32.mrf.mxu0
    %v2770 = vadd.f32 %v1634, %v2769
    %2771 = vmatmul.bf16.gmra.mxu0 %v1529
    %v2772 = vpop.f32.mrf.mxu0
    %v2773 = vadd.f32 %v1634, %v2772
    %v2774 = vpop.f32.mrf.mxu0
    %v2775 = vadd.f32 %v1634, %v2774
    %2776 = vmatmul.bf16.gmra.mxu0 %v1531
    %v2777 = vpop.f32.mrf.mxu0
    %v2778 = vadd.f32 %v1634, %v2777
    %v2779 = vpop.f32.mrf.mxu0
    %v2780 = vadd.f32 %v1634, %v2779
    %2781 = vmatmul.bf16.gmra.mxu0 %v1533
    %v2782 = vpop.f32.mrf.mxu0
    %v2783 = vadd.f32 %v1634, %v2782
    %v2784 = vpop.f32.mrf.mxu0
    %v2785 = vadd.f32 %v1634, %v2784
    %2786 = vmatmul.bf16.gmra.mxu0 %v1535
    %v2787 = vpop.f32.mrf.mxu0
    %v2788 = vadd.f32 %v1634, %v2787
    %v2789 = vpop.f32.mrf.mxu0
    %v2790 = vadd.f32 %v1634, %v2789
    %2791 = vmatmul.bf16.gmra.mxu0 %v1537
    %v2792 = vpop.f32.mrf.mxu0
    %v2793 = vadd.f32 %v1634, %v2792
    %v2794 = vpop.f32.mrf.mxu0
    %v2795 = vadd.f32 %v1634, %v2794
    %2796 = vmatmul.bf16.gmra.mxu0 %v1539
    %v2797 = vpop.f32.mrf.mxu0
    %v2798 = vadd.f32 %v1634, %v2797
    %v2799 = vpop.f32.mrf.mxu0
    %v2800 = vadd.f32 %v1634, %v2799
    %2801 = vmatmul.bf16.gmra.mxu0 %v1541
    %v2802 = vpop.f32.mrf.mxu0
    %v2803 = vadd.f32 %v1634, %v2802
    %v2804 = vpop.f32.mrf.mxu0
    %v2805 = vadd.f32 %v1634, %v2804
    %2806 = vmatmul.bf16.gmra.mxu0 %v1543
    %v2807 = vpop.f32.mrf.mxu0
    %v2808 = vadd.f32 %v1634, %v2807
    %v2809 = vpop.f32.mrf.mxu0
    %v2810 = vadd.f32 %v1634, %v2809
    %2811 = vmatmul.bf16.gmra.mxu0 %v1545
    %v2812 = vpop.f32.mrf.mxu0
    %v2813 = vadd.f32 %v1634, %v2812
    %v2814 = vpop.f32.mrf.mxu0
    %v2815 = vadd.f32 %v1634, %v2814
    %2816 = vmatmul.bf16.gmra.mxu0 %v1547
    %v2817 = vpop.f32.mrf.mxu0
    %v2818 = vadd.f32 %v1634, %v2817
    %v2819 = vpop.f32.mrf.mxu0
    %v2820 = vadd.f32 %v1634, %v2819
    %2821 = vmatmul.bf16.gmra.mxu0 %v1549
    %v2822 = vpop.f32.mrf.mxu0
    %v2823 = vadd.f32 %v1634, %v2822
    %v2824 = vpop.f32.mrf.mxu0
    %v2825 = vadd.f32 %v1634, %v2824
    %2826 = vmatmul.bf16.gmra.mxu0 %v1551
    %v2827 = vpop.f32.mrf.mxu0
    %v2828 = vadd.f32 %v1634, %v2827
    %v2829 = vpop.f32.mrf.mxu0
    %v2830 = vadd.f32 %v1634, %v2829
    %2831 = vmatmul.bf16.gmra.mxu0 %v1553
    %v2832 = vpop.f32.mrf.mxu0
    %v2833 = vadd.f32 %v1634, %v2832
    %v2834 = vpop.f32.mrf.mxu0
    %v2835 = vadd.f32 %v1634, %v2834
    %2836 = vmatmul.bf16.gmra.mxu0 %v1555
    %v2837 = vpop.f32.mrf.mxu0
    %v2838 = vadd.f32 %v1634, %v2837
    %v2839 = vpop.f32.mrf.mxu0
    %v2840 = vadd.f32 %v1634, %v2839
    %2841 = vmatmul.bf16.gmra.mxu0 %v1557
    %v2842 = vpop.f32.mrf.mxu0
    %v2843 = vadd.f32 %v1634, %v2842
    %v2844 = vpop.f32.mrf.mxu0
    %v2845 = vadd.f32 %v1634, %v2844
    %2846 = vmatmul.bf16.gmra.mxu0 %v1559
    %v2847 = vpop.f32.mrf.mxu0
    %v2848 = vadd.f32 %v1634, %v2847
    %v2849 = vpop.f32.mrf.mxu0
    %v2850 = vadd.f32 %v1634, %v2849
    %2851 = vmatmul.bf16.gmra.mxu0 %v1561
    %v2852 = vpop.f32.mrf.mxu0
    %v2853 = vadd.f32 %v1634, %v2852
    %v2854 = vpop.f32.mrf.mxu0
    %v2855 = vadd.f32 %v1634, %v2854
    %2856 = vmatmul.bf16.gmra.mxu0 %v1563
    %v2857 = vpop.f32.mrf.mxu0
    %v2858 = vadd.f32 %v1634, %v2857
    %v2859 = vpop.f32.mrf.mxu0
    %v2860 = vadd.f32 %v1634, %v2859
    %2861 = vdwg.mxu0
    %2862 = vmatpush.bf16.msra.mxu0 %v1894
    %2863 = vmatpush.bf16.msra.mxu0 %v1890
    %2864 = vmatpush.bf16.msra.mxu0 %v1886
    %2865 = vmatpush.bf16.msra.mxu0 %v1882
    %2866 = vmatpush.bf16.msra.mxu0 %v1878
    %2867 = vmatpush.bf16.msra.mxu0 %v1874
    %2868 = vmatpush.bf16.msra.mxu0 %v1870
    %2869 = vmatpush.bf16.msra.mxu0 %v1866
    %2870 = vmatmul.bf16.gmra.mxu0 %v1518
    %v2871 = vpop.f32.mrf.mxu0
    %v2872 = vadd.f32 %v2743, %v2871
    %v2873 = vpop.f32.mrf.mxu0
    %v2874 = vadd.f32 %v2745, %v2873
    %2875 = vmatmul.bf16.gmra.mxu0 %v1520
    %v2876 = vpop.f32.mrf.mxu0
    %v2877 = vadd.f32 %v2748, %v2876
    %v2878 = vpop.f32.mrf.mxu0
    %v2879 = vadd.f32 %v2750, %v2878
    %2880 = vmatmul.bf16.gmra.mxu0 %v1522
    %v2881 = vpop.f32.mrf.mxu0
    %v2882 = vadd.f32 %v2753, %v2881
    %v2883 = vpop.f32.mrf.mxu0
    %v2884 = vadd.f32 %v2755, %v2883
    %2885 = vmatmul.bf16.gmra.mxu0 %v1524
    %v2886 = vpop.f32.mrf.mxu0
    %v2887 = vadd.f32 %v2758, %v2886
    %v2888 = vpop.f32.mrf.mxu0
    %v2889 = vadd.f32 %v2760, %v2888
    %2890 = vmatmul.bf16.gmra.mxu0 %v1526
    %v2891 = vpop.f32.mrf.mxu0
    %v2892 = vadd.f32 %v2763, %v2891
    %v2893 = vpop.f32.mrf.mxu0
    %v2894 = vadd.f32 %v2765, %v2893
    %2895 = vmatmul.bf16.gmra.mxu0 %v1528
    %v2896 = vpop.f32.mrf.mxu0
    %v2897 = vadd.f32 %v2768, %v2896
    %v2898 = vpop.f32.mrf.mxu0
    %v2899 = vadd.f32 %v2770, %v2898
    %2900 = vmatmul.bf16.gmra.mxu0 %v1530
    %v2901 = vpop.f32.mrf.mxu0
    %v2902 = vadd.f32 %v2773, %v2901
    %v2903 = vpop.f32.mrf.mxu0
    %v2904 = vadd.f32 %v2775, %v2903
    %2905 = vmatmul.bf16.gmra.mxu0 %v1532
    %v2906 = vpop.f32.mrf.mxu0
    %v2907 = vadd.f32 %v2778, %v2906
    %v2908 = vpop.f32.mrf.mxu0
    %v2909 = vadd.f32 %v2780, %v2908
    %2910 = vmatmul.bf16.gmra.mxu0 %v1534
    %v2911 = vpop.f32.mrf.mxu0
    %v2912 = vadd.f32 %v2783, %v2911
    %v2913 = vpop.f32.mrf.mxu0
    %v2914 = vadd.f32 %v2785, %v2913
    %2915 = vmatmul.bf16.gmra.mxu0 %v1536
    %v2916 = vpop.f32.mrf.mxu0
    %v2917 = vadd.f32 %v2788, %v2916
    %v2918 = vpop.f32.mrf.mxu0
    %v2919 = vadd.f32 %v2790, %v2918
    %2920 = vmatmul.bf16.gmra.mxu0 %v1538
    %v2921 = vpop.f32.mrf.mxu0
    %v2922 = vadd.f32 %v2793, %v2921
    %v2923 = vpop.f32.mrf.mxu0
    %v2924 = vadd.f32 %v2795, %v2923
    %2925 = vmatmul.bf16.gmra.mxu0 %v1540
    %v2926 = vpop.f32.mrf.mxu0
    %v2927 = vadd.f32 %v2798, %v2926
    %v2928 = vpop.f32.mrf.mxu0
    %v2929 = vadd.f32 %v2800, %v2928
    %2930 = vmatmul.bf16.gmra.mxu0 %v1542
    %v2931 = vpop.f32.mrf.mxu0
    %v2932 = vadd.f32 %v2803, %v2931
    %v2933 = vpop.f32.mrf.mxu0
    %v2934 = vadd.f32 %v2805, %v2933
    %2935 = vmatmul.bf16.gmra.mxu0 %v1544
    %v2936 = vpop.f32.mrf.mxu0
    %v2937 = vadd.f32 %v2808, %v2936
    %v2938 = vpop.f32.mrf.mxu0
    %v2939 = vadd.f32 %v2810, %v2938
    %2940 = vmatmul.bf16.gmra.mxu0 %v1546
    %v2941 = vpop.f32.mrf.mxu0
    %v2942 = vadd.f32 %v2813, %v2941
    %v2943 = vpop.f32.mrf.mxu0
    %v2944 = vadd.f32 %v2815, %v2943
    %2945 = vmatmul.bf16.gmra.mxu0 %v1548
    %v2946 = vpop.f32.mrf.mxu0
    %v2947 = vadd.f32 %v2818, %v2946
    %v2948 = vpop.f32.mrf.mxu0
    %v2949 = vadd.f32 %v2820, %v2948
    %2950 = vmatmul.bf16.gmra.mxu0 %v1550
    %v2951 = vpop.f32.mrf.mxu0
    %v2952 = vadd.f32 %v2823, %v2951
    %v2953 = vpop.f32.mrf.mxu0
    %v2954 = vadd.f32 %v2825, %v2953
    %2955 = vmatmul.bf16.gmra.mxu0 %v1552
    %v2956 = vpop.f32.mrf.mxu0
    %v2957 = vadd.f32 %v2828, %v2956
    %v2958 = vpop.f32.mrf.mxu0
    %v2959 = vadd.f32 %v2830, %v2958
    %2960 = vmatmul.bf16.gmra.mxu0 %v1554
    %v2961 = vpop.f32.mrf.mxu0
    %v2962 = vadd.f32 %v2833, %v2961
    %v2963 = vpop.f32.mrf.mxu0
    %v2964 = vadd.f32 %v2835, %v2963
    %2965 = vmatmul.bf16.gmra.mxu0 %v1556
    %v2966 = vpop.f32.mrf.mxu0
    %v2967 = vadd.f32 %v2838, %v2966
    %v2968 = vpop.f32.mrf.mxu0
    %v2969 = vadd.f32 %v2840, %v2968
    %2970 = vmatmul.bf16.gmra.mxu0 %v1558
    %v2971 = vpop.f32.mrf.mxu0
    %v2972 = vadd.f32 %v2843, %v2971
    %v2973 = vpop.f32.mrf.mxu0
    %v2974 = vadd.f32 %v2845, %v2973
    %2975 = vmatmul.bf16.gmra.mxu0 %v1560
    %v2976 = vpop.f32.mrf.mxu0
    %v2977 = vadd.f32 %v2848, %v2976
    %v2978 = vpop.f32.mrf.mxu0
    %v2979 = vadd.f32 %v2850, %v2978
    %2980 = vmatmul.bf16.gmra.mxu0 %v1562
    %v2981 = vpop.f32.mrf.mxu0
    %v2982 = vadd.f32 %v2853, %v2981
    %v2983 = vpop.f32.mrf.mxu0
    %v2984 = vadd.f32 %v2855, %v2983
    %2985 = vmatmul.bf16.gmra.mxu0 %v1564
    %v2986 = vpop.f32.mrf.mxu0
    %v2987 = vadd.f32 %v2858, %v2986
    %v2988 = vpop.f32.mrf.mxu0
    %v2989 = vadd.f32 %v2860, %v2988
    %2990 = vdwg.mxu0
    %vm2991 = vcmp.ge.f32.partialorder %v2098, 0.0
    %vm2992 = vcmp.ge.f32.partialorder %v2356, 0.0
    %vm2993 = vcmp.ge.f32.partialorder %v2614, 0.0
    %vm2994 = vcmp.ge.f32.partialorder %v2872, 0.0
    %vm2995 = vcmp.ge.f32.partialorder %v2100, 0.0
    %vm2996 = vcmp.ge.f32.partialorder %v2358, 0.0
    %vm2997 = vcmp.ge.f32.partialorder %v2616, 0.0
    %vm2998 = vcmp.ge.f32.partialorder %v2874, 0.0
    %vm2999 = vcmp.ge.f32.partialorder %v2103, 0.0
    %vm3000 = vcmp.ge.f32.partialorder %v2361, 0.0
    %vm3001 = vcmp.ge.f32.partialorder %v2619, 0.0
    %vm3002 = vcmp.ge.f32.partialorder %v2877, 0.0
    %vm3003 = vcmp.ge.f32.partialorder %v2105, 0.0
    %vm3004 = vcmp.ge.f32.partialorder %v2363, 0.0
    %vm3005 = vcmp.ge.f32.partialorder %v2621, 0.0
    %vm3006 = vcmp.ge.f32.partialorder %v2879, 0.0
    %vm3007 = vcmp.ge.f32.partialorder %v2108, 0.0
    %vm3008 = vcmp.ge.f32.partialorder %v2366, 0.0
    %vm3009 = vcmp.ge.f32.partialorder %v2624, 0.0
    %vm3010 = vcmp.ge.f32.partialorder %v2882, 0.0
    %vm3011 = vcmp.ge.f32.partialorder %v2110, 0.0
    %vm3012 = vcmp.ge.f32.partialorder %v2368, 0.0
    %vm3013 = vcmp.ge.f32.partialorder %v2626, 0.0
    %vm3014 = vcmp.ge.f32.partialorder %v2884, 0.0
    %vm3015 = vcmp.ge.f32.partialorder %v2113, 0.0
    %vm3016 = vcmp.ge.f32.partialorder %v2371, 0.0
    %vm3017 = vcmp.ge.f32.partialorder %v2629, 0.0
    %vm3018 = vcmp.ge.f32.partialorder %v2887, 0.0
    %vm3019 = vcmp.ge.f32.partialorder %v2115, 0.0
    %vm3020 = vcmp.ge.f32.partialorder %v2373, 0.0
    %vm3021 = vcmp.ge.f32.partialorder %v2631, 0.0
    %vm3022 = vcmp.ge.f32.partialorder %v2889, 0.0
    %vm3023 = vcmp.ge.f32.partialorder %v2118, 0.0
    %vm3024 = vcmp.ge.f32.partialorder %v2376, 0.0
    %vm3025 = vcmp.ge.f32.partialorder %v2634, 0.0
    %vm3026 = vcmp.ge.f32.partialorder %v2892, 0.0
    %vm3027 = vcmp.ge.f32.partialorder %v2120, 0.0
    %vm3028 = vcmp.ge.f32.partialorder %v2378, 0.0
    %vm3029 = vcmp.ge.f32.partialorder %v2636, 0.0
    %vm3030 = vcmp.ge.f32.partialorder %v2894, 0.0
    %vm3031 = vcmp.ge.f32.partialorder %v2123, 0.0
    %vm3032 = vcmp.ge.f32.partialorder %v2381, 0.0
    %vm3033 = vcmp.ge.f32.partialorder %v2639, 0.0
    %vm3034 = vcmp.ge.f32.partialorder %v2897, 0.0
    %vm3035 = vcmp.ge.f32.partialorder %v2125, 0.0
    %vm3036 = vcmp.ge.f32.partialorder %v2383, 0.0
    %vm3037 = vcmp.ge.f32.partialorder %v2641, 0.0
    %vm3038 = vcmp.ge.f32.partialorder %v2899, 0.0
    %vm3039 = vcmp.ge.f32.partialorder %v2128, 0.0
    %vm3040 = vcmp.ge.f32.partialorder %v2386, 0.0
    %vm3041 = vcmp.ge.f32.partialorder %v2644, 0.0
    %vm3042 = vcmp.ge.f32.partialorder %v2902, 0.0
    %vm3043 = vcmp.ge.f32.partialorder %v2130, 0.0
    %vm3044 = vcmp.ge.f32.partialorder %v2388, 0.0
    %vm3045 = vcmp.ge.f32.partialorder %v2646, 0.0
    %vm3046 = vcmp.ge.f32.partialorder %v2904, 0.0
    %vm3047 = vcmp.ge.f32.partialorder %v2133, 0.0
    %vm3048 = vcmp.ge.f32.partialorder %v2391, 0.0
    %vm3049 = vcmp.ge.f32.partialorder %v2649, 0.0
    %vm3050 = vcmp.ge.f32.partialorder %v2907, 0.0
    %vm3051 = vcmp.ge.f32.partialorder %v2135, 0.0
    %vm3052 = vcmp.ge.f32.partialorder %v2393, 0.0
    %vm3053 = vcmp.ge.f32.partialorder %v2651, 0.0
    %vm3054 = vcmp.ge.f32.partialorder %v2909, 0.0
    %vm3055 = vcmp.ge.f32.partialorder %v2138, 0.0
    %vm3056 = vcmp.ge.f32.partialorder %v2396, 0.0
    %vm3057 = vcmp.ge.f32.partialorder %v2654, 0.0
    %vm3058 = vcmp.ge.f32.partialorder %v2912, 0.0
    %vm3059 = vcmp.ge.f32.partialorder %v2140, 0.0
    %vm3060 = vcmp.ge.f32.partialorder %v2398, 0.0
    %vm3061 = vcmp.ge.f32.partialorder %v2656, 0.0
    %vm3062 = vcmp.ge.f32.partialorder %v2914, 0.0
    %vm3063 = vcmp.ge.f32.partialorder %v2143, 0.0
    %vm3064 = vcmp.ge.f32.partialorder %v2401, 0.0
    %vm3065 = vcmp.ge.f32.partialorder %v2659, 0.0
    %vm3066 = vcmp.ge.f32.partialorder %v2917, 0.0
    %vm3067 = vcmp.ge.f32.partialorder %v2145, 0.0
    %vm3068 = vcmp.ge.f32.partialorder %v2403, 0.0
    %vm3069 = vcmp.ge.f32.partialorder %v2661, 0.0
    %vm3070 = vcmp.ge.f32.partialorder %v2919, 0.0
    %vm3071 = vcmp.ge.f32.partialorder %v2148, 0.0
    %vm3072 = vcmp.ge.f32.partialorder %v2406, 0.0
    %vm3073 = vcmp.ge.f32.partialorder %v2664, 0.0
    %vm3074 = vcmp.ge.f32.partialorder %v2922, 0.0
    %vm3075 = vcmp.ge.f32.partialorder %v2150, 0.0
    %vm3076 = vcmp.ge.f32.partialorder %v2408, 0.0
    %vm3077 = vcmp.ge.f32.partialorder %v2666, 0.0
    %vm3078 = vcmp.ge.f32.partialorder %v2924, 0.0
    %vm3079 = vcmp.ge.f32.partialorder %v2153, 0.0
    %vm3080 = vcmp.ge.f32.partialorder %v2411, 0.0
    %vm3081 = vcmp.ge.f32.partialorder %v2669, 0.0
    %vm3082 = vcmp.ge.f32.partialorder %v2927, 0.0
    %vm3083 = vcmp.ge.f32.partialorder %v2155, 0.0
    %vm3084 = vcmp.ge.f32.partialorder %v2413, 0.0
    %vm3085 = vcmp.ge.f32.partialorder %v2671, 0.0
    %vm3086 = vcmp.ge.f32.partialorder %v2929, 0.0
    %vm3087 = vcmp.ge.f32.partialorder %v2158, 0.0
    %vm3088 = vcmp.ge.f32.partialorder %v2416, 0.0
    %vm3089 = vcmp.ge.f32.partialorder %v2674, 0.0
    %vm3090 = vcmp.ge.f32.partialorder %v2932, 0.0
    %vm3091 = vcmp.ge.f32.partialorder %v2160, 0.0
    %vm3092 = vcmp.ge.f32.partialorder %v2418, 0.0
    %vm3093 = vcmp.ge.f32.partialorder %v2676, 0.0
    %vm3094 = vcmp.ge.f32.partialorder %v2934, 0.0
    %vm3095 = vcmp.ge.f32.partialorder %v2163, 0.0
    %vm3096 = vcmp.ge.f32.partialorder %v2421, 0.0
    %vm3097 = vcmp.ge.f32.partialorder %v2679, 0.0
    %vm3098 = vcmp.ge.f32.partialorder %v2937, 0.0
    %vm3099 = vcmp.ge.f32.partialorder %v2165, 0.0
    %vm3100 = vcmp.ge.f32.partialorder %v2423, 0.0
    %vm3101 = vcmp.ge.f32.partialorder %v2681, 0.0
    %vm3102 = vcmp.ge.f32.partialorder %v2939, 0.0
    %vm3103 = vcmp.ge.f32.partialorder %v2168, 0.0
    %vm3104 = vcmp.ge.f32.partialorder %v2426, 0.0
    %vm3105 = vcmp.ge.f32.partialorder %v2684, 0.0
    %vm3106 = vcmp.ge.f32.partialorder %v2942, 0.0
    %vm3107 = vcmp.ge.f32.partialorder %v2170, 0.0
    %vm3108 = vcmp.ge.f32.partialorder %v2428, 0.0
    %vm3109 = vcmp.ge.f32.partialorder %v2686, 0.0
    %vm3110 = vcmp.ge.f32.partialorder %v2944, 0.0
    %vm3111 = vcmp.ge.f32.partialorder %v2173, 0.0
    %vm3112 = vcmp.ge.f32.partialorder %v2431, 0.0
    %vm3113 = vcmp.ge.f32.partialorder %v2689, 0.0
    %vm3114 = vcmp.ge.f32.partialorder %v2947, 0.0
    %vm3115 = vcmp.ge.f32.partialorder %v2175, 0.0
    %vm3116 = vcmp.ge.f32.partialorder %v2433, 0.0
    %vm3117 = vcmp.ge.f32.partialorder %v2691, 0.0
    %vm3118 = vcmp.ge.f32.partialorder %v2949, 0.0
    %vm3119 = vcmp.ge.f32.partialorder %v2178, 0.0
    %vm3120 = vcmp.ge.f32.partialorder %v2436, 0.0
    %vm3121 = vcmp.ge.f32.partialorder %v2694, 0.0
    %vm3122 = vcmp.ge.f32.partialorder %v2952, 0.0
    %vm3123 = vcmp.ge.f32.partialorder %v2180, 0.0
    %vm3124 = vcmp.ge.f32.partialorder %v2438, 0.0
    %vm3125 = vcmp.ge.f32.partialorder %v2696, 0.0
    %vm3126 = vcmp.ge.f32.partialorder %v2954, 0.0
    %vm3127 = vcmp.ge.f32.partialorder %v2183, 0.0
    %vm3128 = vcmp.ge.f32.partialorder %v2441, 0.0
    %vm3129 = vcmp.ge.f32.partialorder %v2699, 0.0
    %vm3130 = vcmp.ge.f32.partialorder %v2957, 0.0
    %vm3131 = vcmp.ge.f32.partialorder %v2185, 0.0
    %vm3132 = vcmp.ge.f32.partialorder %v2443, 0.0
    %vm3133 = vcmp.ge.f32.partialorder %v2701, 0.0
    %vm3134 = vcmp.ge.f32.partialorder %v2959, 0.0
    %vm3135 = vcmp.ge.f32.partialorder %v2188, 0.0
    %vm3136 = vcmp.ge.f32.partialorder %v2446, 0.0
    %vm3137 = vcmp.ge.f32.partialorder %v2704, 0.0
    %vm3138 = vcmp.ge.f32.partialorder %v2962, 0.0
    %vm3139 = vcmp.ge.f32.partialorder %v2190, 0.0
    %vm3140 = vcmp.ge.f32.partialorder %v2448, 0.0
    %vm3141 = vcmp.ge.f32.partialorder %v2706, 0.0
    %vm3142 = vcmp.ge.f32.partialorder %v2964, 0.0
    %vm3143 = vcmp.ge.f32.partialorder %v2193, 0.0
    %vm3144 = vcmp.ge.f32.partialorder %v2451, 0.0
    %vm3145 = vcmp.ge.f32.partialorder %v2709, 0.0
    %vm3146 = vcmp.ge.f32.partialorder %v2967, 0.0
    %vm3147 = vcmp.ge.f32.partialorder %v2195, 0.0
    %vm3148 = vcmp.ge.f32.partialorder %v2453, 0.0
    %vm3149 = vcmp.ge.f32.partialorder %v2711, 0.0
    %vm3150 = vcmp.ge.f32.partialorder %v2969, 0.0
    %vm3151 = vcmp.ge.f32.partialorder %v2198, 0.0
    %vm3152 = vcmp.ge.f32.partialorder %v2456, 0.0
    %vm3153 = vcmp.ge.f32.partialorder %v2714, 0.0
    %vm3154 = vcmp.ge.f32.partialorder %v2972, 0.0
    %vm3155 = vcmp.ge.f32.partialorder %v2200, 0.0
    %vm3156 = vcmp.ge.f32.partialorder %v2458, 0.0
    %vm3157 = vcmp.ge.f32.partialorder %v2716, 0.0
    %vm3158 = vcmp.ge.f32.partialorder %v2974, 0.0
    %vm3159 = vcmp.ge.f32.partialorder %v2203, 0.0
    %vm3160 = vcmp.ge.f32.partialorder %v2461, 0.0
    %vm3161 = vcmp.ge.f32.partialorder %v2719, 0.0
    %vm3162 = vcmp.ge.f32.partialorder %v2977, 0.0
    %vm3163 = vcmp.ge.f32.partialorder %v2205, 0.0
    %vm3164 = vcmp.ge.f32.partialorder %v2463, 0.0
    %vm3165 = vcmp.ge.f32.partialorder %v2721, 0.0
    %vm3166 = vcmp.ge.f32.partialorder %v2979, 0.0
    %vm3167 = vcmp.ge.f32.partialorder %v2208, 0.0
    %vm3168 = vcmp.ge.f32.partialorder %v2466, 0.0
    %vm3169 = vcmp.ge.f32.partialorder %v2724, 0.0
    %vm3170 = vcmp.ge.f32.partialorder %v2982, 0.0
    %vm3171 = vcmp.ge.f32.partialorder %v2210, 0.0
    %vm3172 = vcmp.ge.f32.partialorder %v2468, 0.0
    %vm3173 = vcmp.ge.f32.partialorder %v2726, 0.0
    %vm3174 = vcmp.ge.f32.partialorder %v2984, 0.0
    %vm3175 = vcmp.ge.f32.partialorder %v2213, 0.0
    %vm3176 = vcmp.ge.f32.partialorder %v2471, 0.0
    %vm3177 = vcmp.ge.f32.partialorder %v2729, 0.0
    %vm3178 = vcmp.ge.f32.partialorder %v2987, 0.0
    %vm3179 = vcmp.ge.f32.partialorder %v2215, 0.0
    %vm3180 = vcmp.ge.f32.partialorder %v2473, 0.0
    %vm3181 = vcmp.ge.f32.partialorder %v2731, 0.0
    %vm3182 = vcmp.ge.f32.partialorder %v2989, 0.0
    %v3183 = vmul.f32 %v2098, 0.01
    %v3184 = vmul.f32 %v2356, 0.01
    %v3185 = vmul.f32 %v2614, 0.01
    %v3186 = vmul.f32 %v2872, 0.01
    %v3187 = vmul.f32 %v2100, 0.01
    %v3188 = vmul.f32 %v2358, 0.01
    %v3189 = vmul.f32 %v2616, 0.01
    %v3190 = vmul.f32 %v2874, 0.01
    %v3191 = vmul.f32 %v2103, 0.01
    %v3192 = vmul.f32 %v2361, 0.01
    %v3193 = vmul.f32 %v2619, 0.01
    %v3194 = vmul.f32 %v2877, 0.01
    %v3195 = vmul.f32 %v2105, 0.01
    %v3196 = vmul.f32 %v2363, 0.01
    %v3197 = vmul.f32 %v2621, 0.01
    %v3198 = vmul.f32 %v2879, 0.01
    %v3199 = vmul.f32 %v2108, 0.01
    %v3200 = vmul.f32 %v2366, 0.01
    %v3201 = vmul.f32 %v2624, 0.01
    %v3202 = vmul.f32 %v2882, 0.01
    %v3203 = vmul.f32 %v2110, 0.01
    %v3204 = vmul.f32 %v2368, 0.01
    %v3205 = vmul.f32 %v2626, 0.01
    %v3206 = vmul.f32 %v2884, 0.01
    %v3207 = vmul.f32 %v2113, 0.01
    %v3208 = vmul.f32 %v2371, 0.01
    %v3209 = vmul.f32 %v2629, 0.01
    %v3210 = vmul.f32 %v2887, 0.01
    %v3211 = vmul.f32 %v2115, 0.01
    %v3212 = vmul.f32 %v2373, 0.01
    %v3213 = vmul.f32 %v2631, 0.01
    %v3214 = vmul.f32 %v2889, 0.01
    %v3215 = vmul.f32 %v2118, 0.01
    %v3216 = vmul.f32 %v2376, 0.01
    %v3217 = vmul.f32 %v2634, 0.01
    %v3218 = vmul.f32 %v2892, 0.01
    %v3219 = vmul.f32 %v2120, 0.01
    %v3220 = vmul.f32 %v2378, 0.01
    %v3221 = vmul.f32 %v2636, 0.01
    %v3222 = vmul.f32 %v2894, 0.01
    %v3223 = vmul.f32 %v2123, 0.01
    %v3224 = vmul.f32 %v2381, 0.01
    %v3225 = vmul.f32 %v2639, 0.01
    %v3226 = vmul.f32 %v2897, 0.01
    %v3227 = vmul.f32 %v2125, 0.01
    %v3228 = vmul.f32 %v2383, 0.01
    %v3229 = vmul.f32 %v2641, 0.01
    %v3230 = vmul.f32 %v2899, 0.01
    %v3231 = vmul.f32 %v2128, 0.01
    %v3232 = vmul.f32 %v2386, 0.01
    %v3233 = vmul.f32 %v2644, 0.01
    %v3234 = vmul.f32 %v2902, 0.01
    %v3235 = vmul.f32 %v2130, 0.01
    %v3236 = vmul.f32 %v2388, 0.01
    %v3237 = vmul.f32 %v2646, 0.01
    %v3238 = vmul.f32 %v2904, 0.01
    %v3239 = vmul.f32 %v2133, 0.01
    %v3240 = vmul.f32 %v2391, 0.01
    %v3241 = vmul.f32 %v2649, 0.01
    %v3242 = vmul.f32 %v2907, 0.01
    %v3243 = vmul.f32 %v2135, 0.01
    %v3244 = vmul.f32 %v2393, 0.01
    %v3245 = vmul.f32 %v2651, 0.01
    %v3246 = vmul.f32 %v2909, 0.01
    %v3247 = vmul.f32 %v2138, 0.01
    %v3248 = vmul.f32 %v2396, 0.01
    %v3249 = vmul.f32 %v2654, 0.01
    %v3250 = vmul.f32 %v2912, 0.01
    %v3251 = vmul.f32 %v2140, 0.01
    %v3252 = vmul.f32 %v2398, 0.01
    %v3253 = vmul.f32 %v2656, 0.01
    %v3254 = vmul.f32 %v2914, 0.01
    %v3255 = vmul.f32 %v2143, 0.01
    %v3256 = vmul.f32 %v2401, 0.01
    %v3257 = vmul.f32 %v2659, 0.01
    %v3258 = vmul.f32 %v2917, 0.01
    %v3259 = vmul.f32 %v2145, 0.01
    %v3260 = vmul.f32 %v2403, 0.01
    %v3261 = vmul.f32 %v2661, 0.01
    %v3262 = vmul.f32 %v2919, 0.01
    %v3263 = vmul.f32 %v2148, 0.01
    %v3264 = vmul.f32 %v2406, 0.01
    %v3265 = vmul.f32 %v2664, 0.01
    %v3266 = vmul.f32 %v2922, 0.01
    %v3267 = vmul.f32 %v2150, 0.01
    %v3268 = vmul.f32 %v2408, 0.01
    %v3269 = vmul.f32 %v2666, 0.01
    %v3270 = vmul.f32 %v2924, 0.01
    %v3271 = vmul.f32 %v2153, 0.01
    %v3272 = vmul.f32 %v2411, 0.01
    %v3273 = vmul.f32 %v2669, 0.01
    %v3274 = vmul.f32 %v2927, 0.01
    %v3275 = vmul.f32 %v2155, 0.01
    %v3276 = vmul.f32 %v2413, 0.01
    %v3277 = vmul.f32 %v2671, 0.01
    %v3278 = vmul.f32 %v2929, 0.01
    %v3279 = vmul.f32 %v2158, 0.01
    %v3280 = vmul.f32 %v2416, 0.01
    %v3281 = vmul.f32 %v2674, 0.01
    %v3282 = vmul.f32 %v2932, 0.01
    %v3283 = vmul.f32 %v2160, 0.01
    %v3284 = vmul.f32 %v2418, 0.01
    %v3285 = vmul.f32 %v2676, 0.01
    %v3286 = vmul.f32 %v2934, 0.01
    %v3287 = vmul.f32 %v2163, 0.01
    %v3288 = vmul.f32 %v2421, 0.01
    %v3289 = vmul.f32 %v2679, 0.01
    %v3290 = vmul.f32 %v2937, 0.01
    %v3291 = vmul.f32 %v2165, 0.01
    %v3292 = vmul.f32 %v2423, 0.01
    %v3293 = vmul.f32 %v2681, 0.01
    %v3294 = vmul.f32 %v2939, 0.01
    %v3295 = vmul.f32 %v2168, 0.01
    %v3296 = vmul.f32 %v2426, 0.01
    %v3297 = vmul.f32 %v2684, 0.01
    %v3298 = vmul.f32 %v2942, 0.01
    %v3299 = vmul.f32 %v2170, 0.01
    %v3300 = vmul.f32 %v2428, 0.01
    %v3301 = vmul.f32 %v2686, 0.01
    %v3302 = vmul.f32 %v2944, 0.01
    %v3303 = vmul.f32 %v2173, 0.01
    %v3304 = vmul.f32 %v2431, 0.01
    %v3305 = vmul.f32 %v2689, 0.01
    %v3306 = vmul.f32 %v2947, 0.01
    %v3307 = vmul.f32 %v2175, 0.01
    %v3308 = vmul.f32 %v2433, 0.01
    %v3309 = vmul.f32 %v2691, 0.01
    %v3310 = vmul.f32 %v2949, 0.01
    %v3311 = vmul.f32 %v2178, 0.01
    %v3312 = vmul.f32 %v2436, 0.01
    %v3313 = vmul.f32 %v2694, 0.01
    %v3314 = vmul.f32 %v2952, 0.01
    %v3315 = vmul.f32 %v2180, 0.01
    %v3316 = vmul.f32 %v2438, 0.01
    %v3317 = vmul.f32 %v2696, 0.01
    %v3318 = vmul.f32 %v2954, 0.01
    %v3319 = vmul.f32 %v2183, 0.01
    %v3320 = vmul.f32 %v2441, 0.01
    %v3321 = vmul.f32 %v2699, 0.01
    %v3322 = vmul.f32 %v2957, 0.01
    %v3323 = vmul.f32 %v2185, 0.01
    %v3324 = vmul.f32 %v2443, 0.01
    %v3325 = vmul.f32 %v2701, 0.01
    %v3326 = vmul.f32 %v2959, 0.01
    %v3327 = vmul.f32 %v2188, 0.01
    %v3328 = vmul.f32 %v2446, 0.01
    %v3329 = vmul.f32 %v2704, 0.01
    %v3330 = vmul.f32 %v2962, 0.01
    %v3331 = vmul.f32 %v2190, 0.01
    %v3332 = vmul.f32 %v2448, 0.01
    %v3333 = vmul.f32 %v2706, 0.01
    %v3334 = vmul.f32 %v2964, 0.01
    %v3335 = vmul.f32 %v2193, 0.01
    %v3336 = vmul.f32 %v2451, 0.01
    %v3337 = vmul.f32 %v2709, 0.01
    %v3338 = vmul.f32 %v2967, 0.01
    %v3339 = vmul.f32 %v2195, 0.01
    %v3340 = vmul.f32 %v2453, 0.01
    %v3341 = vmul.f32 %v2711, 0.01
    %v3342 = vmul.f32 %v2969, 0.01
    %v3343 = vmul.f32 %v2198, 0.01
    %v3344 = vmul.f32 %v2456, 0.01
    %v3345 = vmul.f32 %v2714, 0.01
    %v3346 = vmul.f32 %v2972, 0.01
    %v3347 = vmul.f32 %v2200, 0.01
    %v3348 = vmul.f32 %v2458, 0.01
    %v3349 = vmul.f32 %v2716, 0.01
    %v3350 = vmul.f32 %v2974, 0.01
    %v3351 = vmul.f32 %v2203, 0.01
    %v3352 = vmul.f32 %v2461, 0.01
    %v3353 = vmul.f32 %v2719, 0.01
    %v3354 = vmul.f32 %v2977, 0.01
    %v3355 = vmul.f32 %v2205, 0.01
    %v3356 = vmul.f32 %v2463, 0.01
    %v3357 = vmul.f32 %v2721, 0.01
    %v3358 = vmul.f32 %v2979, 0.01
    %v3359 = vmul.f32 %v2208, 0.01
    %v3360 = vmul.f32 %v2466, 0.01
    %v3361 = vmul.f32 %v2724, 0.01
    %v3362 = vmul.f32 %v2982, 0.01
    %v3363 = vmul.f32 %v2210, 0.01
    %v3364 = vmul.f32 %v2468, 0.01
    %v3365 = vmul.f32 %v2726, 0.01
    %v3366 = vmul.f32 %v2984, 0.01
    %v3367 = vmul.f32 %v2213, 0.01
    %v3368 = vmul.f32 %v2471, 0.01
    %v3369 = vmul.f32 %v2729, 0.01
    %v3370 = vmul.f32 %v2987, 0.01
    %v3371 = vmul.f32 %v2215, 0.01
    %v3372 = vmul.f32 %v2473, 0.01
    %v3373 = vmul.f32 %v2731, 0.01
    %v3374 = vmul.f32 %v2989, 0.01
    %v3375 = vsel %vm2991, %v2098, %v3183
    %v3376 = vsel %vm2992, %v2356, %v3184
    %v3377 = vsel %vm2993, %v2614, %v3185
    %v3378 = vsel %vm2994, %v2872, %v3186
    %v3379 = vsel %vm2995, %v2100, %v3187
    %v3380 = vsel %vm2996, %v2358, %v3188
    %v3381 = vsel %vm2997, %v2616, %v3189
    %v3382 = vsel %vm2998, %v2874, %v3190
    %v3383 = vsel %vm2999, %v2103, %v3191
    %v3384 = vsel %vm3000, %v2361, %v3192
    %v3385 = vsel %vm3001, %v2619, %v3193
    %v3386 = vsel %vm3002, %v2877, %v3194
    %v3387 = vsel %vm3003, %v2105, %v3195
    %v3388 = vsel %vm3004, %v2363, %v3196
    %v3389 = vsel %vm3005, %v2621, %v3197
    %v3390 = vsel %vm3006, %v2879, %v3198
    %v3391 = vsel %vm3007, %v2108, %v3199
    %v3392 = vsel %vm3008, %v2366, %v3200
    %v3393 = vsel %vm3009, %v2624, %v3201
    %v3394 = vsel %vm3010, %v2882, %v3202
    %v3395 = vsel %vm3011, %v2110, %v3203
    %v3396 = vsel %vm3012, %v2368, %v3204
    %v3397 = vsel %vm3013, %v2626, %v3205
    %v3398 = vsel %vm3014, %v2884, %v3206
    %v3399 = vsel %vm3015, %v2113, %v3207
    %v3400 = vsel %vm3016, %v2371, %v3208
    %v3401 = vsel %vm3017, %v2629, %v3209
    %v3402 = vsel %vm3018, %v2887, %v3210
    %v3403 = vsel %vm3019, %v2115, %v3211
    %v3404 = vsel %vm3020, %v2373, %v3212
    %v3405 = vsel %vm3021, %v2631, %v3213
    %v3406 = vsel %vm3022, %v2889, %v3214
    %v3407 = vsel %vm3023, %v2118, %v3215
    %v3408 = vsel %vm3024, %v2376, %v3216
    %v3409 = vsel %vm3025, %v2634, %v3217
    %v3410 = vsel %vm3026, %v2892, %v3218
    %v3411 = vsel %vm3027, %v2120, %v3219
    %v3412 = vsel %vm3028, %v2378, %v3220
    %v3413 = vsel %vm3029, %v2636, %v3221
    %v3414 = vsel %vm3030, %v2894, %v3222
    %v3415 = vsel %vm3031, %v2123, %v3223
    %v3416 = vsel %vm3032, %v2381, %v3224
    %v3417 = vsel %vm3033, %v2639, %v3225
    %v3418 = vsel %vm3034, %v2897, %v3226
    %v3419 = vsel %vm3035, %v2125, %v3227
    %v3420 = vsel %vm3036, %v2383, %v3228
    %v3421 = vsel %vm3037, %v2641, %v3229
    %v3422 = vsel %vm3038, %v2899, %v3230
    %v3423 = vsel %vm3039, %v2128, %v3231
    %v3424 = vsel %vm3040, %v2386, %v3232
    %v3425 = vsel %vm3041, %v2644, %v3233
    %v3426 = vsel %vm3042, %v2902, %v3234
    %v3427 = vsel %vm3043, %v2130, %v3235
    %v3428 = vsel %vm3044, %v2388, %v3236
    %v3429 = vsel %vm3045, %v2646, %v3237
    %v3430 = vsel %vm3046, %v2904, %v3238
    %v3431 = vsel %vm3047, %v2133, %v3239
    %v3432 = vsel %vm3048, %v2391, %v3240
    %v3433 = vsel %vm3049, %v2649, %v3241
    %v3434 = vsel %vm3050, %v2907, %v3242
    %v3435 = vsel %vm3051, %v2135, %v3243
    %v3436 = vsel %vm3052, %v2393, %v3244
    %v3437 = vsel %vm3053, %v2651, %v3245
    %v3438 = vsel %vm3054, %v2909, %v3246
    %v3439 = vsel %vm3055, %v2138, %v3247
    %v3440 = vsel %vm3056, %v2396, %v3248
    %v3441 = vsel %vm3057, %v2654, %v3249
    %v3442 = vsel %vm3058, %v2912, %v3250
    %v3443 = vsel %vm3059, %v2140, %v3251
    %v3444 = vsel %vm3060, %v2398, %v3252
    %v3445 = vsel %vm3061, %v2656, %v3253
    %v3446 = vsel %vm3062, %v2914, %v3254
    %v3447 = vsel %vm3063, %v2143, %v3255
    %v3448 = vsel %vm3064, %v2401, %v3256
    %v3449 = vsel %vm3065, %v2659, %v3257
    %v3450 = vsel %vm3066, %v2917, %v3258
    %v3451 = vsel %vm3067, %v2145, %v3259
    %v3452 = vsel %vm3068, %v2403, %v3260
    %v3453 = vsel %vm3069, %v2661, %v3261
    %v3454 = vsel %vm3070, %v2919, %v3262
    %v3455 = vsel %vm3071, %v2148, %v3263
    %v3456 = vsel %vm3072, %v2406, %v3264
    %v3457 = vsel %vm3073, %v2664, %v3265
    %v3458 = vsel %vm3074, %v2922, %v3266
    %v3459 = vsel %vm3075, %v2150, %v3267
    %v3460 = vsel %vm3076, %v2408, %v3268
    %v3461 = vsel %vm3077, %v2666, %v3269
    %v3462 = vsel %vm3078, %v2924, %v3270
    %v3463 = vsel %vm3079, %v2153, %v3271
    %v3464 = vsel %vm3080, %v2411, %v3272
    %v3465 = vsel %vm3081, %v2669, %v3273
    %v3466 = vsel %vm3082, %v2927, %v3274
    %v3467 = vsel %vm3083, %v2155, %v3275
    %v3468 = vsel %vm3084, %v2413, %v3276
    %v3469 = vsel %vm3085, %v2671, %v3277
    %v3470 = vsel %vm3086, %v2929, %v3278
    %v3471 = vsel %vm3087, %v2158, %v3279
    %v3472 = vsel %vm3088, %v2416, %v3280
    %v3473 = vsel %vm3089, %v2674, %v3281
    %v3474 = vsel %vm3090, %v2932, %v3282
    %v3475 = vsel %vm3091, %v2160, %v3283
    %v3476 = vsel %vm3092, %v2418, %v3284
    %v3477 = vsel %vm3093, %v2676, %v3285
    %v3478 = vsel %vm3094, %v2934, %v3286
    %v3479 = vsel %vm3095, %v2163, %v3287
    %v3480 = vsel %vm3096, %v2421, %v3288
    %v3481 = vsel %vm3097, %v2679, %v3289
    %v3482 = vsel %vm3098, %v2937, %v3290
    %v3483 = vsel %vm3099, %v2165, %v3291
    %v3484 = vsel %vm3100, %v2423, %v3292
    %v3485 = vsel %vm3101, %v2681, %v3293
    %v3486 = vsel %vm3102, %v2939, %v3294
    %v3487 = vsel %vm3103, %v2168, %v3295
    %v3488 = vsel %vm3104, %v2426, %v3296
    %v3489 = vsel %vm3105, %v2684, %v3297
    %v3490 = vsel %vm3106, %v2942, %v3298
    %v3491 = vsel %vm3107, %v2170, %v3299
    %v3492 = vsel %vm3108, %v2428, %v3300
    %v3493 = vsel %vm3109, %v2686, %v3301
    %v3494 = vsel %vm3110, %v2944, %v3302
    %v3495 = vsel %vm3111, %v2173, %v3303
    %v3496 = vsel %vm3112, %v2431, %v3304
    %v3497 = vsel %vm3113, %v2689, %v3305
    %v3498 = vsel %vm3114, %v2947, %v3306
    %v3499 = vsel %vm3115, %v2175, %v3307
    %v3500 = vsel %vm3116, %v2433, %v3308
    %v3501 = vsel %vm3117, %v2691, %v3309
    %v3502 = vsel %vm3118, %v2949, %v3310
    %v3503 = vsel %vm3119, %v2178, %v3311
    %v3504 = vsel %vm3120, %v2436, %v3312
    %v3505 = vsel %vm3121, %v2694, %v3313
    %v3506 = vsel %vm3122, %v2952, %v3314
    %v3507 = vsel %vm3123, %v2180, %v3315
    %v3508 = vsel %vm3124, %v2438, %v3316
    %v3509 = vsel %vm3125, %v2696, %v3317
    %v3510 = vsel %vm3126, %v2954, %v3318
    %v3511 = vsel %vm3127, %v2183, %v3319
    %v3512 = vsel %vm3128, %v2441, %v3320
    %v3513 = vsel %vm3129, %v2699, %v3321
    %v3514 = vsel %vm3130, %v2957, %v3322
    %v3515 = vsel %vm3131, %v2185, %v3323
    %v3516 = vsel %vm3132, %v2443, %v3324
    %v3517 = vsel %vm3133, %v2701, %v3325
    %v3518 = vsel %vm3134, %v2959, %v3326
    %v3519 = vsel %vm3135, %v2188, %v3327
    %v3520 = vsel %vm3136, %v2446, %v3328
    %v3521 = vsel %vm3137, %v2704, %v3329
    %v3522 = vsel %vm3138, %v2962, %v3330
    %v3523 = vsel %vm3139, %v2190, %v3331
    %v3524 = vsel %vm3140, %v2448, %v3332
    %v3525 = vsel %vm3141, %v2706, %v3333
    %v3526 = vsel %vm3142, %v2964, %v3334
    %v3527 = vsel %vm3143, %v2193, %v3335
    %v3528 = vsel %vm3144, %v2451, %v3336
    %v3529 = vsel %vm3145, %v2709, %v3337
    %v3530 = vsel %vm3146, %v2967, %v3338
    %v3531 = vsel %vm3147, %v2195, %v3339
    %v3532 = vsel %vm3148, %v2453, %v3340
    %v3533 = vsel %vm3149, %v2711, %v3341
    %v3534 = vsel %vm3150, %v2969, %v3342
    %v3535 = vsel %vm3151, %v2198, %v3343
    %v3536 = vsel %vm3152, %v2456, %v3344
    %v3537 = vsel %vm3153, %v2714, %v3345
    %v3538 = vsel %vm3154, %v2972, %v3346
    %v3539 = vsel %vm3155, %v2200, %v3347
    %v3540 = vsel %vm3156, %v2458, %v3348
    %v3541 = vsel %vm3157, %v2716, %v3349
    %v3542 = vsel %vm3158, %v2974, %v3350
    %v3543 = vsel %vm3159, %v2203, %v3351
    %v3544 = vsel %vm3160, %v2461, %v3352
    %v3545 = vsel %vm3161, %v2719, %v3353
    %v3546 = vsel %vm3162, %v2977, %v3354
    %v3547 = vsel %vm3163, %v2205, %v3355
    %v3548 = vsel %vm3164, %v2463, %v3356
    %v3549 = vsel %vm3165, %v2721, %v3357
    %v3550 = vsel %vm3166, %v2979, %v3358
    %v3551 = vsel %vm3167, %v2208, %v3359
    %v3552 = vsel %vm3168, %v2466, %v3360
    %v3553 = vsel %vm3169, %v2724, %v3361
    %v3554 = vsel %vm3170, %v2982, %v3362
    %v3555 = vsel %vm3171, %v2210, %v3363
    %v3556 = vsel %vm3172, %v2468, %v3364
    %v3557 = vsel %vm3173, %v2726, %v3365
    %v3558 = vsel %vm3174, %v2984, %v3366
    %v3559 = vsel %vm3175, %v2213, %v3367
    %v3560 = vsel %vm3176, %v2471, %v3368
    %v3561 = vsel %vm3177, %v2729, %v3369
    %v3562 = vsel %vm3178, %v2987, %v3370
    %v3563 = vsel %vm3179, %v2215, %v3371
    %v3564 = vsel %vm3180, %v2473, %v3372
    %v3565 = vsel %vm3181, %v2731, %v3373
    %v3566 = vsel %vm3182, %v2989, %v3374
    %v3567 = vpack.c.bf16 %v3379, %v3375
    %v3568 = vpack.c.bf16 %v3380, %v3376
    %v3569 = vpack.c.bf16 %v3381, %v3377
    %v3570 = vpack.c.bf16 %v3382, %v3378
    %v3571 = vpack.c.bf16 %v3387, %v3383
    %v3572 = vpack.c.bf16 %v3388, %v3384
    %v3573 = vpack.c.bf16 %v3389, %v3385
    %v3574 = vpack.c.bf16 %v3390, %v3386
    %v3575 = vpack.c.bf16 %v3395, %v3391
    %v3576 = vpack.c.bf16 %v3396, %v3392
    %v3577 = vpack.c.bf16 %v3397, %v3393
    %v3578 = vpack.c.bf16 %v3398, %v3394
    %v3579 = vpack.c.bf16 %v3403, %v3399
    %v3580 = vpack.c.bf16 %v3404, %v3400
    %v3581 = vpack.c.bf16 %v3405, %v3401
    %v3582 = vpack.c.bf16 %v3406, %v3402
    %v3583 = vpack.c.bf16 %v3411, %v3407
    %v3584 = vpack.c.bf16 %v3412, %v3408
    %v3585 = vpack.c.bf16 %v3413, %v3409
    %v3586 = vpack.c.bf16 %v3414, %v3410
    %v3587 = vpack.c.bf16 %v3419, %v3415
    %v3588 = vpack.c.bf16 %v3420, %v3416
    %v3589 = vpack.c.bf16 %v3421, %v3417
    %v3590 = vpack.c.bf16 %v3422, %v3418
    %v3591 = vpack.c.bf16 %v3427, %v3423
    %v3592 = vpack.c.bf16 %v3428, %v3424
    %v3593 = vpack.c.bf16 %v3429, %v3425
    %v3594 = vpack.c.bf16 %v3430, %v3426
    %v3595 = vpack.c.bf16 %v3435, %v3431
    %v3596 = vpack.c.bf16 %v3436, %v3432
    %v3597 = vpack.c.bf16 %v3437, %v3433
    %v3598 = vpack.c.bf16 %v3438, %v3434
    %v3599 = vpack.c.bf16 %v3443, %v3439
    %v3600 = vpack.c.bf16 %v3444, %v3440
    %v3601 = vpack.c.bf16 %v3445, %v3441
    %v3602 = vpack.c.bf16 %v3446, %v3442
    %v3603 = vpack.c.bf16 %v3451, %v3447
    %v3604 = vpack.c.bf16 %v3452, %v3448
    %v3605 = vpack.c.bf16 %v3453, %v3449
    %v3606 = vpack.c.bf16 %v3454, %v3450
    %v3607 = vpack.c.bf16 %v3459, %v3455
    %v3608 = vpack.c.bf16 %v3460, %v3456
    %v3609 = vpack.c.bf16 %v3461, %v3457
    %v3610 = vpack.c.bf16 %v3462, %v3458
    %v3611 = vpack.c.bf16 %v3467, %v3463
    %v3612 = vpack.c.bf16 %v3468, %v3464
    %v3613 = vpack.c.bf16 %v3469, %v3465
    %v3614 = vpack.c.bf16 %v3470, %v3466
    %v3615 = vpack.c.bf16 %v3475, %v3471
    %v3616 = vpack.c.bf16 %v3476, %v3472
    %v3617 = vpack.c.bf16 %v3477, %v3473
    %v3618 = vpack.c.bf16 %v3478, %v3474
    %v3619 = vpack.c.bf16 %v3483, %v3479
    %v3620 = vpack.c.bf16 %v3484, %v3480
    %v3621 = vpack.c.bf16 %v3485, %v3481
    %v3622 = vpack.c.bf16 %v3486, %v3482
    %v3623 = vpack.c.bf16 %v3491, %v3487
    %v3624 = vpack.c.bf16 %v3492, %v3488
    %v3625 = vpack.c.bf16 %v3493, %v3489
    %v3626 = vpack.c.bf16 %v3494, %v3490
    %v3627 = vpack.c.bf16 %v3499, %v3495
    %v3628 = vpack.c.bf16 %v3500, %v3496
    %v3629 = vpack.c.bf16 %v3501, %v3497
    %v3630 = vpack.c.bf16 %v3502, %v3498
    %v3631 = vpack.c.bf16 %v3507, %v3503
    %v3632 = vpack.c.bf16 %v3508, %v3504
    %v3633 = vpack.c.bf16 %v3509, %v3505
    %v3634 = vpack.c.bf16 %v3510, %v3506
    %v3635 = vpack.c.bf16 %v3515, %v3511
    %v3636 = vpack.c.bf16 %v3516, %v3512
    %v3637 = vpack.c.bf16 %v3517, %v3513
    %v3638 = vpack.c.bf16 %v3518, %v3514
    %v3639 = vpack.c.bf16 %v3523, %v3519
    %v3640 = vpack.c.bf16 %v3524, %v3520
    %v3641 = vpack.c.bf16 %v3525, %v3521
    %v3642 = vpack.c.bf16 %v3526, %v3522
    %v3643 = vpack.c.bf16 %v3531, %v3527
    %v3644 = vpack.c.bf16 %v3532, %v3528
    %v3645 = vpack.c.bf16 %v3533, %v3529
    %v3646 = vpack.c.bf16 %v3534, %v3530
    %v3647 = vpack.c.bf16 %v3539, %v3535
    %v3648 = vpack.c.bf16 %v3540, %v3536
    %v3649 = vpack.c.bf16 %v3541, %v3537
    %v3650 = vpack.c.bf16 %v3542, %v3538
    %v3651 = vpack.c.bf16 %v3547, %v3543
    %v3652 = vpack.c.bf16 %v3548, %v3544
    %v3653 = vpack.c.bf16 %v3549, %v3545
    %v3654 = vpack.c.bf16 %v3550, %v3546
    %v3655 = vpack.c.bf16 %v3555, %v3551
    %v3656 = vpack.c.bf16 %v3556, %v3552
    %v3657 = vpack.c.bf16 %v3557, %v3553
    %v3658 = vpack.c.bf16 %v3558, %v3554
    %v3659 = vpack.c.bf16 %v3563, %v3559
    %v3660 = vpack.c.bf16 %v3564, %v3560
    %v3661 = vpack.c.bf16 %v3565, %v3561
    %v3662 = vpack.c.bf16 %v3566, %v3562
    %v3663 = vld [vmem:[%s7] sm:$0xf]
    %v3664 = vld [vmem:[%s7 + $0x4] sm:$0xf]
    %v3665 = vld [vmem:[%s7 + $0x8] sm:$0xf]
    %v3666 = vld [vmem:[%s7 + $0xc] sm:$0xf]
    %v3667 = vld [vmem:[%s7 + $0x10] sm:$0xf]
    %v3668 = vld [vmem:[%s7 + $0x14] sm:$0xf]
    %v3669 = vld [vmem:[%s7 + $0x18] sm:$0xf]
    %v3670 = vld [vmem:[%s7 + $0x1c] sm:$0xf]
    %v3671 = vld [vmem:[%s7 + $0x20] sm:$0xf]
    %v3672 = vld [vmem:[%s7 + $0x24] sm:$0xf]
    %v3673 = vld [vmem:[%s7 + $0x28] sm:$0xf]
    %v3674 = vld [vmem:[%s7 + $0x2c] sm:$0xf]
    %v3675 = vld [vmem:[%s7 + $0x30] sm:$0xf]
    %v3676 = vld [vmem:[%s7 + $0x34] sm:$0xf]
    %v3677 = vld [vmem:[%s7 + $0x38] sm:$0xf]
    %v3678 = vld [vmem:[%s7 + $0x3c] sm:$0xf]
    %v3679 = vld [vmem:[%s7 + $0x40] sm:$0xf]
    %v3680 = vld [vmem:[%s7 + $0x44] sm:$0xf]
    %v3681 = vld [vmem:[%s7 + $0x48] sm:$0xf]
    %v3682 = vld [vmem:[%s7 + $0x4c] sm:$0xf]
    %v3683 = vld [vmem:[%s7 + $0x50] sm:$0xf]
    %v3684 = vld [vmem:[%s7 + $0x54] sm:$0xf]
    %v3685 = vld [vmem:[%s7 + $0x58] sm:$0xf]
    %v3686 = vld [vmem:[%s7 + $0x5c] sm:$0xf]
    %v3687 = vld [vmem:[%s7 + $0x60] sm:$0xf]
    %v3688 = vld [vmem:[%s7 + $0x64] sm:$0xf]
    %v3689 = vld [vmem:[%s7 + $0x68] sm:$0xf]
    %v3690 = vld [vmem:[%s7 + $0x6c] sm:$0xf]
    %v3691 = vld [vmem:[%s7 + $0x70] sm:$0xf]
    %v3692 = vld [vmem:[%s7 + $0x74] sm:$0xf]
    %v3693 = vld [vmem:[%s7 + $0x78] sm:$0xf]
    %v3694 = vld [vmem:[%s7 + $0x7c] sm:$0xf]
    %v3695 = vld [vmem:[%s7 + $0x80] sm:$0xf]
    %v3696 = vld [vmem:[%s7 + $0x84] sm:$0xf]
    %v3697 = vld [vmem:[%s7 + $0x88] sm:$0xf]
    %v3698 = vld [vmem:[%s7 + $0x8c] sm:$0xf]
    %v3699 = vld [vmem:[%s7 + $0x90] sm:$0xf]
    %v3700 = vld [vmem:[%s7 + $0x94] sm:$0xf]
    %v3701 = vld [vmem:[%s7 + $0x98] sm:$0xf]
    %v3702 = vld [vmem:[%s7 + $0x9c] sm:$0xf]
    %v3703 = vld [vmem:[%s7 + $0xa0] sm:$0xf]
    %v3704 = vld [vmem:[%s7 + $0xa4] sm:$0xf]
    %v3705 = vld [vmem:[%s7 + $0xa8] sm:$0xf]
    %v3706 = vld [vmem:[%s7 + $0xac] sm:$0xf]
    %v3707 = vld [vmem:[%s7 + $0xb0] sm:$0xf]
    %v3708 = vld [vmem:[%s7 + $0xb4] sm:$0xf]
    %v3709 = vld [vmem:[%s7 + $0xb8] sm:$0xf]
    %v3710 = vld [vmem:[%s7 + $0xbc] sm:$0xf]
    %v3711 = vld [vmem:[%s7 + $0xc0] sm:$0xf]
    %v3712 = vld [vmem:[%s7 + $0xc4] sm:$0xf]
    %v3713 = vld [vmem:[%s7 + $0xc8] sm:$0xf]
    %v3714 = vld [vmem:[%s7 + $0xcc] sm:$0xf]
    %v3715 = vld [vmem:[%s7 + $0xd0] sm:$0xf]
    %v3716 = vld [vmem:[%s7 + $0xd4] sm:$0xf]
    %v3717 = vld [vmem:[%s7 + $0xd8] sm:$0xf]
    %v3718 = vld [vmem:[%s7 + $0xdc] sm:$0xf]
    %v3719 = vld [vmem:[%s7 + $0xe0] sm:$0xf]
    %v3720 = vld [vmem:[%s7 + $0xe4] sm:$0xf]
    %v3721 = vld [vmem:[%s7 + $0xe8] sm:$0xf]
    %v3722 = vld [vmem:[%s7 + $0xec] sm:$0xf]
    %v3723 = vld [vmem:[%s7 + $0xf0] sm:$0xf]
    %v3724 = vld [vmem:[%s7 + $0xf4] sm:$0xf]
    %v3725 = vld [vmem:[%s7 + $0xf8] sm:$0xf]
    %v3726 = vld [vmem:[%s7 + $0xfc] sm:$0xf]
    %v3727 = vld [vmem:[%s8] sm:$0x1]
    %v3729 = vperm.slane %v3727, 0
    %v3795 = vunpack.c.l.b16 %v3663
    %v3796 = vunpack.c.l.b16 %v3664
    %v3797 = vunpack.c.l.b16 %v3665
    %v3798 = vunpack.c.l.b16 %v3666
    %v3799 = vunpack.c.l.b16 %v3667
    %v3800 = vunpack.c.l.b16 %v3668
    %v3801 = vunpack.c.l.b16 %v3669
    %v3802 = vunpack.c.l.b16 %v3670
    %v3803 = vunpack.c.l.b16 %v3671
    %v3804 = vunpack.c.l.b16 %v3672
    %v3805 = vunpack.c.l.b16 %v3673
    %v3806 = vunpack.c.l.b16 %v3674
    %v3807 = vunpack.c.l.b16 %v3675
    %v3808 = vunpack.c.l.b16 %v3676
    %v3809 = vunpack.c.l.b16 %v3677
    %v3810 = vunpack.c.l.b16 %v3678
    %v3811 = vunpack.c.l.b16 %v3679
    %v3812 = vunpack.c.l.b16 %v3680
    %v3813 = vunpack.c.l.b16 %v3681
    %v3814 = vunpack.c.l.b16 %v3682
    %v3815 = vunpack.c.l.b16 %v3683
    %v3816 = vunpack.c.l.b16 %v3684
    %v3817 = vunpack.c.l.b16 %v3685
    %v3818 = vunpack.c.l.b16 %v3686
    %v3819 = vunpack.c.l.b16 %v3687
    %v3820 = vunpack.c.l.b16 %v3688
    %v3821 = vunpack.c.l.b16 %v3689
    %v3822 = vunpack.c.l.b16 %v3690
    %v3823 = vunpack.c.l.b16 %v3691
    %v3824 = vunpack.c.l.b16 %v3692
    %v3825 = vunpack.c.l.b16 %v3693
    %v3826 = vunpack.c.l.b16 %v3694
    %v3827 = vunpack.c.l.b16 %v3695
    %v3828 = vunpack.c.l.b16 %v3696
    %v3829 = vunpack.c.l.b16 %v3697
    %v3830 = vunpack.c.l.b16 %v3698
    %v3831 = vunpack.c.l.b16 %v3699
    %v3832 = vunpack.c.l.b16 %v3700
    %v3833 = vunpack.c.l.b16 %v3701
    %v3834 = vunpack.c.l.b16 %v3702
    %v3835 = vunpack.c.l.b16 %v3703
    %v3836 = vunpack.c.l.b16 %v3704
    %v3837 = vunpack.c.l.b16 %v3705
    %v3838 = vunpack.c.l.b16 %v3706
    %v3839 = vunpack.c.l.b16 %v3707
    %v3840 = vunpack.c.l.b16 %v3708
    %v3841 = vunpack.c.l.b16 %v3709
    %v3842 = vunpack.c.l.b16 %v3710
    %v3843 = vunpack.c.l.b16 %v3711
    %v3844 = vunpack.c.l.b16 %v3712
    %v3845 = vunpack.c.l.b16 %v3713
    %v3846 = vunpack.c.l.b16 %v3714
    %v3847 = vunpack.c.l.b16 %v3715
    %v3848 = vunpack.c.l.b16 %v3716
    %v3849 = vunpack.c.l.b16 %v3717
    %v3850 = vunpack.c.l.b16 %v3718
    %v3851 = vunpack.c.l.b16 %v3719
    %v3852 = vunpack.c.l.b16 %v3720
    %v3853 = vunpack.c.l.b16 %v3721
    %v3854 = vunpack.c.l.b16 %v3722
    %v3855 = vunpack.c.l.b16 %v3723
    %v3856 = vunpack.c.l.b16 %v3724
    %v3857 = vunpack.c.l.b16 %v3725
    %v3858 = vunpack.c.l.b16 %v3726
    %v3859 = vpack.c.b16 %v3796, %v3795
    %v3860 = vpack.c.b16 %v3798, %v3797
    %v3861 = vpack.c.b16 %v3800, %v3799
    %v3862 = vpack.c.b16 %v3802, %v3801
    %v3863 = vpack.c.b16 %v3804, %v3803
    %v3864 = vpack.c.b16 %v3806, %v3805
    %v3865 = vpack.c.b16 %v3808, %v3807
    %v3866 = vpack.c.b16 %v3810, %v3809
    %v3867 = vpack.c.b16 %v3812, %v3811
    %v3868 = vpack.c.b16 %v3814, %v3813
    %v3869 = vpack.c.b16 %v3816, %v3815
    %v3870 = vpack.c.b16 %v3818, %v3817
    %v3871 = vpack.c.b16 %v3820, %v3819
    %v3872 = vpack.c.b16 %v3822, %v3821
    %v3873 = vpack.c.b16 %v3824, %v3823
    %v3874 = vpack.c.b16 %v3826, %v3825
    %v3875 = vpack.c.b16 %v3828, %v3827
    %v3876 = vpack.c.b16 %v3830, %v3829
    %v3877 = vpack.c.b16 %v3832, %v3831
    %v3878 = vpack.c.b16 %v3834, %v3833
    %v3879 = vpack.c.b16 %v3836, %v3835
    %v3880 = vpack.c.b16 %v3838, %v3837
    %v3881 = vpack.c.b16 %v3840, %v3839
    %v3882 = vpack.c.b16 %v3842, %v3841
    %v3883 = vpack.c.b16 %v3844, %v3843
    %v3884 = vpack.c.b16 %v3846, %v3845
    %v3885 = vpack.c.b16 %v3848, %v3847
    %v3886 = vpack.c.b16 %v3850, %v3849
    %v3887 = vpack.c.b16 %v3852, %v3851
    %v3888 = vpack.c.b16 %v3854, %v3853
    %v3889 = vpack.c.b16 %v3856, %v3855
    %v3890 = vpack.c.b16 %v3858, %v3857
    %3923 = vmatpush.bf16.msra.mxu0 %v3866
    %3924 = vmatpush.bf16.msra.mxu0 %v3865
    %3925 = vmatpush.bf16.msra.mxu0 %v3864
    %3926 = vmatpush.bf16.msra.mxu0 %v3863
    %3927 = vmatpush.bf16.msra.mxu0 %v3862
    %3928 = vmatpush.bf16.msra.mxu0 %v3861
    %3929 = vmatpush.bf16.msra.mxu0 %v3860
    %3930 = vmatpush.bf16.msra.mxu0 %v3859
    %3931 = vmatmul.bf16.gmra.mxu0 %v3567
    %v3932 = vpop.f32.mrf.mxu0
    %v3933 = vadd.f32 %v3729, %v3932
    %v3934 = vpop.f32.mrf.mxu0
    %v3935 = vadd.f32 %v3729, %v3934
    %3936 = vmatmul.bf16.gmra.mxu0 %v3571
    %v3937 = vpop.f32.mrf.mxu0
    %v3938 = vadd.f32 %v3729, %v3937
    %v3939 = vpop.f32.mrf.mxu0
    %v3940 = vadd.f32 %v3729, %v3939
    %3941 = vmatmul.bf16.gmra.mxu0 %v3575
    %v3942 = vpop.f32.mrf.mxu0
    %v3943 = vadd.f32 %v3729, %v3942
    %v3944 = vpop.f32.mrf.mxu0
    %v3945 = vadd.f32 %v3729, %v3944
    %3946 = vmatmul.bf16.gmra.mxu0 %v3579
    %v3947 = vpop.f32.mrf.mxu0
    %v3948 = vadd.f32 %v3729, %v3947
    %v3949 = vpop.f32.mrf.mxu0
    %v3950 = vadd.f32 %v3729, %v3949
    %3951 = vmatmul.bf16.gmra.mxu0 %v3583
    %v3952 = vpop.f32.mrf.mxu0
    %v3953 = vadd.f32 %v3729, %v3952
    %v3954 = vpop.f32.mrf.mxu0
    %v3955 = vadd.f32 %v3729, %v3954
    %3956 = vmatmul.bf16.gmra.mxu0 %v3587
    %v3957 = vpop.f32.mrf.mxu0
    %v3958 = vadd.f32 %v3729, %v3957
    %v3959 = vpop.f32.mrf.mxu0
    %v3960 = vadd.f32 %v3729, %v3959
    %3961 = vmatmul.bf16.gmra.mxu0 %v3591
    %v3962 = vpop.f32.mrf.mxu0
    %v3963 = vadd.f32 %v3729, %v3962
    %v3964 = vpop.f32.mrf.mxu0
    %v3965 = vadd.f32 %v3729, %v3964
    %3966 = vmatmul.bf16.gmra.mxu0 %v3595
    %v3967 = vpop.f32.mrf.mxu0
    %v3968 = vadd.f32 %v3729, %v3967
    %v3969 = vpop.f32.mrf.mxu0
    %v3970 = vadd.f32 %v3729, %v3969
    %3971 = vmatmul.bf16.gmra.mxu0 %v3599
    %v3972 = vpop.f32.mrf.mxu0
    %v3973 = vadd.f32 %v3729, %v3972
    %v3974 = vpop.f32.mrf.mxu0
    %v3975 = vadd.f32 %v3729, %v3974
    %3976 = vmatmul.bf16.gmra.mxu0 %v3603
    %v3977 = vpop.f32.mrf.mxu0
    %v3978 = vadd.f32 %v3729, %v3977
    %v3979 = vpop.f32.mrf.mxu0
    %v3980 = vadd.f32 %v3729, %v3979
    %3981 = vmatmul.bf16.gmra.mxu0 %v3607
    %v3982 = vpop.f32.mrf.mxu0
    %v3983 = vadd.f32 %v3729, %v3982
    %v3984 = vpop.f32.mrf.mxu0
    %v3985 = vadd.f32 %v3729, %v3984
    %3986 = vmatmul.bf16.gmra.mxu0 %v3611
    %v3987 = vpop.f32.mrf.mxu0
    %v3988 = vadd.f32 %v3729, %v3987
    %v3989 = vpop.f32.mrf.mxu0
    %v3990 = vadd.f32 %v3729, %v3989
    %3991 = vmatmul.bf16.gmra.mxu0 %v3615
    %v3992 = vpop.f32.mrf.mxu0
    %v3993 = vadd.f32 %v3729, %v3992
    %v3994 = vpop.f32.mrf.mxu0
    %v3995 = vadd.f32 %v3729, %v3994
    %3996 = vmatmul.bf16.gmra.mxu0 %v3619
    %v3997 = vpop.f32.mrf.mxu0
    %v3998 = vadd.f32 %v3729, %v3997
    %v3999 = vpop.f32.mrf.mxu0
    %v4000 = vadd.f32 %v3729, %v3999
    %4001 = vmatmul.bf16.gmra.mxu0 %v3623
    %v4002 = vpop.f32.mrf.mxu0
    %v4003 = vadd.f32 %v3729, %v4002
    %v4004 = vpop.f32.mrf.mxu0
    %v4005 = vadd.f32 %v3729, %v4004
    %4006 = vmatmul.bf16.gmra.mxu0 %v3627
    %v4007 = vpop.f32.mrf.mxu0
    %v4008 = vadd.f32 %v3729, %v4007
    %v4009 = vpop.f32.mrf.mxu0
    %v4010 = vadd.f32 %v3729, %v4009
    %4011 = vmatmul.bf16.gmra.mxu0 %v3631
    %v4012 = vpop.f32.mrf.mxu0
    %v4013 = vadd.f32 %v3729, %v4012
    %v4014 = vpop.f32.mrf.mxu0
    %v4015 = vadd.f32 %v3729, %v4014
    %4016 = vmatmul.bf16.gmra.mxu0 %v3635
    %v4017 = vpop.f32.mrf.mxu0
    %v4018 = vadd.f32 %v3729, %v4017
    %v4019 = vpop.f32.mrf.mxu0
    %v4020 = vadd.f32 %v3729, %v4019
    %4021 = vmatmul.bf16.gmra.mxu0 %v3639
    %v4022 = vpop.f32.mrf.mxu0
    %v4023 = vadd.f32 %v3729, %v4022
    %v4024 = vpop.f32.mrf.mxu0
    %v4025 = vadd.f32 %v3729, %v4024
    %4026 = vmatmul.bf16.gmra.mxu0 %v3643
    %v4027 = vpop.f32.mrf.mxu0
    %v4028 = vadd.f32 %v3729, %v4027
    %v4029 = vpop.f32.mrf.mxu0
    %v4030 = vadd.f32 %v3729, %v4029
    %4031 = vmatmul.bf16.gmra.mxu0 %v3647
    %v4032 = vpop.f32.mrf.mxu0
    %v4033 = vadd.f32 %v3729, %v4032
    %v4034 = vpop.f32.mrf.mxu0
    %v4035 = vadd.f32 %v3729, %v4034
    %4036 = vmatmul.bf16.gmra.mxu0 %v3651
    %v4037 = vpop.f32.mrf.mxu0
    %v4038 = vadd.f32 %v3729, %v4037
    %v4039 = vpop.f32.mrf.mxu0
    %v4040 = vadd.f32 %v3729, %v4039
    %4041 = vmatmul.bf16.gmra.mxu0 %v3655
    %v4042 = vpop.f32.mrf.mxu0
    %v4043 = vadd.f32 %v3729, %v4042
    %v4044 = vpop.f32.mrf.mxu0
    %v4045 = vadd.f32 %v3729, %v4044
    %4046 = vmatmul.bf16.gmra.mxu0 %v3659
    %v4047 = vpop.f32.mrf.mxu0
    %v4048 = vadd.f32 %v3729, %v4047
    %v4049 = vpop.f32.mrf.mxu0
    %v4050 = vadd.f32 %v3729, %v4049
    %4051 = vdwg.mxu0
    %4052 = vmatpush.bf16.msra.mxu0 %v3874
    %4053 = vmatpush.bf16.msra.mxu0 %v3873
    %4054 = vmatpush.bf16.msra.mxu0 %v3872
    %4055 = vmatpush.bf16.msra.mxu0 %v3871
    %4056 = vmatpush.bf16.msra.mxu0 %v3870
    %4057 = vmatpush.bf16.msra.mxu0 %v3869
    %4058 = vmatpush.bf16.msra.mxu0 %v3868
    %4059 = vmatpush.bf16.msra.mxu0 %v3867
    %4060 = vmatmul.bf16.gmra.mxu0 %v3568
    %v4061 = vpop.f32.mrf.mxu0
    %v4062 = vadd.f32 %v3933, %v4061
    %v4063 = vpop.f32.mrf.mxu0
    %v4064 = vadd.f32 %v3935, %v4063
    %4065 = vmatmul.bf16.gmra.mxu0 %v3572
    %v4066 = vpop.f32.mrf.mxu0
    %v4067 = vadd.f32 %v3938, %v4066
    %v4068 = vpop.f32.mrf.mxu0
    %v4069 = vadd.f32 %v3940, %v4068
    %4070 = vmatmul.bf16.gmra.mxu0 %v3576
    %v4071 = vpop.f32.mrf.mxu0
    %v4072 = vadd.f32 %v3943, %v4071
    %v4073 = vpop.f32.mrf.mxu0
    %v4074 = vadd.f32 %v3945, %v4073
    %4075 = vmatmul.bf16.gmra.mxu0 %v3580
    %v4076 = vpop.f32.mrf.mxu0
    %v4077 = vadd.f32 %v3948, %v4076
    %v4078 = vpop.f32.mrf.mxu0
    %v4079 = vadd.f32 %v3950, %v4078
    %4080 = vmatmul.bf16.gmra.mxu0 %v3584
    %v4081 = vpop.f32.mrf.mxu0
    %v4082 = vadd.f32 %v3953, %v4081
    %v4083 = vpop.f32.mrf.mxu0
    %v4084 = vadd.f32 %v3955, %v4083
    %4085 = vmatmul.bf16.gmra.mxu0 %v3588
    %v4086 = vpop.f32.mrf.mxu0
    %v4087 = vadd.f32 %v3958, %v4086
    %v4088 = vpop.f32.mrf.mxu0
    %v4089 = vadd.f32 %v3960, %v4088
    %4090 = vmatmul.bf16.gmra.mxu0 %v3592
    %v4091 = vpop.f32.mrf.mxu0
    %v4092 = vadd.f32 %v3963, %v4091
    %v4093 = vpop.f32.mrf.mxu0
    %v4094 = vadd.f32 %v3965, %v4093
    %4095 = vmatmul.bf16.gmra.mxu0 %v3596
    %v4096 = vpop.f32.mrf.mxu0
    %v4097 = vadd.f32 %v3968, %v4096
    %v4098 = vpop.f32.mrf.mxu0
    %v4099 = vadd.f32 %v3970, %v4098
    %4100 = vmatmul.bf16.gmra.mxu0 %v3600
    %v4101 = vpop.f32.mrf.mxu0
    %v4102 = vadd.f32 %v3973, %v4101
    %v4103 = vpop.f32.mrf.mxu0
    %v4104 = vadd.f32 %v3975, %v4103
    %4105 = vmatmul.bf16.gmra.mxu0 %v3604
    %v4106 = vpop.f32.mrf.mxu0
    %v4107 = vadd.f32 %v3978, %v4106
    %v4108 = vpop.f32.mrf.mxu0
    %v4109 = vadd.f32 %v3980, %v4108
    %4110 = vmatmul.bf16.gmra.mxu0 %v3608
    %v4111 = vpop.f32.mrf.mxu0
    %v4112 = vadd.f32 %v3983, %v4111
    %v4113 = vpop.f32.mrf.mxu0
    %v4114 = vadd.f32 %v3985, %v4113
    %4115 = vmatmul.bf16.gmra.mxu0 %v3612
    %v4116 = vpop.f32.mrf.mxu0
    %v4117 = vadd.f32 %v3988, %v4116
    %v4118 = vpop.f32.mrf.mxu0
    %v4119 = vadd.f32 %v3990, %v4118
    %4120 = vmatmul.bf16.gmra.mxu0 %v3616
    %v4121 = vpop.f32.mrf.mxu0
    %v4122 = vadd.f32 %v3993, %v4121
    %v4123 = vpop.f32.mrf.mxu0
    %v4124 = vadd.f32 %v3995, %v4123
    %4125 = vmatmul.bf16.gmra.mxu0 %v3620
    %v4126 = vpop.f32.mrf.mxu0
    %v4127 = vadd.f32 %v3998, %v4126
    %v4128 = vpop.f32.mrf.mxu0
    %v4129 = vadd.f32 %v4000, %v4128
    %4130 = vmatmul.bf16.gmra.mxu0 %v3624
    %v4131 = vpop.f32.mrf.mxu0
    %v4132 = vadd.f32 %v4003, %v4131
    %v4133 = vpop.f32.mrf.mxu0
    %v4134 = vadd.f32 %v4005, %v4133
    %4135 = vmatmul.bf16.gmra.mxu0 %v3628
    %v4136 = vpop.f32.mrf.mxu0
    %v4137 = vadd.f32 %v4008, %v4136
    %v4138 = vpop.f32.mrf.mxu0
    %v4139 = vadd.f32 %v4010, %v4138
    %4140 = vmatmul.bf16.gmra.mxu0 %v3632
    %v4141 = vpop.f32.mrf.mxu0
    %v4142 = vadd.f32 %v4013, %v4141
    %v4143 = vpop.f32.mrf.mxu0
    %v4144 = vadd.f32 %v4015, %v4143
    %4145 = vmatmul.bf16.gmra.mxu0 %v3636
    %v4146 = vpop.f32.mrf.mxu0
    %v4147 = vadd.f32 %v4018, %v4146
    %v4148 = vpop.f32.mrf.mxu0
    %v4149 = vadd.f32 %v4020, %v4148
    %4150 = vmatmul.bf16.gmra.mxu0 %v3640
    %v4151 = vpop.f32.mrf.mxu0
    %v4152 = vadd.f32 %v4023, %v4151
    %v4153 = vpop.f32.mrf.mxu0
    %v4154 = vadd.f32 %v4025, %v4153
    %4155 = vmatmul.bf16.gmra.mxu0 %v3644
    %v4156 = vpop.f32.mrf.mxu0
    %v4157 = vadd.f32 %v4028, %v4156
    %v4158 = vpop.f32.mrf.mxu0
    %v4159 = vadd.f32 %v4030, %v4158
    %4160 = vmatmul.bf16.gmra.mxu0 %v3648
    %v4161 = vpop.f32.mrf.mxu0
    %v4162 = vadd.f32 %v4033, %v4161
    %v4163 = vpop.f32.mrf.mxu0
    %v4164 = vadd.f32 %v4035, %v4163
    %4165 = vmatmul.bf16.gmra.mxu0 %v3652
    %v4166 = vpop.f32.mrf.mxu0
    %v4167 = vadd.f32 %v4038, %v4166
    %v4168 = vpop.f32.mrf.mxu0
    %v4169 = vadd.f32 %v4040, %v4168
    %4170 = vmatmul.bf16.gmra.mxu0 %v3656
    %v4171 = vpop.f32.mrf.mxu0
    %v4172 = vadd.f32 %v4043, %v4171
    %v4173 = vpop.f32.mrf.mxu0
    %v4174 = vadd.f32 %v4045, %v4173
    %4175 = vmatmul.bf16.gmra.mxu0 %v3660
    %v4176 = vpop.f32.mrf.mxu0
    %v4177 = vadd.f32 %v4048, %v4176
    %v4178 = vpop.f32.mrf.mxu0
    %v4179 = vadd.f32 %v4050, %v4178
    %4180 = vdwg.mxu0
    %4181 = vmatpush.bf16.msra.mxu0 %v3882
    %4182 = vmatpush.bf16.msra.mxu0 %v3881
    %4183 = vmatpush.bf16.msra.mxu0 %v3880
    %4184 = vmatpush.bf16.msra.mxu0 %v3879
    %4185 = vmatpush.bf16.msra.mxu0 %v3878
    %4186 = vmatpush.bf16.msra.mxu0 %v3877
    %4187 = vmatpush.bf16.msra.mxu0 %v3876
    %4188 = vmatpush.bf16.msra.mxu0 %v3875
    %4189 = vmatmul.bf16.gmra.mxu0 %v3569
    %v4190 = vpop.f32.mrf.mxu0
    %v4191 = vadd.f32 %v4062, %v4190
    %v4192 = vpop.f32.mrf.mxu0
    %v4193 = vadd.f32 %v4064, %v4192
    %4194 = vmatmul.bf16.gmra.mxu0 %v3573
    %v4195 = vpop.f32.mrf.mxu0
    %v4196 = vadd.f32 %v4067, %v4195
    %v4197 = vpop.f32.mrf.mxu0
    %v4198 = vadd.f32 %v4069, %v4197
    %4199 = vmatmul.bf16.gmra.mxu0 %v3577
    %v4200 = vpop.f32.mrf.mxu0
    %v4201 = vadd.f32 %v4072, %v4200
    %v4202 = vpop.f32.mrf.mxu0
    %v4203 = vadd.f32 %v4074, %v4202
    %4204 = vmatmul.bf16.gmra.mxu0 %v3581
    %v4205 = vpop.f32.mrf.mxu0
    %v4206 = vadd.f32 %v4077, %v4205
    %v4207 = vpop.f32.mrf.mxu0
    %v4208 = vadd.f32 %v4079, %v4207
    %4209 = vmatmul.bf16.gmra.mxu0 %v3585
    %v4210 = vpop.f32.mrf.mxu0
    %v4211 = vadd.f32 %v4082, %v4210
    %v4212 = vpop.f32.mrf.mxu0
    %v4213 = vadd.f32 %v4084, %v4212
    %4214 = vmatmul.bf16.gmra.mxu0 %v3589
    %v4215 = vpop.f32.mrf.mxu0
    %v4216 = vadd.f32 %v4087, %v4215
    %v4217 = vpop.f32.mrf.mxu0
    %v4218 = vadd.f32 %v4089, %v4217
    %4219 = vmatmul.bf16.gmra.mxu0 %v3593
    %v4220 = vpop.f32.mrf.mxu0
    %v4221 = vadd.f32 %v4092, %v4220
    %v4222 = vpop.f32.mrf.mxu0
    %v4223 = vadd.f32 %v4094, %v4222
    %4224 = vmatmul.bf16.gmra.mxu0 %v3597
    %v4225 = vpop.f32.mrf.mxu0
    %v4226 = vadd.f32 %v4097, %v4225
    %v4227 = vpop.f32.mrf.mxu0
    %v4228 = vadd.f32 %v4099, %v4227
    %4229 = vmatmul.bf16.gmra.mxu0 %v3601
    %v4230 = vpop.f32.mrf.mxu0
    %v4231 = vadd.f32 %v4102, %v4230
    %v4232 = vpop.f32.mrf.mxu0
    %v4233 = vadd.f32 %v4104, %v4232
    %4234 = vmatmul.bf16.gmra.mxu0 %v3605
    %v4235 = vpop.f32.mrf.mxu0
    %v4236 = vadd.f32 %v4107, %v4235
    %v4237 = vpop.f32.mrf.mxu0
    %v4238 = vadd.f32 %v4109, %v4237
    %4239 = vmatmul.bf16.gmra.mxu0 %v3609
    %v4240 = vpop.f32.mrf.mxu0
    %v4241 = vadd.f32 %v4112, %v4240
    %v4242 = vpop.f32.mrf.mxu0
    %v4243 = vadd.f32 %v4114, %v4242
    %4244 = vmatmul.bf16.gmra.mxu0 %v3613
    %v4245 = vpop.f32.mrf.mxu0
    %v4246 = vadd.f32 %v4117, %v4245
    %v4247 = vpop.f32.mrf.mxu0
    %v4248 = vadd.f32 %v4119, %v4247
    %4249 = vmatmul.bf16.gmra.mxu0 %v3617
    %v4250 = vpop.f32.mrf.mxu0
    %v4251 = vadd.f32 %v4122, %v4250
    %v4252 = vpop.f32.mrf.mxu0
    %v4253 = vadd.f32 %v4124, %v4252
    %4254 = vmatmul.bf16.gmra.mxu0 %v3621
    %v4255 = vpop.f32.mrf.mxu0
    %v4256 = vadd.f32 %v4127, %v4255
    %v4257 = vpop.f32.mrf.mxu0
    %v4258 = vadd.f32 %v4129, %v4257
    %4259 = vmatmul.bf16.gmra.mxu0 %v3625
    %v4260 = vpop.f32.mrf.mxu0
    %v4261 = vadd.f32 %v4132, %v4260
    %v4262 = vpop.f32.mrf.mxu0
    %v4263 = vadd.f32 %v4134, %v4262
    %4264 = vmatmul.bf16.gmra.mxu0 %v3629
    %v4265 = vpop.f32.mrf.mxu0
    %v4266 = vadd.f32 %v4137, %v4265
    %v4267 = vpop.f32.mrf.mxu0
    %v4268 = vadd.f32 %v4139, %v4267
    %4269 = vmatmul.bf16.gmra.mxu0 %v3633
    %v4270 = vpop.f32.mrf.mxu0
    %v4271 = vadd.f32 %v4142, %v4270
    %v4272 = vpop.f32.mrf.mxu0
    %v4273 = vadd.f32 %v4144, %v4272
    %4274 = vmatmul.bf16.gmra.mxu0 %v3637
    %v4275 = vpop.f32.mrf.mxu0
    %v4276 = vadd.f32 %v4147, %v4275
    %v4277 = vpop.f32.mrf.mxu0
    %v4278 = vadd.f32 %v4149, %v4277
    %4279 = vmatmul.bf16.gmra.mxu0 %v3641
    %v4280 = vpop.f32.mrf.mxu0
    %v4281 = vadd.f32 %v4152, %v4280
    %v4282 = vpop.f32.mrf.mxu0
    %v4283 = vadd.f32 %v4154, %v4282
    %4284 = vmatmul.bf16.gmra.mxu0 %v3645
    %v4285 = vpop.f32.mrf.mxu0
    %v4286 = vadd.f32 %v4157, %v4285
    %v4287 = vpop.f32.mrf.mxu0
    %v4288 = vadd.f32 %v4159, %v4287
    %4289 = vmatmul.bf16.gmra.mxu0 %v3649
    %v4290 = vpop.f32.mrf.mxu0
    %v4291 = vadd.f32 %v4162, %v4290
    %v4292 = vpop.f32.mrf.mxu0
    %v4293 = vadd.f32 %v4164, %v4292
    %4294 = vmatmul.bf16.gmra.mxu0 %v3653
    %v4295 = vpop.f32.mrf.mxu0
    %v4296 = vadd.f32 %v4167, %v4295
    %v4297 = vpop.f32.mrf.mxu0
    %v4298 = vadd.f32 %v4169, %v4297
    %4299 = vmatmul.bf16.gmra.mxu0 %v3657
    %v4300 = vpop.f32.mrf.mxu0
    %v4301 = vadd.f32 %v4172, %v4300
    %v4302 = vpop.f32.mrf.mxu0
    %v4303 = vadd.f32 %v4174, %v4302
    %4304 = vmatmul.bf16.gmra.mxu0 %v3661
    %v4305 = vpop.f32.mrf.mxu0
    %v4306 = vadd.f32 %v4177, %v4305
    %v4307 = vpop.f32.mrf.mxu0
    %v4308 = vadd.f32 %v4179, %v4307
    %4309 = vdwg.mxu0
    %4310 = vmatpush.bf16.msra.mxu0 %v3890
    %4311 = vmatpush.bf16.msra.mxu0 %v3889
    %4312 = vmatpush.bf16.msra.mxu0 %v3888
    %4313 = vmatpush.bf16.msra.mxu0 %v3887
    %4314 = vmatpush.bf16.msra.mxu0 %v3886
    %4315 = vmatpush.bf16.msra.mxu0 %v3885
    %4316 = vmatpush.bf16.msra.mxu0 %v3884
    %4317 = vmatpush.bf16.msra.mxu0 %v3883
    %4318 = vmatmul.bf16.gmra.mxu0 %v3570
    %v4319 = vpop.f32.mrf.mxu0
    %v4320 = vadd.f32 %v4191, %v4319
    %v4321 = vpop.f32.mrf.mxu0
    %v4322 = vadd.f32 %v4193, %v4321
    %4323 = vmatmul.bf16.gmra.mxu0 %v3574
    %v4324 = vpop.f32.mrf.mxu0
    %v4325 = vadd.f32 %v4196, %v4324
    %v4326 = vpop.f32.mrf.mxu0
    %v4327 = vadd.f32 %v4198, %v4326
    %4328 = vmatmul.bf16.gmra.mxu0 %v3578
    %v4329 = vpop.f32.mrf.mxu0
    %v4330 = vadd.f32 %v4201, %v4329
    %v4331 = vpop.f32.mrf.mxu0
    %v4332 = vadd.f32 %v4203, %v4331
    %4333 = vmatmul.bf16.gmra.mxu0 %v3582
    %v4334 = vpop.f32.mrf.mxu0
    %v4335 = vadd.f32 %v4206, %v4334
    %v4336 = vpop.f32.mrf.mxu0
    %v4337 = vadd.f32 %v4208, %v4336
    %4338 = vmatmul.bf16.gmra.mxu0 %v3586
    %v4339 = vpop.f32.mrf.mxu0
    %v4340 = vadd.f32 %v4211, %v4339
    %v4341 = vpop.f32.mrf.mxu0
    %v4342 = vadd.f32 %v4213, %v4341
    %4343 = vmatmul.bf16.gmra.mxu0 %v3590
    %v4344 = vpop.f32.mrf.mxu0
    %v4345 = vadd.f32 %v4216, %v4344
    %v4346 = vpop.f32.mrf.mxu0
    %v4347 = vadd.f32 %v4218, %v4346
    %4348 = vmatmul.bf16.gmra.mxu0 %v3594
    %v4349 = vpop.f32.mrf.mxu0
    %v4350 = vadd.f32 %v4221, %v4349
    %v4351 = vpop.f32.mrf.mxu0
    %v4352 = vadd.f32 %v4223, %v4351
    %4353 = vmatmul.bf16.gmra.mxu0 %v3598
    %v4354 = vpop.f32.mrf.mxu0
    %v4355 = vadd.f32 %v4226, %v4354
    %v4356 = vpop.f32.mrf.mxu0
    %v4357 = vadd.f32 %v4228, %v4356
    %4358 = vmatmul.bf16.gmra.mxu0 %v3602
    %v4359 = vpop.f32.mrf.mxu0
    %v4360 = vadd.f32 %v4231, %v4359
    %v4361 = vpop.f32.mrf.mxu0
    %v4362 = vadd.f32 %v4233, %v4361
    %4363 = vmatmul.bf16.gmra.mxu0 %v3606
    %v4364 = vpop.f32.mrf.mxu0
    %v4365 = vadd.f32 %v4236, %v4364
    %v4366 = vpop.f32.mrf.mxu0
    %v4367 = vadd.f32 %v4238, %v4366
    %4368 = vmatmul.bf16.gmra.mxu0 %v3610
    %v4369 = vpop.f32.mrf.mxu0
    %v4370 = vadd.f32 %v4241, %v4369
    %v4371 = vpop.f32.mrf.mxu0
    %v4372 = vadd.f32 %v4243, %v4371
    %4373 = vmatmul.bf16.gmra.mxu0 %v3614
    %v4374 = vpop.f32.mrf.mxu0
    %v4375 = vadd.f32 %v4246, %v4374
    %v4376 = vpop.f32.mrf.mxu0
    %v4377 = vadd.f32 %v4248, %v4376
    %4378 = vmatmul.bf16.gmra.mxu0 %v3618
    %v4379 = vpop.f32.mrf.mxu0
    %v4380 = vadd.f32 %v4251, %v4379
    %v4381 = vpop.f32.mrf.mxu0
    %v4382 = vadd.f32 %v4253, %v4381
    %4383 = vmatmul.bf16.gmra.mxu0 %v3622
    %v4384 = vpop.f32.mrf.mxu0
    %v4385 = vadd.f32 %v4256, %v4384
    %v4386 = vpop.f32.mrf.mxu0
    %v4387 = vadd.f32 %v4258, %v4386
    %4388 = vmatmul.bf16.gmra.mxu0 %v3626
    %v4389 = vpop.f32.mrf.mxu0
    %v4390 = vadd.f32 %v4261, %v4389
    %v4391 = vpop.f32.mrf.mxu0
    %v4392 = vadd.f32 %v4263, %v4391
    %4393 = vmatmul.bf16.gmra.mxu0 %v3630
    %v4394 = vpop.f32.mrf.mxu0
    %v4395 = vadd.f32 %v4266, %v4394
    %v4396 = vpop.f32.mrf.mxu0
    %v4397 = vadd.f32 %v4268, %v4396
    %4398 = vmatmul.bf16.gmra.mxu0 %v3634
    %v4399 = vpop.f32.mrf.mxu0
    %v4400 = vadd.f32 %v4271, %v4399
    %v4401 = vpop.f32.mrf.mxu0
    %v4402 = vadd.f32 %v4273, %v4401
    %4403 = vmatmul.bf16.gmra.mxu0 %v3638
    %v4404 = vpop.f32.mrf.mxu0
    %v4405 = vadd.f32 %v4276, %v4404
    %v4406 = vpop.f32.mrf.mxu0
    %v4407 = vadd.f32 %v4278, %v4406
    %4408 = vmatmul.bf16.gmra.mxu0 %v3642
    %v4409 = vpop.f32.mrf.mxu0
    %v4410 = vadd.f32 %v4281, %v4409
    %v4411 = vpop.f32.mrf.mxu0
    %v4412 = vadd.f32 %v4283, %v4411
    %4413 = vmatmul.bf16.gmra.mxu0 %v3646
    %v4414 = vpop.f32.mrf.mxu0
    %v4415 = vadd.f32 %v4286, %v4414
    %v4416 = vpop.f32.mrf.mxu0
    %v4417 = vadd.f32 %v4288, %v4416
    %4418 = vmatmul.bf16.gmra.mxu0 %v3650
    %v4419 = vpop.f32.mrf.mxu0
    %v4420 = vadd.f32 %v4291, %v4419
    %v4421 = vpop.f32.mrf.mxu0
    %v4422 = vadd.f32 %v4293, %v4421
    %4423 = vmatmul.bf16.gmra.mxu0 %v3654
    %v4424 = vpop.f32.mrf.mxu0
    %v4425 = vadd.f32 %v4296, %v4424
    %v4426 = vpop.f32.mrf.mxu0
    %v4427 = vadd.f32 %v4298, %v4426
    %4428 = vmatmul.bf16.gmra.mxu0 %v3658
    %v4429 = vpop.f32.mrf.mxu0
    %v4430 = vadd.f32 %v4301, %v4429
    %v4431 = vpop.f32.mrf.mxu0
    %v4432 = vadd.f32 %v4303, %v4431
    %4433 = vmatmul.bf16.gmra.mxu0 %v3662
    %v4434 = vpop.f32.mrf.mxu0
    %v4435 = vadd.f32 %v4306, %v4434
    %v4436 = vpop.f32.mrf.mxu0
    %v4437 = vadd.f32 %v4308, %v4436
    %4438 = vdwg.mxu0
    %vm4439 = vcmp.ge.f32.partialorder %v4320, 0.0
    %vm4440 = vcmp.ge.f32.partialorder %v4322, 0.0
    %vm4441 = vcmp.ge.f32.partialorder %v4325, 0.0
    %vm4442 = vcmp.ge.f32.partialorder %v4327, 0.0
    %vm4443 = vcmp.ge.f32.partialorder %v4330, 0.0
    %vm4444 = vcmp.ge.f32.partialorder %v4332, 0.0
    %vm4445 = vcmp.ge.f32.partialorder %v4335, 0.0
    %vm4446 = vcmp.ge.f32.partialorder %v4337, 0.0
    %vm4447 = vcmp.ge.f32.partialorder %v4340, 0.0
    %vm4448 = vcmp.ge.f32.partialorder %v4342, 0.0
    %vm4449 = vcmp.ge.f32.partialorder %v4345, 0.0
    %vm4450 = vcmp.ge.f32.partialorder %v4347, 0.0
    %vm4451 = vcmp.ge.f32.partialorder %v4350, 0.0
    %vm4452 = vcmp.ge.f32.partialorder %v4352, 0.0
    %vm4453 = vcmp.ge.f32.partialorder %v4355, 0.0
    %vm4454 = vcmp.ge.f32.partialorder %v4357, 0.0
    %vm4455 = vcmp.ge.f32.partialorder %v4360, 0.0
    %vm4456 = vcmp.ge.f32.partialorder %v4362, 0.0
    %vm4457 = vcmp.ge.f32.partialorder %v4365, 0.0
    %vm4458 = vcmp.ge.f32.partialorder %v4367, 0.0
    %vm4459 = vcmp.ge.f32.partialorder %v4370, 0.0
    %vm4460 = vcmp.ge.f32.partialorder %v4372, 0.0
    %vm4461 = vcmp.ge.f32.partialorder %v4375, 0.0
    %vm4462 = vcmp.ge.f32.partialorder %v4377, 0.0
    %vm4463 = vcmp.ge.f32.partialorder %v4380, 0.0
    %vm4464 = vcmp.ge.f32.partialorder %v4382, 0.0
    %vm4465 = vcmp.ge.f32.partialorder %v4385, 0.0
    %vm4466 = vcmp.ge.f32.partialorder %v4387, 0.0
    %vm4467 = vcmp.ge.f32.partialorder %v4390, 0.0
    %vm4468 = vcmp.ge.f32.partialorder %v4392, 0.0
    %vm4469 = vcmp.ge.f32.partialorder %v4395, 0.0
    %vm4470 = vcmp.ge.f32.partialorder %v4397, 0.0
    %vm4471 = vcmp.ge.f32.partialorder %v4400, 0.0
    %vm4472 = vcmp.ge.f32.partialorder %v4402, 0.0
    %vm4473 = vcmp.ge.f32.partialorder %v4405, 0.0
    %vm4474 = vcmp.ge.f32.partialorder %v4407, 0.0
    %vm4475 = vcmp.ge.f32.partialorder %v4410, 0.0
    %vm4476 = vcmp.ge.f32.partialorder %v4412, 0.0
    %vm4477 = vcmp.ge.f32.partialorder %v4415, 0.0
    %vm4478 = vcmp.ge.f32.partialorder %v4417, 0.0
    %vm4479 = vcmp.ge.f32.partialorder %v4420, 0.0
    %vm4480 = vcmp.ge.f32.partialorder %v4422, 0.0
    %vm4481 = vcmp.ge.f32.partialorder %v4425, 0.0
    %vm4482 = vcmp.ge.f32.partialorder %v4427, 0.0
    %vm4483 = vcmp.ge.f32.partialorder %v4430, 0.0
    %vm4484 = vcmp.ge.f32.partialorder %v4432, 0.0
    %vm4485 = vcmp.ge.f32.partialorder %v4435, 0.0
    %vm4486 = vcmp.ge.f32.partialorder %v4437, 0.0
    %v4487 = vmul.f32 %v4320, 0.01
    %v4488 = vmul.f32 %v4322, 0.01
    %v4489 = vmul.f32 %v4325, 0.01
    %v4490 = vmul.f32 %v4327, 0.01
    %v4491 = vmul.f32 %v4330, 0.01
    %v4492 = vmul.f32 %v4332, 0.01
    %v4493 = vmul.f32 %v4335, 0.01
    %v4494 = vmul.f32 %v4337, 0.01
    %v4495 = vmul.f32 %v4340, 0.01
    %v4496 = vmul.f32 %v4342, 0.01
    %v4497 = vmul.f32 %v4345, 0.01
    %v4498 = vmul.f32 %v4347, 0.01
    %v4499 = vmul.f32 %v4350, 0.01
    %v4500 = vmul.f32 %v4352, 0.01
    %v4501 = vmul.f32 %v4355, 0.01
    %v4502 = vmul.f32 %v4357, 0.01
    %v4503 = vmul.f32 %v4360, 0.01
    %v4504 = vmul.f32 %v4362, 0.01
    %v4505 = vmul.f32 %v4365, 0.01
    %v4506 = vmul.f32 %v4367, 0.01
    %v4507 = vmul.f32 %v4370, 0.01
    %v4508 = vmul.f32 %v4372, 0.01
    %v4509 = vmul.f32 %v4375, 0.01
    %v4510 = vmul.f32 %v4377, 0.01
    %v4511 = vmul.f32 %v4380, 0.01
    %v4512 = vmul.f32 %v4382, 0.01
    %v4513 = vmul.f32 %v4385, 0.01
    %v4514 = vmul.f32 %v4387, 0.01
    %v4515 = vmul.f32 %v4390, 0.01
    %v4516 = vmul.f32 %v4392, 0.01
    %v4517 = vmul.f32 %v4395, 0.01
    %v4518 = vmul.f32 %v4397, 0.01
    %v4519 = vmul.f32 %v4400, 0.01
    %v4520 = vmul.f32 %v4402, 0.01
    %v4521 = vmul.f32 %v4405, 0.01
    %v4522 = vmul.f32 %v4407, 0.01
    %v4523 = vmul.f32 %v4410, 0.01
    %v4524 = vmul.f32 %v4412, 0.01
    %v4525 = vmul.f32 %v4415, 0.01
    %v4526 = vmul.f32 %v4417, 0.01
    %v4527 = vmul.f32 %v4420, 0.01
    %v4528 = vmul.f32 %v4422, 0.01
    %v4529 = vmul.f32 %v4425, 0.01
    %v4530 = vmul.f32 %v4427, 0.01
    %v4531 = vmul.f32 %v4430, 0.01
    %v4532 = vmul.f32 %v4432, 0.01
    %v4533 = vmul.f32 %v4435, 0.01
    %v4534 = vmul.f32 %v4437, 0.01
    %v4535 = vsel %vm4439, %v4320, %v4487
    %v4536 = vsel %vm4440, %v4322, %v4488
    %v4537 = vsel %vm4441, %v4325, %v4489
    %v4538 = vsel %vm4442, %v4327, %v4490
    %v4539 = vsel %vm4443, %v4330, %v4491
    %v4540 = vsel %vm4444, %v4332, %v4492
    %v4541 = vsel %vm4445, %v4335, %v4493
    %v4542 = vsel %vm4446, %v4337, %v4494
    %v4543 = vsel %vm4447, %v4340, %v4495
    %v4544 = vsel %vm4448, %v4342, %v4496
    %v4545 = vsel %vm4449, %v4345, %v4497
    %v4546 = vsel %vm4450, %v4347, %v4498
    %v4547 = vsel %vm4451, %v4350, %v4499
    %v4548 = vsel %vm4452, %v4352, %v4500
    %v4549 = vsel %vm4453, %v4355, %v4501
    %v4550 = vsel %vm4454, %v4357, %v4502
    %v4551 = vsel %vm4455, %v4360, %v4503
    %v4552 = vsel %vm4456, %v4362, %v4504
    %v4553 = vsel %vm4457, %v4365, %v4505
    %v4554 = vsel %vm4458, %v4367, %v4506
    %v4555 = vsel %vm4459, %v4370, %v4507
    %v4556 = vsel %vm4460, %v4372, %v4508
    %v4557 = vsel %vm4461, %v4375, %v4509
    %v4558 = vsel %vm4462, %v4377, %v4510
    %v4559 = vsel %vm4463, %v4380, %v4511
    %v4560 = vsel %vm4464, %v4382, %v4512
    %v4561 = vsel %vm4465, %v4385, %v4513
    %v4562 = vsel %vm4466, %v4387, %v4514
    %v4563 = vsel %vm4467, %v4390, %v4515
    %v4564 = vsel %vm4468, %v4392, %v4516
    %v4565 = vsel %vm4469, %v4395, %v4517
    %v4566 = vsel %vm4470, %v4397, %v4518
    %v4567 = vsel %vm4471, %v4400, %v4519
    %v4568 = vsel %vm4472, %v4402, %v4520
    %v4569 = vsel %vm4473, %v4405, %v4521
    %v4570 = vsel %vm4474, %v4407, %v4522
    %v4571 = vsel %vm4475, %v4410, %v4523
    %v4572 = vsel %vm4476, %v4412, %v4524
    %v4573 = vsel %vm4477, %v4415, %v4525
    %v4574 = vsel %vm4478, %v4417, %v4526
    %v4575 = vsel %vm4479, %v4420, %v4527
    %v4576 = vsel %vm4480, %v4422, %v4528
    %v4577 = vsel %vm4481, %v4425, %v4529
    %v4578 = vsel %vm4482, %v4427, %v4530
    %v4579 = vsel %vm4483, %v4430, %v4531
    %v4580 = vsel %vm4484, %v4432, %v4532
    %v4581 = vsel %vm4485, %v4435, %v4533
    %v4582 = vsel %vm4486, %v4437, %v4534
    %v4583 = vpack.c.bf16 %v4536, %v4535
    %v4584 = vpack.c.bf16 %v4538, %v4537
    %v4585 = vpack.c.bf16 %v4540, %v4539
    %v4586 = vpack.c.bf16 %v4542, %v4541
    %v4587 = vpack.c.bf16 %v4544, %v4543
    %v4588 = vpack.c.bf16 %v4546, %v4545
    %v4589 = vpack.c.bf16 %v4548, %v4547
    %v4590 = vpack.c.bf16 %v4550, %v4549
    %v4591 = vpack.c.bf16 %v4552, %v4551
    %v4592 = vpack.c.bf16 %v4554, %v4553
    %v4593 = vpack.c.bf16 %v4556, %v4555
    %v4594 = vpack.c.bf16 %v4558, %v4557
    %v4595 = vpack.c.bf16 %v4560, %v4559
    %v4596 = vpack.c.bf16 %v4562, %v4561
    %v4597 = vpack.c.bf16 %v4564, %v4563
    %v4598 = vpack.c.bf16 %v4566, %v4565
    %v4599 = vpack.c.bf16 %v4568, %v4567
    %v4600 = vpack.c.bf16 %v4570, %v4569
    %v4601 = vpack.c.bf16 %v4572, %v4571
    %v4602 = vpack.c.bf16 %v4574, %v4573
    %v4603 = vpack.c.bf16 %v4576, %v4575
    %v4604 = vpack.c.bf16 %v4578, %v4577
    %v4605 = vpack.c.bf16 %v4580, %v4579
    %v4606 = vpack.c.bf16 %v4582, %v4581
    %v4607 = vld [vmem:[%s9] sm:$0x1]
    %v4608 = vld [vmem:[#allocation2] sm:$0x1]
    %4610 = vset.pattern.permute.xlu0 0
    %4611 = vperm.xlu0 %4610, %v4608
    %v4612 = vpop.permute.xlu0 %4611
    %v4614 = vperm.slane %v4612, 0
    %v4616 = vsel %vm898, %v4607, 0
    %v4619 = vsel %vm898, %v4583, 0
    %v4622 = vsel %vm898, %v4584, 0
    %v4625 = vsel %vm898, %v4585, 0
    %v4628 = vsel %vm898, %v4586, 0
    %v4631 = vsel %vm898, %v4587, 0
    %v4634 = vsel %vm898, %v4588, 0
    %v4637 = vsel %vm898, %v4589, 0
    %v4640 = vsel %vm898, %v4590, 0
    %v4643 = vsel %vm898, %v4591, 0
    %v4646 = vsel %vm898, %v4592, 0
    %v4649 = vsel %vm898, %v4593, 0
    %v4652 = vsel %vm898, %v4594, 0
    %v4655 = vsel %vm898, %v4595, 0
    %v4658 = vsel %vm898, %v4596, 0
    %v4661 = vsel %vm898, %v4597, 0
    %v4664 = vsel %vm898, %v4598, 0
    %v4667 = vsel %vm898, %v4599, 0
    %v4670 = vsel %vm898, %v4600, 0
    %v4673 = vsel %vm898, %v4601, 0
    %v4676 = vsel %vm898, %v4602, 0
    %v4679 = vsel %vm898, %v4603, 0
    %v4682 = vsel %vm898, %v4604, 0
    %v4685 = vsel %vm898, %v4605, 0
    %v4688 = vsel %vm898, %v4606, 0
    %4690 = vmatpush.bf16.xpose.msra.mxu0 %v4640
    %4691 = vmatpush.bf16.xpose.msra.mxu0 %v4637
    %4692 = vmatpush.bf16.xpose.msra.mxu0 %v4634
    %4693 = vmatpush.bf16.xpose.msra.mxu0 %v4631
    %4694 = vmatpush.bf16.xpose.msra.mxu0 %v4628
    %4695 = vmatpush.bf16.xpose.msra.mxu0 %v4625
    %4696 = vmatpush.bf16.xpose.msra.mxu0 %v4622
    %4697 = vmatpush.bf16.xpose.msra.mxu0 %v4619
    %4698 = vmatmul.bf16.gmra.mxu0 %v4616
    %v4699 = vpop.f32.mrf.mxu0
    %v4700 = vadd.f32 %v4614, %v4699
    %v4701 = vpop.f32.mrf.mxu0
    %4702 = vdwg.mxu0
    %4703 = vmatpush.bf16.xpose.msra.mxu0 %v4664
    %4704 = vmatpush.bf16.xpose.msra.mxu0 %v4661
    %4705 = vmatpush.bf16.xpose.msra.mxu0 %v4658
    %4706 = vmatpush.bf16.xpose.msra.mxu0 %v4655
    %4707 = vmatpush.bf16.xpose.msra.mxu0 %v4652
    %4708 = vmatpush.bf16.xpose.msra.mxu0 %v4649
    %4709 = vmatpush.bf16.xpose.msra.mxu0 %v4646
    %4710 = vmatpush.bf16.xpose.msra.mxu0 %v4643
    %4711 = vmatmul.bf16.gmra.mxu0 %v4616
    %v4712 = vpop.f32.mrf.mxu0
    %v4713 = vadd.f32 %v4614, %v4712
    %v4714 = vpop.f32.mrf.mxu0
    %4715 = vdwg.mxu0
    %4716 = vmatpush.bf16.xpose.msra.mxu0 %v4688
    %4717 = vmatpush.bf16.xpose.msra.mxu0 %v4685
    %4718 = vmatpush.bf16.xpose.msra.mxu0 %v4682
    %4719 = vmatpush.bf16.xpose.msra.mxu0 %v4679
    %4720 = vmatpush.bf16.xpose.msra.mxu0 %v4676
    %4721 = vmatpush.bf16.xpose.msra.mxu0 %v4673
    %4722 = vmatpush.bf16.xpose.msra.mxu0 %v4670
    %4723 = vmatpush.bf16.xpose.msra.mxu0 %v4667
    %4724 = vmatmul.bf16.gmra.mxu0 %v4616
    %v4725 = vpop.f32.mrf.mxu0
    %v4726 = vadd.f32 %v4614, %v4725
    %v4727 = vpop.f32.mrf.mxu0
    %4728 = vdwg.mxu0
    %v4732 = vrot.slane %v4713, 7
    %v4733 = vrot.slane %v4726, 6
    %v4734 = vsel %vm411, %v4700, %v4732
    %v4735 = vsel %vm412, %v4734, %v4733
    %v4737 = vlaneseq
    %vm4738 = vcmp.ge.s32.totalorder %v4737, 0
    %vm4739 = vcmp.lt.s32.totalorder %v4737, 384
    %vm4740 = vmand %vm4738, %vm4739
    %4741 = vst.msk [vmem:[#allocation8] sm:$0x7] %vm4740, %v4735
    // Predicated region
    $region54: #{tpu_custom_call.1} parent=1 // pred_check
      _
    $region55: #{tpu_custom_call.1} parent=1 // pred_check_branch
      %4743 = sbr.rel (0) target = $region57
    $region56: #{tpu_custom_call.1} parent=1 // pred_region
      %4745 = vsyncadd [#allocation5], 0
      %s4747 = sshll.u32 [#allocation8], 4
      %s4748 = int_to_ptr.vmem [resolvable:$true] %s4747
      %s4749 = sshll.u32 %s11, 4
      %s4750 = int_to_ptr.hbm [resolvable:$true] %s4749
      %4752 = dma.vmem_to_hbm [thread:$0]  %s4748, 48, %s4750, [#allocation5]
    $region57: #{tpu_custom_call.1} parent=1 // pred_fallthru
      _
    // Predicated region
    $region58: #{tpu_custom_call.1} parent=1 // pred_check
      _
    $region59: #{tpu_custom_call.1} parent=1 // pred_check_branch
      %4754 = sbr.rel (0) target = $region61
    $region60: #{tpu_custom_call.1} parent=1 // pred_region
      %4756 = dma.done [#allocation5], 48
    $region61: #{tpu_custom_call.1} parent=1 // pred_fallthru
      _
    %4757 = vsyncpa [#allocation4], 1
    %4758 = vsyncpa [#allocation7], 1
    %4759 = vsyncpa [#allocation5], 1

</llo_original>
